<compile_context>
chip_gen: v5e
topology: v5e:2x2
jax: 0.10.0
libtpu: 0.0.40
codegen_flags: <defaults>
</compile_context>

<pallas_src>
import functools

import jax
import jax.numpy as jnp
from jax.experimental import pallas as pl
from jax.experimental.pallas import tpu as pltpu


def _ru(n, m):
    return ((n + m - 1) // m) * m


# --------------------------------------------------------------------------
# Static layout of the packed slabs (all offsets are multiples of 128 lanes).
# --------------------------------------------------------------------------
def make_layout(x_dim, y_dim, task_num):
    y = y_dim
    L = dict(x=x_dim, y=y, T=task_num, Tp=max(8, _ru(task_num, 8)))
    L["H1"] = y * 20
    L["H2"] = y * 20
    L["H3"] = y * 8 * 4
    L["H4"] = (x_dim + y) * 10 * 8
    L["H5"] = (x_dim + y) * 4 * 8
    L["g1"] = y                                   # GRU1 hidden
    L["g2"] = round(20 * (2 * y))                 # GRU2 hidden
    L["g3"] = round(20 * (y * 3 + x_dim ** 2))    # GRU3 hidden
    for k in ("H1", "H2", "H3", "H4", "H5", "g1", "g2", "g3"):
        L[k + "p"] = _ru(L[k], 128)
    L["sp"] = _ru(3 * y + 1, 128)                 # [do|dy|rp|1] packed vector
    L["yp"] = _ru(y, 128)
    L["y2p"] = _ru(y * y, 128)

    def wtable(blocks):
        tab, col = {}, 0
        for name, kp, w in blocks:
            tab[name] = (col, kp, w)
            col += w
        return tab, col

    def vtable(blocks):
        tab, col = {}, 0
        for name, w in blocks:
            tab[name] = (col, w)
            col += w
        return tab, col

    a_blocks = [
        ("l1",    L["sp"],  L["H1p"]),
        ("l2",    L["sp"],  L["H2p"]),
        ("l4s",   L["sp"],  L["H4p"]),
        ("wih1",  L["H1p"], 3 * L["g1p"]),
        ("whh1",  L["g1p"], 3 * L["g1p"]),
        ("wih2a", L["H2p"], 3 * L["g2p"]),
        ("wih2b", L["g1p"], 3 * L["g2p"]),
        ("whh2",  L["g2p"], 3 * L["g2p"]),
        ("w3a",   L["g2p"], L["H3p"]),
        ("w3b",   L["H3p"], L["yp"]),
        ("w4a",   L["yp"],  L["H4p"]),
        ("w5b",   L["H5p"], L["y2p"]),
    ]
    L["A"], L["A_cols"] = wtable(a_blocks)
    L["A_rows"] = max(kp for _, kp, _ in a_blocks)

    b_blocks = [
        ("whh3", L["g3p"], 3 * L["g3p"]),
        ("w5a",  L["g3p"], L["H5p"]),
    ]
    L["B"], L["B_cols"] = wtable(b_blocks)
    L["B_rows"] = L["g3p"]

    c_blocks = [("wih3", L["H4p"], 3 * L["g3p"])]
    L["C"], L["C_cols"] = wtable(c_blocks)
    L["C_rows"] = L["H4p"]

    L["bias"], L["bias_cols"] = vtable([
        ("bih1", 3 * L["g1p"]), ("bhh1", 3 * L["g1p"]),
        ("bih2", 3 * L["g2p"]), ("bhh2", 3 * L["g2p"]),
        ("bih3", 3 * L["g3p"]), ("bhh3", 3 * L["g3p"]),
        ("b3a", L["H3p"]), ("b3b", L["yp"]),
        ("b5a", L["H5p"]), ("b5b", L["y2p"]),
    ])
    L["act"], L["act_cols"] = vtable([
        ("s", L["sp"]), ("hn1", L["g1p"]), ("hn2", L["g2p"]), ("hn3", L["g3p"]),
    ])
    L["out"], L["out_cols"] = vtable([
        ("res", L["yp"]), ("sk", L["y2p"]),
        ("h1", L["g1p"]), ("h2", L["g2p"]), ("h3", L["g3p"]),
    ])
    return L


# --------------------------------------------------------------------------
# Synthetic PyTorch-default-like parameters (weights stored (in, out)).
# --------------------------------------------------------------------------
def init_params(key, x_dim, y_dim):
    y = y_dim
    H1, H2, H3 = y * 20, y * 20, y * 8 * 4
    H4, H5 = (x_dim + y) * 10 * 8, (x_dim + y) * 4 * 8
    g1 = y
    g2 = round(20 * (2 * y))
    g3 = round(20 * (y * 3 + x_dim ** 2))

    def lin(k, fi, fo):
        k1, k2 = jax.random.split(k)
        b = 1.0 / (fi ** 0.5)
        return (jax.random.uniform(k1, (fi, fo), jnp.float32, -b, b),
                jax.random.uniform(k2, (1, fo), jnp.float32, -b, b))

    def gru(k, fi, hid):
        k1, k2, k3, k4 = jax.random.split(k, 4)
        b = 1.0 / (hid ** 0.5)
        return (jax.random.uniform(k1, (fi, 3 * hid), jnp.float32, -b, b),
                jax.random.uniform(k2, (hid, 3 * hid), jnp.float32, -b, b),
                jax.random.uniform(k3, (1, 3 * hid), jnp.float32, -b, b),
                jax.random.uniform(k4, (1, 3 * hid), jnp.float32, -b, b))

    ks = jax.random.split(key, 10)
    p = {}
    p["W1"], p["b1"] = lin(ks[0], 2 * y, H1)
    p["wih1"], p["whh1"], p["bih1"], p["bhh1"] = gru(ks[1], H1, g1)
    p["W2"], p["b2"] = lin(ks[2], y, H2)
    p["wih2"], p["whh2"], p["bih2"], p["bhh2"] = gru(ks[3], H2 + g1, g2)
    p["W3a"], p["b3a"] = lin(ks[4], g2, H3)
    p["W3b"], p["b3b"] = lin(ks[5], H3, y)
    p["W4"], p["b4"] = lin(ks[6], 3 * y, H4)
    p["wih3"], p["whh3"], p["bih3"], p["bhh3"] = gru(ks[7], H4, g3)
    p["W5a"], p["b5a"] = lin(ks[8], g3, H5)
    p["W5b"], p["b5b"] = lin(ks[9], H5, y * y)
    return p


# --------------------------------------------------------------------------
# Pack parameters into lane-dense slabs (one-time host-side setup).
# --------------------------------------------------------------------------
def _pad_gate_cols(w, hid, hid_pad):
    """(K, 3*hid) -> (K, 3*hid_pad) with each r/z/n gate padded to hid_pad."""
    parts = [jnp.pad(w[:, g * hid:(g + 1) * hid], ((0, 0), (0, hid_pad - hid)))
             for g in range(3)]
    return jnp.concatenate(parts, axis=1)


def pack_params(p, L):
    y = L["y"]

    def put(slab, tab, name, w, row0=0):
        col, kp, width = tab[name]
        assert row0 + w.shape[0] <= kp and w.shape[1] <= width
        return slab.at[row0:row0 + w.shape[0], col:col + w.shape[1]].set(w)

    # ---- slab A: every matmul whose contraction dim fits in one 128 block ----
    A = jnp.zeros((L["A_rows"], L["A_cols"]), jnp.float32)
    # l1: input cat(do, dy) -> s rows [0:2y); bias folded at the ones row (3y)
    A = put(A, L["A"], "l1", p["W1"], row0=0)
    A = put(A, L["A"], "l1", p["b1"], row0=3 * y)
    # l2: input rp -> s rows [2y:3y)
    A = put(A, L["A"], "l2", p["W2"], row0=2 * y)
    A = put(A, L["A"], "l2", p["b2"], row0=3 * y)
    # l4, external part: W4 rows [y:2y) are the rp part, [2y:3y) the do part
    A = put(A, L["A"], "l4s", p["W4"][y:2 * y], row0=2 * y)
    A = put(A, L["A"], "l4s", p["W4"][2 * y:3 * y], row0=0)
    A = put(A, L["A"], "l4s", p["b4"], row0=3 * y)
    # GRU1 / GRU2 weights (per-gate column padding)
    A = put(A, L["A"], "wih1", _pad_gate_cols(p["wih1"], L["g1"], L["g1p"]))
    A = put(A, L["A"], "whh1", _pad_gate_cols(p["whh1"], L["g1"], L["g1p"]))
    A = put(A, L["A"], "wih2a", _pad_gate_cols(p["wih2"][:L["H2"]], L["g2"], L["g2p"]))
    A = put(A, L["A"], "wih2b", _pad_gate_cols(p["wih2"][L["H2"]:], L["g2"], L["g2p"]))
    A = put(A, L["A"], "whh2", _pad_gate_cols(p["whh2"], L["g2"], L["g2p"]))
    # l3 MLP, l4 residual part, l5 second linear
    A = put(A, L["A"], "w3a", p["W3a"])
    A = put(A, L["A"], "w3b", p["W3b"])
    A = put(A, L["A"], "w4a", p["W4"][:y])
    A = put(A, L["A"], "w5b", p["W5b"])

    # ---- slab B: contraction over GRU3 hidden ----
    B = jnp.zeros((L["B_rows"], L["B_cols"]), jnp.float32)
    B = put(B, L["B"], "whh3", _pad_gate_cols(p["whh3"], L["g3"], L["g3p"]))
    B = put(B, L["B"], "w5a", p["W5a"])

    # ---- slab C: contraction over l4 output ----
    C = jnp.zeros((L["C_rows"], L["C_cols"]), jnp.float32)
    C = put(C, L["C"], "wih3", _pad_gate_cols(p["wih3"], L["g3"], L["g3p"]))

    # ---- bias slab (f32, replicated over padded task rows) ----
    bias = jnp.zeros((L["Tp"], L["bias_cols"]), jnp.float32)

    def put_bias(slab, name, b):
        col, width = L["bias"][name]
        assert b.shape[-1] <= width
        b = jnp.broadcast_to(b, (L["Tp"], b.shape[-1]))
        return slab.at[:, col:col + b.shape[-1]].set(b)

    bias = put_bias(bias, "bih1", _pad_gate_cols(p["bih1"], L["g1"], L["g1p"]))
    bias = put_bias(bias, "bhh1", _pad_gate_cols(p["bhh1"], L["g1"], L["g1p"]))
    bias = put_bias(bias, "bih2", _pad_gate_cols(p["bih2"], L["g2"], L["g2p"]))
    bias = put_bias(bias, "bhh2", _pad_gate_cols(p["bhh2"], L["g2"], L["g2p"]))
    bias = put_bias(bias, "bih3", _pad_gate_cols(p["bih3"], L["g3"], L["g3p"]))
    bias = put_bias(bias, "bhh3", _pad_gate_cols(p["bhh3"], L["g3"], L["g3p"]))
    bias = put_bias(bias, "b3a", p["b3a"])
    bias = put_bias(bias, "b3b", p["b3b"])
    bias = put_bias(bias, "b5a", p["b5a"])
    bias = put_bias(bias, "b5b", p["b5b"])

    return {"wA": A.astype(jnp.bfloat16),
            "wB": B.astype(jnp.bfloat16),
            "wC": C.astype(jnp.bfloat16),
            "bias": bias}


def pack_activations(L, residual_pre, diff_obs, diff_pre_y, hn1, hn2, hn3):
    T, y = L["T"], L["y"]
    do = diff_obs[:, :, 0].astype(jnp.float32)
    dy = diff_pre_y[:, :, 0].astype(jnp.float32)
    rp = residual_pre[:, :, 0].astype(jnp.float32)

    act = jnp.zeros((L["Tp"], L["act_cols"]), jnp.float32)
    cs, _ = L["act"]["s"]
    act = act.at[:T, cs:cs + y].set(do)
    act = act.at[:T, cs + y:cs + 2 * y].set(dy)
    act = act.at[:T, cs + 2 * y:cs + 3 * y].set(rp)
    act = act.at[:, cs + 3 * y].set(1.0)          # ones lane folds l1/l2/l4 biases
    c1, _ = L["act"]["hn1"]
    act = act.at[:T, c1:c1 + L["g1"]].set(hn1[0].astype(jnp.float32))
    c2, _ = L["act"]["hn2"]
    act = act.at[:T, c2:c2 + L["g2"]].set(hn2[0].astype(jnp.float32))
    c3, _ = L["act"]["hn3"]
    act = act.at[:T, c3:c3 + L["g3"]].set(hn3[0].astype(jnp.float32))
    return act


# --------------------------------------------------------------------------
# The fused kernel.
# --------------------------------------------------------------------------
def outliernet_kernel(act_ref, wA_ref, wB_ref, wC_ref, bias_ref, out_ref, *, L):
    f32 = jnp.float32

    def wA(name):
        col, kp, w = L["A"][name]
        return wA_ref[0:kp, col:col + w].astype(f32)

    def wB(name):
        col, kp, w = L["B"][name]
        return wB_ref[0:kp, col:col + w].astype(f32)

    def wC(name):
        col, kp, w = L["C"][name]
        return wC_ref[0:kp, col:col + w].astype(f32)

    def bias(name):
        col, w = L["bias"][name]
        return bias_ref[:, col:col + w]

    def act(name):
        col, w = L["act"][name]
        return act_ref[:, col:col + w]

    def dot(a, b):
        return jnp.dot(a, b, preferred_element_type=f32)

    def gru(gi, gh, h, hp):
        # PyTorch nn.GRU cell, gate order [r, z, n]; slices are 128-aligned.
        r = jax.nn.sigmoid(gi[:, 0:hp] + gh[:, 0:hp])
        z = jax.nn.sigmoid(gi[:, hp:2 * hp] + gh[:, hp:2 * hp])
        n = jnp.tanh(gi[:, 2 * hp:3 * hp] + r * gh[:, 2 * hp:3 * hp])
        return (1.0 - z) * n + z * h

    s = act("s")
    hn1 = act("hn1")
    hn2 = act("hn2")
    hn3 = act("hn3")

    # l1, l2 and the external part of l4 share the input s -> one fused dot,
    # with their biases folded via the ones lane of s.
    col0, kp_s, _ = L["A"]["l1"]
    col_l4, _, w_l4 = L["A"]["l4s"]
    gS = dot(s, wA_ref[0:kp_s, col0:col_l4 + w_l4].astype(f32))
    H1p, H2p = L["H1p"], L["H2p"]
    l1 = jax.nn.relu(gS[:, 0:H1p])
    l2 = jax.nn.relu(gS[:, H1p:H1p + H2p])
    l4_ext = gS[:, H1p + H2p:]

    # GRU1 (single step)
    gi1 = dot(l1, wA("wih1")) + bias("bih1")
    gh1 = dot(hn1, wA("whh1")) + bias("bhh1")
    h1 = gru(gi1, gh1, hn1, L["g1p"])

    # GRU2, input = cat(l2_out, h1) (split input weights)
    gi2 = dot(l2, wA("wih2a")) + dot(h1, wA("wih2b")) + bias("bih2")
    gh2 = dot(hn2, wA("whh2")) + bias("bhh2")
    h2 = gru(gi2, gh2, hn2, L["g2p"])

    # l3 = Linear -> ReLU -> Linear : "residual" (lane-padded to 128)
    l3h = jax.nn.relu(dot(h2, wA("w3a")) + bias("b3a"))
    residual = dot(l3h, wA("w3b")) + bias("b3b")

    # l4 = ReLU(external part + residual part)
    l4 = jax.nn.relu(l4_ext + dot(residual, wA("w4a")))

    # GRU3
    gi3 = dot(l4, wC("wih3")) + bias("bih3")
    gh3 = dot(hn3, wB("whh3")) + bias("bhh3")
    h3 = gru(gi3, gh3, hn3, L["g3p"])

    # l5 = Linear -> ReLU -> Linear : raw Sk (lane-padded to 128)
    l5h = jax.nn.relu(dot(h3, wB("w5a")) + bias("b5a"))
    sk = dot(l5h, wA("w5b")) + bias("b5b")

    # Single lane-dense output slab; every store is an unmasked, 128-multiple
    # wide write at a 128-aligned lane offset.
    o = L["out"]
    c, w = o["res"]
    out_ref[:, c:c + w] = residual
    c, w = o["sk"]
    out_ref[:, c:c + w] = sk
    c, w = o["h1"]
    out_ref[:, c:c + w] = h1
    c, w = o["h2"]
    out_ref[:, c:c + w] = h2
    c, w = o["h3"]
    out_ref[:, c:c + w] = h3


# --------------------------------------------------------------------------
# softplus of eigenvalues of the lower-triangle symmetric part of Sk
# (matches torch.linalg.eigh(UPLO='L') + log(1+exp) + reconstruct).
# --------------------------------------------------------------------------
def _spd_from_sk(Sk):
    y = Sk.shape[-1]
    if y == 2:
        # Closed-form 2x2 spectral function: A = m*I + [[p, b], [b, -p]].
        a = Sk[..., 0, 0]
        b = Sk[..., 1, 0]
        c = Sk[..., 1, 1]
        m = 0.5 * (a + c)
        p = 0.5 * (a - c)
        r = jnp.sqrt(p * p + b * b)
        f1 = jax.nn.softplus(m + r)
        f2 = jax.nn.softplus(m - r)
        avg = 0.5 * (f1 + f2)
        safe_r = jnp.where(r > 1e-12, r, 1.0)
        coef = jnp.where(r > 1e-12, 0.5 * (f1 - f2) / safe_r, jax.nn.sigmoid(m))
        o00 = avg + coef * p
        o11 = avg - coef * p
        o01 = coef * b
        return jnp.stack([jnp.stack([o00, o01], -1),
                          jnp.stack([o01, o11], -1)], -2)
    # TODO(synk): general symmetric eigendecomposition has no Pallas equivalent;
    # fall back to XLA's batched eigh for y_dim != 2.
    Sk_sym = jnp.tril(Sk) + jnp.swapaxes(jnp.tril(Sk, -1), -1, -2)
    w, v = jnp.linalg.eigh(Sk_sym)
    wp = jax.nn.softplus(w)
    return jnp.matmul(v, wp[..., None] * jnp.swapaxes(v, -1, -2))


# --------------------------------------------------------------------------
# Forward wrapper (mirrors Learner_OutlierNet_v2.forward).
# --------------------------------------------------------------------------
def forward(packed, L, residual_pre, diff_obs, diff_pre_y, hn1, hn2, hn3):
    act = pack_activations(L, residual_pre, diff_obs, diff_pre_y, hn1, hn2, hn3)
    vmem = pl.BlockSpec(memory_space=pltpu.MemorySpace.VMEM)
    out = pl.pallas_call(
        functools.partial(outliernet_kernel, L=L),
        out_shape=jax.ShapeDtypeStruct((L["Tp"], L["out_cols"]), jnp.float32),
        in_specs=[vmem] * 5,
        out_specs=vmem,
    )(act, packed["wA"], packed["wB"], packed["wC"], packed["bias"])

    T, y = L["T"], L["y"]
    c, _ = L["out"]["res"]
    res2d = out[:T, c:c + y]
    c, _ = L["out"]["sk"]
    sk_raw = out[:T, c:c + y * y]
    c, _ = L["out"]["h1"]
    h1 = out[:T, c:c + L["g1"]]
    c, _ = L["out"]["h2"]
    h2 = out[:T, c:c + L["g2"]]
    c, _ = L["out"]["h3"]
    h3 = out[:T, c:c + L["g3"]]

    residual = res2d.reshape(T, y, 1)
    Sk = _spd_from_sk(sk_raw.reshape(T, y, y))
    return residual, Sk, h1[None], h2[None], h3[None]


if __name__ == "__main__":
    x_dim, y_dim, task_num = 2, 2, 4
    L = make_layout(x_dim, y_dim, task_num)

    key = jax.random.PRNGKey(0)
    kpar, k1, k2, k3, kh1, kh2, kh3 = jax.random.split(key, 7)
    params = init_params(kpar, x_dim, y_dim)
    packed = pack_params(params, L)            # one-time host-side packing

    residual_pre = jax.random.normal(k1, (task_num, y_dim, 1), jnp.float32)
    diff_obs = jax.random.normal(k2, (task_num, y_dim, 1), jnp.float32)
    diff_pre_y = jax.random.normal(k3, (task_num, y_dim, 1), jnp.float32)
    hn1 = jax.random.normal(kh1, (1, task_num, L["g1"]), jnp.float32)
    hn2 = jax.random.normal(kh2, (1, task_num, L["g2"]), jnp.float32)
    hn3 = jax.random.normal(kh3, (1, task_num, L["g3"]), jnp.float32)

    fwd = jax.jit(lambda pk, rp, do, dy, h1, h2, h3:
                  forward(pk, L, rp, do, dy, h1, h2, h3))
    residual, Sk, hn1_new, hn2_new, hn3_new = fwd(
        packed, residual_pre, diff_obs, diff_pre_y, hn1, hn2, hn3)
    jax.block_until_ready((residual, Sk, hn1_new, hn2_new, hn3_new))

    assert residual.shape == (task_num, y_dim, 1)
    assert Sk.shape == (task_num, y_dim, y_dim)
    assert hn1_new.shape == (1, task_num, L["g1"])
    assert hn2_new.shape == (1, task_num, L["g2"])
    assert hn3_new.shape == (1, task_num, L["g3"])
    assert bool(jnp.all(jnp.isfinite(residual))) and bool(jnp.all(jnp.isfinite(Sk)))
    print("KERNEL_OK")
</pallas_src>

<mosaic_0001>
module attributes {stable_mosaic.version = 11 : i64} {
  func.func @outliernet_kernel(%arg0: memref<8x640xf32, #tpu.memory_space<vmem>>, %arg1: memref<128x3328xbf16, #tpu.memory_space<vmem>>, %arg2: memref<256x896xbf16, #tpu.memory_space<vmem>>, %arg3: memref<384x768xbf16, #tpu.memory_space<vmem>>, %arg4: memref<8x3584xf32, #tpu.memory_space<vmem>>, %arg5: memref<8x768xf32, #tpu.memory_space<vmem>>) attributes {dimension_semantics = [], scalar_prefetch = 0 : i64, scratch_operands = 0 : i64, tpu.core_type = #tpu.core_type<tc>} {
    %c0 = arith.constant 0 : index
    %c0_0 = arith.constant 0 : index
    %0 = vector.load %arg0[%c0, %c0_0] : memref<8x640xf32, #tpu.memory_space<vmem>>, vector<8x128xf32>
    %c0_1 = arith.constant 0 : index
    %c128 = arith.constant 128 : index
    %1 = vector.load %arg0[%c0_1, %c128] : memref<8x640xf32, #tpu.memory_space<vmem>>, vector<8x128xf32>
    %c0_2 = arith.constant 0 : index
    %c256 = arith.constant 256 : index
    %2 = vector.load %arg0[%c0_2, %c256] : memref<8x640xf32, #tpu.memory_space<vmem>>, vector<8x128xf32>
    %c0_3 = arith.constant 0 : index
    %c384 = arith.constant 384 : index
    %3 = vector.load %arg0[%c0_3, %c384] : memref<8x640xf32, #tpu.memory_space<vmem>>, vector<8x256xf32>
    %c0_4 = arith.constant 0 : index
    %c0_5 = arith.constant 0 : index
    %4 = vector.load %arg1[%c0_4, %c0_5] : memref<128x3328xbf16, #tpu.memory_space<vmem>>, vector<128x640xbf16>
    %5 = arith.extf %4 : vector<128x640xbf16> to vector<128x640xf32>
    %cst = arith.constant dense<0.000000e+00> : vector<8x640xf32>
    %6 = tpu.matmul %0, %5, %cst {dimension_numbers = #tpu.dot_dimension_numbers<[1], [0], [0], [1], [0, 0, 1, 1], [], []>} : vector<8x128xf32>, vector<128x640xf32>, vector<8x640xf32> -> vector<8x640xf32>
    %7 = vector.extract_strided_slice %6 {offsets = [0, 0], sizes = [8, 128], strides = [1, 1]} : vector<8x640xf32> to vector<8x128xf32>
    %cst_6 = arith.constant 0.000000e+00 : f32
    %8 = vector.broadcast %cst_6 : f32 to vector<8x128xf32>
    %9 = arith.maximumf %7, %8 : vector<8x128xf32>
    %10 = vector.extract_strided_slice %6 {offsets = [0, 128], sizes = [8, 128], strides = [1, 1]} : vector<8x640xf32> to vector<8x128xf32>
    %cst_7 = arith.constant 0.000000e+00 : f32
    %11 = vector.broadcast %cst_7 : f32 to vector<8x128xf32>
    %12 = arith.maximumf %10, %11 : vector<8x128xf32>
    %13 = vector.extract_strided_slice %6 {offsets = [0, 256], sizes = [8, 384], strides = [1, 1]} : vector<8x640xf32> to vector<8x384xf32>
    %c0_8 = arith.constant 0 : index
    %c640 = arith.constant 640 : index
    %14 = vector.load %arg1[%c0_8, %c640] : memref<128x3328xbf16, #tpu.memory_space<vmem>>, vector<128x384xbf16>
    %15 = arith.extf %14 : vector<128x384xbf16> to vector<128x384xf32>
    %cst_9 = arith.constant dense<0.000000e+00> : vector<8x384xf32>
    %16 = tpu.matmul %9, %15, %cst_9 {dimension_numbers = #tpu.dot_dimension_numbers<[1], [0], [0], [1], [0, 0, 1, 1], [], []>} : vector<8x128xf32>, vector<128x384xf32>, vector<8x384xf32> -> vector<8x384xf32>
    %c0_10 = arith.constant 0 : index
    %c0_11 = arith.constant 0 : index
    %17 = vector.load %arg4[%c0_10, %c0_11] : memref<8x3584xf32, #tpu.memory_space<vmem>>, vector<8x384xf32>
    %18 = arith.addf %16, %17 : vector<8x384xf32>
    %c0_12 = arith.constant 0 : index
    %c1024 = arith.constant 1024 : index
    %19 = vector.load %arg1[%c0_12, %c1024] : memref<128x3328xbf16, #tpu.memory_space<vmem>>, vector<128x384xbf16>
    %20 = arith.extf %19 : vector<128x384xbf16> to vector<128x384xf32>
    %cst_13 = arith.constant dense<0.000000e+00> : vector<8x384xf32>
    %21 = tpu.matmul %1, %20, %cst_13 {dimension_numbers = #tpu.dot_dimension_numbers<[1], [0], [0], [1], [0, 0, 1, 1], [], []>} : vector<8x128xf32>, vector<128x384xf32>, vector<8x384xf32> -> vector<8x384xf32>
    %c0_14 = arith.constant 0 : index
    %c384_15 = arith.constant 384 : index
    %22 = vector.load %arg4[%c0_14, %c384_15] : memref<8x3584xf32, #tpu.memory_space<vmem>>, vector<8x384xf32>
    %23 = arith.addf %21, %22 : vector<8x384xf32>
    %24 = vector.extract_strided_slice %18 {offsets = [0, 0], sizes = [8, 128], strides = [1, 1]} : vector<8x384xf32> to vector<8x128xf32>
    %25 = vector.extract_strided_slice %23 {offsets = [0, 0], sizes = [8, 128], strides = [1, 1]} : vector<8x384xf32> to vector<8x128xf32>
    %26 = arith.addf %24, %25 : vector<8x128xf32>
    %27 = arith.negf %26 : vector<8x128xf32>
    %28 = math.exp %27 : vector<8x128xf32>
    %cst_16 = arith.constant 1.000000e+00 : f32
    %29 = vector.broadcast %cst_16 : f32 to vector<8x128xf32>
    %30 = arith.addf %29, %28 : vector<8x128xf32>
    %31 = arith.divf %29, %30 : vector<8x128xf32>
    %32 = vector.extract_strided_slice %18 {offsets = [0, 128], sizes = [8, 128], strides = [1, 1]} : vector<8x384xf32> to vector<8x128xf32>
    %33 = vector.extract_strided_slice %23 {offsets = [0, 128], sizes = [8, 128], strides = [1, 1]} : vector<8x384xf32> to vector<8x128xf32>
    %34 = arith.addf %32, %33 : vector<8x128xf32>
    %35 = arith.negf %34 : vector<8x128xf32>
    %36 = math.exp %35 : vector<8x128xf32>
    %cst_17 = arith.constant 1.000000e+00 : f32
    %37 = vector.broadcast %cst_17 : f32 to vector<8x128xf32>
    %38 = arith.addf %37, %36 : vector<8x128xf32>
    %39 = arith.divf %37, %38 : vector<8x128xf32>
    %40 = vector.extract_strided_slice %18 {offsets = [0, 256], sizes = [8, 128], strides = [1, 1]} : vector<8x384xf32> to vector<8x128xf32>
    %41 = vector.extract_strided_slice %23 {offsets = [0, 256], sizes = [8, 128], strides = [1, 1]} : vector<8x384xf32> to vector<8x128xf32>
    %42 = arith.mulf %31, %41 : vector<8x128xf32>
    %43 = arith.addf %40, %42 : vector<8x128xf32>
    %44 = math.tanh %43 : vector<8x128xf32>
    %cst_18 = arith.constant 1.000000e+00 : f32
    %45 = vector.broadcast %cst_18 : f32 to vector<8x128xf32>
    %46 = arith.subf %45, %39 : vector<8x128xf32>
    %47 = arith.mulf %46, %44 : vector<8x128xf32>
    %48 = arith.mulf %39, %1 : vector<8x128xf32>
    %49 = arith.addf %47, %48 : vector<8x128xf32>
    %c0_19 = arith.constant 0 : index
    %c1408 = arith.constant 1408 : index
    %50 = vector.load %arg1[%c0_19, %c1408] : memref<128x3328xbf16, #tpu.memory_space<vmem>>, vector<128x384xbf16>
    %51 = arith.extf %50 : vector<128x384xbf16> to vector<128x384xf32>
    %cst_20 = arith.constant dense<0.000000e+00> : vector<8x384xf32>
    %52 = tpu.matmul %12, %51, %cst_20 {dimension_numbers = #tpu.dot_dimension_numbers<[1], [0], [0], [1], [0, 0, 1, 1], [], []>} : vector<8x128xf32>, vector<128x384xf32>, vector<8x384xf32> -> vector<8x384xf32>
    %c0_21 = arith.constant 0 : index
    %c1792 = arith.constant 1792 : index
    %53 = vector.load %arg1[%c0_21, %c1792] : memref<128x3328xbf16, #tpu.memory_space<vmem>>, vector<128x384xbf16>
    %54 = arith.extf %53 : vector<128x384xbf16> to vector<128x384xf32>
    %cst_22 = arith.constant dense<0.000000e+00> : vector<8x384xf32>
    %55 = tpu.matmul %49, %54, %cst_22 {dimension_numbers = #tpu.dot_dimension_numbers<[1], [0], [0], [1], [0, 0, 1, 1], [], []>} : vector<8x128xf32>, vector<128x384xf32>, vector<8x384xf32> -> vector<8x384xf32>
    %56 = arith.addf %52, %55 : vector<8x384xf32>
    %c0_23 = arith.constant 0 : index
    %c768 = arith.constant 768 : index
    %57 = vector.load %arg4[%c0_23, %c768] : memref<8x3584xf32, #tpu.memory_space<vmem>>, vector<8x384xf32>
    %58 = arith.addf %56, %57 : vector<8x384xf32>
    %c0_24 = arith.constant 0 : index
    %c2176 = arith.constant 2176 : index
    %59 = vector.load %arg1[%c0_24, %c2176] : memref<128x3328xbf16, #tpu.memory_space<vmem>>, vector<128x384xbf16>
    %60 = arith.extf %59 : vector<128x384xbf16> to vector<128x384xf32>
    %cst_25 = arith.constant dense<0.000000e+00> : vector<8x384xf32>
    %61 = tpu.matmul %2, %60, %cst_25 {dimension_numbers = #tpu.dot_dimension_numbers<[1], [0], [0], [1], [0, 0, 1, 1], [], []>} : vector<8x128xf32>, vector<128x384xf32>, vector<8x384xf32> -> vector<8x384xf32>
    %c0_26 = arith.constant 0 : index
    %c1152 = arith.constant 1152 : index
    %62 = vector.load %arg4[%c0_26, %c1152] : memref<8x3584xf32, #tpu.memory_space<vmem>>, vector<8x384xf32>
    %63 = arith.addf %61, %62 : vector<8x384xf32>
    %64 = vector.extract_strided_slice %58 {offsets = [0, 0], sizes = [8, 128], strides = [1, 1]} : vector<8x384xf32> to vector<8x128xf32>
    %65 = vector.extract_strided_slice %63 {offsets = [0, 0], sizes = [8, 128], strides = [1, 1]} : vector<8x384xf32> to vector<8x128xf32>
    %66 = arith.addf %64, %65 : vector<8x128xf32>
    %67 = arith.negf %66 : vector<8x128xf32>
    %68 = math.exp %67 : vector<8x128xf32>
    %cst_27 = arith.constant 1.000000e+00 : f32
    %69 = vector.broadcast %cst_27 : f32 to vector<8x128xf32>
    %70 = arith.addf %69, %68 : vector<8x128xf32>
    %71 = arith.divf %69, %70 : vector<8x128xf32>
    %72 = vector.extract_strided_slice %58 {offsets = [0, 128], sizes = [8, 128], strides = [1, 1]} : vector<8x384xf32> to vector<8x128xf32>
    %73 = vector.extract_strided_slice %63 {offsets = [0, 128], sizes = [8, 128], strides = [1, 1]} : vector<8x384xf32> to vector<8x128xf32>
    %74 = arith.addf %72, %73 : vector<8x128xf32>
    %75 = arith.negf %74 : vector<8x128xf32>
    %76 = math.exp %75 : vector<8x128xf32>
    %cst_28 = arith.constant 1.000000e+00 : f32
    %77 = vector.broadcast %cst_28 : f32 to vector<8x128xf32>
    %78 = arith.addf %77, %76 : vector<8x128xf32>
    %79 = arith.divf %77, %78 : vector<8x128xf32>
    %80 = vector.extract_strided_slice %58 {offsets = [0, 256], sizes = [8, 128], strides = [1, 1]} : vector<8x384xf32> to vector<8x128xf32>
    %81 = vector.extract_strided_slice %63 {offsets = [0, 256], sizes = [8, 128], strides = [1, 1]} : vector<8x384xf32> to vector<8x128xf32>
    %82 = arith.mulf %71, %81 : vector<8x128xf32>
    %83 = arith.addf %80, %82 : vector<8x128xf32>
    %84 = math.tanh %83 : vector<8x128xf32>
    %cst_29 = arith.constant 1.000000e+00 : f32
    %85 = vector.broadcast %cst_29 : f32 to vector<8x128xf32>
    %86 = arith.subf %85, %79 : vector<8x128xf32>
    %87 = arith.mulf %86, %84 : vector<8x128xf32>
    %88 = arith.mulf %79, %2 : vector<8x128xf32>
    %89 = arith.addf %87, %88 : vector<8x128xf32>
    %c0_30 = arith.constant 0 : index
    %c2560 = arith.constant 2560 : index
    %90 = vector.load %arg1[%c0_30, %c2560] : memref<128x3328xbf16, #tpu.memory_space<vmem>>, vector<128x128xbf16>
    %91 = arith.extf %90 : vector<128x128xbf16> to vector<128x128xf32>
    %cst_31 = arith.constant dense<0.000000e+00> : vector<8x128xf32>
    %92 = tpu.matmul %89, %91, %cst_31 {dimension_numbers = #tpu.dot_dimension_numbers<[1], [0], [0], [1], [0, 0, 1, 1], [], []>} : vector<8x128xf32>, vector<128x128xf32>, vector<8x128xf32> -> vector<8x128xf32>
    %c0_32 = arith.constant 0 : index
    %c3072 = arith.constant 3072 : index
    %93 = vector.load %arg4[%c0_32, %c3072] : memref<8x3584xf32, #tpu.memory_space<vmem>>, vector<8x128xf32>
    %94 = arith.addf %92, %93 : vector<8x128xf32>
    %cst_33 = arith.constant 0.000000e+00 : f32
    %95 = vector.broadcast %cst_33 : f32 to vector<8x128xf32>
    %96 = arith.maximumf %94, %95 : vector<8x128xf32>
    %c0_34 = arith.constant 0 : index
    %c2688 = arith.constant 2688 : index
    %97 = vector.load %arg1[%c0_34, %c2688] : memref<128x3328xbf16, #tpu.memory_space<vmem>>, vector<128x128xbf16>
    %98 = arith.extf %97 : vector<128x128xbf16> to vector<128x128xf32>
    %cst_35 = arith.constant dense<0.000000e+00> : vector<8x128xf32>
    %99 = tpu.matmul %96, %98, %cst_35 {dimension_numbers = #tpu.dot_dimension_numbers<[1], [0], [0], [1], [0, 0, 1, 1], [], []>} : vector<8x128xf32>, vector<128x128xf32>, vector<8x128xf32> -> vector<8x128xf32>
    %c0_36 = arith.constant 0 : index
    %c3200 = arith.constant 3200 : index
    %100 = vector.load %arg4[%c0_36, %c3200] : memref<8x3584xf32, #tpu.memory_space<vmem>>, vector<8x128xf32>
    %101 = arith.addf %99, %100 : vector<8x128xf32>
    %c0_37 = arith.constant 0 : index
    %c2816 = arith.constant 2816 : index
    %102 = vector.load %arg1[%c0_37, %c2816] : memref<128x3328xbf16, #tpu.memory_space<vmem>>, vector<128x384xbf16>
    %103 = arith.extf %102 : vector<128x384xbf16> to vector<128x384xf32>
    %cst_38 = arith.constant dense<0.000000e+00> : vector<8x384xf32>
    %104 = tpu.matmul %101, %103, %cst_38 {dimension_numbers = #tpu.dot_dimension_numbers<[1], [0], [0], [1], [0, 0, 1, 1], [], []>} : vector<8x128xf32>, vector<128x384xf32>, vector<8x384xf32> -> vector<8x384xf32>
    %105 = arith.addf %13, %104 : vector<8x384xf32>
    %cst_39 = arith.constant 0.000000e+00 : f32
    %106 = vector.broadcast %cst_39 : f32 to vector<8x384xf32>
    %107 = arith.maximumf %105, %106 : vector<8x384xf32>
    %c0_40 = arith.constant 0 : index
    %c0_41 = arith.constant 0 : index
    %108 = vector.load %arg3[%c0_40, %c0_41] : memref<384x768xbf16, #tpu.memory_space<vmem>>, vector<384x768xbf16>
    %109 = arith.extf %108 : vector<384x768xbf16> to vector<384x768xf32>
    %cst_42 = arith.constant dense<0.000000e+00> : vector<8x768xf32>
    %110 = tpu.matmul %107, %109, %cst_42 {dimension_numbers = #tpu.dot_dimension_numbers<[1], [0], [0], [1], [0, 0, 1, 1], [], []>} : vector<8x384xf32>, vector<384x768xf32>, vector<8x768xf32> -> vector<8x768xf32>
    %c0_43 = arith.constant 0 : index
    %c1536 = arith.constant 1536 : index
    %111 = vector.load %arg4[%c0_43, %c1536] : memref<8x3584xf32, #tpu.memory_space<vmem>>, vector<8x768xf32>
    %112 = arith.addf %110, %111 : vector<8x768xf32>
    %c0_44 = arith.constant 0 : index
    %c0_45 = arith.constant 0 : index
    %113 = vector.load %arg2[%c0_44, %c0_45] : memref<256x896xbf16, #tpu.memory_space<vmem>>, vector<256x768xbf16>
    %114 = arith.extf %113 : vector<256x768xbf16> to vector<256x768xf32>
    %cst_46 = arith.constant dense<0.000000e+00> : vector<8x768xf32>
    %115 = tpu.matmul %3, %114, %cst_46 {dimension_numbers = #tpu.dot_dimension_numbers<[1], [0], [0], [1], [0, 0, 1, 1], [], []>} : vector<8x256xf32>, vector<256x768xf32>, vector<8x768xf32> -> vector<8x768xf32>
    %c0_47 = arith.constant 0 : index
    %c2304 = arith.constant 2304 : index
    %116 = vector.load %arg4[%c0_47, %c2304] : memref<8x3584xf32, #tpu.memory_space<vmem>>, vector<8x768xf32>
    %117 = arith.addf %115, %116 : vector<8x768xf32>
    %118 = vector.extract_strided_slice %112 {offsets = [0, 0], sizes = [8, 256], strides = [1, 1]} : vector<8x768xf32> to vector<8x256xf32>
    %119 = vector.extract_strided_slice %117 {offsets = [0, 0], sizes = [8, 256], strides = [1, 1]} : vector<8x768xf32> to vector<8x256xf32>
    %120 = arith.addf %118, %119 : vector<8x256xf32>
    %121 = arith.negf %120 : vector<8x256xf32>
    %122 = math.exp %121 : vector<8x256xf32>
    %cst_48 = arith.constant 1.000000e+00 : f32
    %123 = vector.broadcast %cst_48 : f32 to vector<8x256xf32>
    %124 = arith.addf %123, %122 : vector<8x256xf32>
    %125 = arith.divf %123, %124 : vector<8x256xf32>
    %126 = vector.extract_strided_slice %112 {offsets = [0, 256], sizes = [8, 256], strides = [1, 1]} : vector<8x768xf32> to vector<8x256xf32>
    %127 = vector.extract_strided_slice %117 {offsets = [0, 256], sizes = [8, 256], strides = [1, 1]} : vector<8x768xf32> to vector<8x256xf32>
    %128 = arith.addf %126, %127 : vector<8x256xf32>
    %129 = arith.negf %128 : vector<8x256xf32>
    %130 = math.exp %129 : vector<8x256xf32>
    %cst_49 = arith.constant 1.000000e+00 : f32
    %131 = vector.broadcast %cst_49 : f32 to vector<8x256xf32>
    %132 = arith.addf %131, %130 : vector<8x256xf32>
    %133 = arith.divf %131, %132 : vector<8x256xf32>
    %134 = vector.extract_strided_slice %112 {offsets = [0, 512], sizes = [8, 256], strides = [1, 1]} : vector<8x768xf32> to vector<8x256xf32>
    %135 = vector.extract_strided_slice %117 {offsets = [0, 512], sizes = [8, 256], strides = [1, 1]} : vector<8x768xf32> to vector<8x256xf32>
    %136 = arith.mulf %125, %135 : vector<8x256xf32>
    %137 = arith.addf %134, %136 : vector<8x256xf32>
    %138 = math.tanh %137 : vector<8x256xf32>
    %cst_50 = arith.constant 1.000000e+00 : f32
    %139 = vector.broadcast %cst_50 : f32 to vector<8x256xf32>
    %140 = arith.subf %139, %133 : vector<8x256xf32>
    %141 = arith.mulf %140, %138 : vector<8x256xf32>
    %142 = arith.mulf %133, %3 : vector<8x256xf32>
    %143 = arith.addf %141, %142 : vector<8x256xf32>
    %c0_51 = arith.constant 0 : index
    %c768_52 = arith.constant 768 : index
    %144 = vector.load %arg2[%c0_51, %c768_52] : memref<256x896xbf16, #tpu.memory_space<vmem>>, vector<256x128xbf16>
    %145 = arith.extf %144 : vector<256x128xbf16> to vector<256x128xf32>
    %cst_53 = arith.constant dense<0.000000e+00> : vector<8x128xf32>
    %146 = tpu.matmul %143, %145, %cst_53 {dimension_numbers = #tpu.dot_dimension_numbers<[1], [0], [0], [1], [0, 0, 1, 1], [], []>} : vector<8x256xf32>, vector<256x128xf32>, vector<8x128xf32> -> vector<8x128xf32>
    %c0_54 = arith.constant 0 : index
    %c3328 = arith.constant 3328 : index
    %147 = vector.load %arg4[%c0_54, %c3328] : memref<8x3584xf32, #tpu.memory_space<vmem>>, vector<8x128xf32>
    %148 = arith.addf %146, %147 : vector<8x128xf32>
    %cst_55 = arith.constant 0.000000e+00 : f32
    %149 = vector.broadcast %cst_55 : f32 to vector<8x128xf32>
    %150 = arith.maximumf %148, %149 : vector<8x128xf32>
    %c0_56 = arith.constant 0 : index
    %c3200_57 = arith.constant 3200 : index
    %151 = vector.load %arg1[%c0_56, %c3200_57] : memref<128x3328xbf16, #tpu.memory_space<vmem>>, vector<128x128xbf16>
    %152 = arith.extf %151 : vector<128x128xbf16> to vector<128x128xf32>
    %cst_58 = arith.constant dense<0.000000e+00> : vector<8x128xf32>
    %153 = tpu.matmul %150, %152, %cst_58 {dimension_numbers = #tpu.dot_dimension_numbers<[1], [0], [0], [1], [0, 0, 1, 1], [], []>} : vector<8x128xf32>, vector<128x128xf32>, vector<8x128xf32> -> vector<8x128xf32>
    %c0_59 = arith.constant 0 : index
    %c3456 = arith.constant 3456 : index
    %154 = vector.load %arg4[%c0_59, %c3456] : memref<8x3584xf32, #tpu.memory_space<vmem>>, vector<8x128xf32>
    %155 = arith.addf %153, %154 : vector<8x128xf32>
    %c0_60 = arith.constant 0 : index
    %c0_61 = arith.constant 0 : index
    %156 = vector.load %arg5[%c0_60, %c0_61] : memref<8x768xf32, #tpu.memory_space<vmem>>, vector<8x128xf32>
    tpu.vector_store %arg5[%c0_60, %c0_61], %101 {strides = array<i32>} : memref<8x768xf32, #tpu.memory_space<vmem>>, vector<8x128xf32>,
    %c0_62 = arith.constant 0 : index
    %c128_63 = arith.constant 128 : index
    %157 = vector.load %arg5[%c0_62, %c128_63] : memref<8x768xf32, #tpu.memory_space<vmem>>, vector<8x128xf32>
    tpu.vector_store %arg5[%c0_62, %c128_63], %155 {strides = array<i32>} : memref<8x768xf32, #tpu.memory_space<vmem>>, vector<8x128xf32>,
    %c0_64 = arith.constant 0 : index
    %c256_65 = arith.constant 256 : index
    %158 = vector.load %arg5[%c0_64, %c256_65] : memref<8x768xf32, #tpu.memory_space<vmem>>, vector<8x128xf32>
    tpu.vector_store %arg5[%c0_64, %c256_65], %49 {strides = array<i32>} : memref<8x768xf32, #tpu.memory_space<vmem>>, vector<8x128xf32>,
    %c0_66 = arith.constant 0 : index
    %c384_67 = arith.constant 384 : index
    %159 = vector.load %arg5[%c0_66, %c384_67] : memref<8x768xf32, #tpu.memory_space<vmem>>, vector<8x128xf32>
    tpu.vector_store %arg5[%c0_66, %c384_67], %89 {strides = array<i32>} : memref<8x768xf32, #tpu.memory_space<vmem>>, vector<8x128xf32>,
    %c0_68 = arith.constant 0 : index
    %c512 = arith.constant 512 : index
    %160 = vector.load %arg5[%c0_68, %c512] : memref<8x768xf32, #tpu.memory_space<vmem>>, vector<8x256xf32>
    tpu.vector_store %arg5[%c0_68, %c512], %143 {strides = array<i32>} : memref<8x768xf32, #tpu.memory_space<vmem>>, vector<8x256xf32>,
    return
  }
}

</mosaic_0001>

<llo_original>
// kernel: _lambda_.1
$region0: #{_lambda_.1}
  #allocation0 [shape = 'u32[]', space=smem, size = 0x4, offset = 0x4, fixed_abs, tag = 'smem constant byte address 0x4 - core index']
  #allocation1 [shape = 'u32[72,128]{1,0:T(1,128)}', space=vmem, size = 0x9000, scoped, tag = 'internal scratch']
  %s0 = inlined_call_operand.vmem [shape: f32[8,640], index: 0, kind: input, shape index: {}]
  %s1 = inlined_call_operand.hbm [shape: bf16[128,3328], index: 1, kind: input, shape index: {}]
  %s2 = inlined_call_operand.hbm [shape: bf16[256,896], index: 2, kind: input, shape index: {}]
  %s3 = inlined_call_operand.hbm [shape: bf16[384,768], index: 3, kind: input, shape index: {}]
  %s4 = inlined_call_operand.hbm [shape: f32[8,3584], index: 4, kind: input, shape index: {}]
  %s5 = inlined_call_operand.vmem [shape: f32[8,768], index: 5, kind: output, shape index: {}]
  %s6 = sld [smem:[#allocation0]]
  $region46: #{_lambda_.1} parent=0
    _
  %s8 = ssub.s32 1, %s6
  %s9 = scalar_select 0, %s8, %s6
  $region1: #{_lambda_.1} parent=0
    #allocation2 [shape = 'u8[851968]{0}', space=vmem, size = 0xd0000, scoped, tag = 'input window, operand 1, single buffered']
    #allocation3 [shape = 's32[1]{0}', space=sflag, size = 0x4, scoped, tag = 'scoped memory for _lambda_.1']
    #allocation4 [shape = 'u8[458752]{0}', space=vmem, size = 0x70000, scoped, tag = 'input window, operand 2, single buffered']
    #allocation5 [shape = 's32[1]{0}', space=sflag, size = 0x4, scoped, tag = 'scoped memory for _lambda_.1']
    #allocation6 [shape = 'u8[589824]{0}', space=vmem, size = 0x90000, scoped, tag = 'input window, operand 3, single buffered']
    #allocation7 [shape = 'u8[114688]{0}', space=vmem, size = 0x1c000, scoped, tag = 'input window, operand 4, single buffered']
    #allocation8 [shape = 's32[1]{0}', space=sflag, size = 0x4, scoped, tag = 'scoped memory for _lambda_.1']
    %10 = vsyncpa [#allocation3], 0
    %11 = vsyncpa [#allocation5], 0
    %12 = vsyncpa [#allocation8], 0
    // Predicated region
    $region2: #{_lambda_.1} parent=1 // pred_check
      _
    $region3: #{_lambda_.1} parent=1 // pred_check_branch
      %14 = sbr.rel (0) target = $region5
    $region4: #{_lambda_.1} parent=1 // pred_region
      _
    $region5: #{_lambda_.1} parent=1 // pred_fallthru
      _
    // Predicated region
    $region6: #{_lambda_.1} parent=1 // pred_check
      _
    $region7: #{_lambda_.1} parent=1 // pred_check_branch
      %16 = sbr.rel (0) target = $region9
    $region8: #{_lambda_.1} parent=1 // pred_region
      %18 = vsyncadd [#allocation3], 0
      %s19 = sshll.u32 %s1, 4
      %s20 = int_to_ptr.hbm [resolvable:$true] %s19
      %s21 = sshll.u32 [#allocation2], 4
      %s22 = int_to_ptr.vmem [resolvable:$true] %s21
      %27 = dma.hbm_to_vmem [thread:$0]  %s20, 26624, %s22, [#allocation3], 1664, 1664, 104
    $region9: #{_lambda_.1} parent=1 // pred_fallthru
      _
    // Predicated region
    $region10: #{_lambda_.1} parent=1 // pred_check
      _
    $region11: #{_lambda_.1} parent=1 // pred_check_branch
      %29 = sbr.rel (0) target = $region13
    $region12: #{_lambda_.1} parent=1 // pred_region
      %31 = vsyncadd [#allocation5], 0
      %s32 = sshll.u32 %s2, 4
      %s33 = int_to_ptr.hbm [resolvable:$true] %s32
      %s34 = sshll.u32 [#allocation4], 4
      %s35 = int_to_ptr.vmem [resolvable:$true] %s34
      %40 = dma.hbm_to_vmem [thread:$0]  %s33, 14336, %s35, [#allocation5], 448, 448, 28
    $region13: #{_lambda_.1} parent=1 // pred_fallthru
      _
    // Predicated region
    $region14: #{_lambda_.1} parent=1 // pred_check
      _
    $region15: #{_lambda_.1} parent=1 // pred_check_branch
      %42 = sbr.rel (0) target = $region17
    $region16: #{_lambda_.1} parent=1 // pred_region
      %44 = vsyncadd [#allocation5], 0
      %s45 = sshll.u32 %s3, 4
      %s46 = int_to_ptr.hbm [resolvable:$true] %s45
      %s47 = sshll.u32 [#allocation6], 4
      %s48 = int_to_ptr.vmem [resolvable:$true] %s47
      %53 = dma.hbm_to_vmem [thread:$0]  %s46, 18432, %s48, [#allocation5], 384, 384, 24
    $region17: #{_lambda_.1} parent=1 // pred_fallthru
      _
    // Predicated region
    $region18: #{_lambda_.1} parent=1 // pred_check
      _
    $region19: #{_lambda_.1} parent=1 // pred_check_branch
      %55 = sbr.rel (0) target = $region21
    $region20: #{_lambda_.1} parent=1 // pred_region
      %57 = vsyncadd [#allocation8], 0
      %s59 = sshll.u32 %s4, 4
      %s60 = int_to_ptr.hbm [resolvable:$true] %s59
      %s61 = sshll.u32 [#allocation7], 4
      %s62 = int_to_ptr.vmem [resolvable:$true] %s61
      %64 = dma.hbm_to_vmem [thread:$0]  %s60, 3584, %s62, [#allocation8]
    $region21: #{_lambda_.1} parent=1 // pred_fallthru
      _
    // Predicated region
    $region22: #{_lambda_.1} parent=1 // pred_check
      _
    $region23: #{_lambda_.1} parent=1 // pred_check_branch
      %66 = sbr.rel (0) target = $region25
    $region24: #{_lambda_.1} parent=1 // pred_region
      %68 = dma.done [#allocation3], 26624
    $region25: #{_lambda_.1} parent=1 // pred_fallthru
      _
    // Predicated region
    $region26: #{_lambda_.1} parent=1 // pred_check
      _
    $region27: #{_lambda_.1} parent=1 // pred_check_branch
      %70 = sbr.rel (0) target = $region29
    $region28: #{_lambda_.1} parent=1 // pred_region
      %72 = dma.done [#allocation5], 14336
    $region29: #{_lambda_.1} parent=1 // pred_fallthru
      _
    // Predicated region
    $region30: #{_lambda_.1} parent=1 // pred_check
      _
    $region31: #{_lambda_.1} parent=1 // pred_check_branch
      %74 = sbr.rel (0) target = $region33
    $region32: #{_lambda_.1} parent=1 // pred_region
      %76 = dma.done [#allocation5], 18432
    $region33: #{_lambda_.1} parent=1 // pred_fallthru
      _
    // Predicated region
    $region34: #{_lambda_.1} parent=1 // pred_check
      _
    $region35: #{_lambda_.1} parent=1 // pred_check_branch
      %78 = sbr.rel (0) target = $region37
    $region36: #{_lambda_.1} parent=1 // pred_region
      %80 = dma.done [#allocation8], 3584
    $region37: #{_lambda_.1} parent=1 // pred_fallthru
      _
    %v81 = vld [vmem:[%s0] sm:$0xff]
    %v82 = vld [vmem:[%s0 + $0x8] sm:$0xff]
    %v83 = vld [vmem:[%s0 + $0x10] sm:$0xff]
    %v84 = vld [vmem:[%s0 + $0x18] sm:$0xff]
    %v85 = vld [vmem:[%s0 + $0x20] sm:$0xff]
    %v86 = vld [vmem:[#allocation2] sm:$0xff]
    %v87 = vld [vmem:[#allocation2 + $0x8] sm:$0xff]
    %v88 = vld [vmem:[#allocation2 + $0x10] sm:$0xf]
    %v89 = vld [vmem:[#allocation2 + $0x68] sm:$0xff]
    %v90 = vld [vmem:[#allocation2 + $0x70] sm:$0xff]
    %v91 = vld [vmem:[#allocation2 + $0x78] sm:$0xf]
    %v92 = vld [vmem:[#allocation2 + $0xd0] sm:$0xff]
    %v93 = vld [vmem:[#allocation2 + $0xd8] sm:$0xff]
    %v94 = vld [vmem:[#allocation2 + $0xe0] sm:$0xf]
    %v95 = vld [vmem:[#allocation2 + $0x138] sm:$0xff]
    %v96 = vld [vmem:[#allocation2 + $0x140] sm:$0xff]
    %v97 = vld [vmem:[#allocation2 + $0x148] sm:$0xf]
    %v98 = vld [vmem:[#allocation2 + $0x1a0] sm:$0xff]
    %v99 = vld [vmem:[#allocation2 + $0x1a8] sm:$0xff]
    %v100 = vld [vmem:[#allocation2 + $0x1b0] sm:$0xf]
    %v101 = vld [vmem:[#allocation2 + $0x208] sm:$0xff]
    %v102 = vld [vmem:[#allocation2 + $0x210] sm:$0xff]
    %v103 = vld [vmem:[#allocation2 + $0x218] sm:$0xf]
    %v104 = vld [vmem:[#allocation2 + $0x270] sm:$0xff]
    %v105 = vld [vmem:[#allocation2 + $0x278] sm:$0xff]
    %v106 = vld [vmem:[#allocation2 + $0x280] sm:$0xf]
    %v107 = vld [vmem:[#allocation2 + $0x2d8] sm:$0xff]
    %v108 = vld [vmem:[#allocation2 + $0x2e0] sm:$0xff]
    %v109 = vld [vmem:[#allocation2 + $0x2e8] sm:$0xf]
    %v110 = vld [vmem:[#allocation2 + $0x340] sm:$0xff]
    %v111 = vld [vmem:[#allocation2 + $0x348] sm:$0xff]
    %v112 = vld [vmem:[#allocation2 + $0x350] sm:$0xf]
    %v113 = vld [vmem:[#allocation2 + $0x3a8] sm:$0xff]
    %v114 = vld [vmem:[#allocation2 + $0x3b0] sm:$0xff]
    %v115 = vld [vmem:[#allocation2 + $0x3b8] sm:$0xf]
    %v116 = vld [vmem:[#allocation2 + $0x410] sm:$0xff]
    %v117 = vld [vmem:[#allocation2 + $0x418] sm:$0xff]
    %v118 = vld [vmem:[#allocation2 + $0x420] sm:$0xf]
    %v119 = vld [vmem:[#allocation2 + $0x478] sm:$0xff]
    %v120 = vld [vmem:[#allocation2 + $0x480] sm:$0xff]
    %v121 = vld [vmem:[#allocation2 + $0x488] sm:$0xf]
    %v122 = vld [vmem:[#allocation2 + $0x4e0] sm:$0xff]
    %v123 = vld [vmem:[#allocation2 + $0x4e8] sm:$0xff]
    %v124 = vld [vmem:[#allocation2 + $0x4f0] sm:$0xf]
    %v125 = vld [vmem:[#allocation2 + $0x548] sm:$0xff]
    %v126 = vld [vmem:[#allocation2 + $0x550] sm:$0xff]
    %v127 = vld [vmem:[#allocation2 + $0x558] sm:$0xf]
    %v128 = vld [vmem:[#allocation2 + $0x5b0] sm:$0xff]
    %v129 = vld [vmem:[#allocation2 + $0x5b8] sm:$0xff]
    %v130 = vld [vmem:[#allocation2 + $0x5c0] sm:$0xf]
    %v131 = vld [vmem:[#allocation2 + $0x618] sm:$0xff]
    %v132 = vld [vmem:[#allocation2 + $0x620] sm:$0xff]
    %v133 = vld [vmem:[#allocation2 + $0x628] sm:$0xf]
    %v134 = vunpack.c.l.bf16 %v86
    %v135 = vunpack.c.h.bf16 %v86
    %v136 = vunpack.c.l.bf16 %v87
    %v137 = vunpack.c.h.bf16 %v87
    %v138 = vunpack.c.l.bf16 %v88
    %v139 = vunpack.c.l.bf16 %v89
    %v140 = vunpack.c.h.bf16 %v89
    %v141 = vunpack.c.l.bf16 %v90
    %v142 = vunpack.c.h.bf16 %v90
    %v143 = vunpack.c.l.bf16 %v91
    %v144 = vunpack.c.l.bf16 %v92
    %v145 = vunpack.c.h.bf16 %v92
    %v146 = vunpack.c.l.bf16 %v93
    %v147 = vunpack.c.h.bf16 %v93
    %v148 = vunpack.c.l.bf16 %v94
    %v149 = vunpack.c.l.bf16 %v95
    %v150 = vunpack.c.h.bf16 %v95
    %v151 = vunpack.c.l.bf16 %v96
    %v152 = vunpack.c.h.bf16 %v96
    %v153 = vunpack.c.l.bf16 %v97
    %v154 = vunpack.c.l.bf16 %v98
    %v155 = vunpack.c.h.bf16 %v98
    %v156 = vunpack.c.l.bf16 %v99
    %v157 = vunpack.c.h.bf16 %v99
    %v158 = vunpack.c.l.bf16 %v100
    %v159 = vunpack.c.l.bf16 %v101
    %v160 = vunpack.c.h.bf16 %v101
    %v161 = vunpack.c.l.bf16 %v102
    %v162 = vunpack.c.h.bf16 %v102
    %v163 = vunpack.c.l.bf16 %v103
    %v164 = vunpack.c.l.bf16 %v104
    %v165 = vunpack.c.h.bf16 %v104
    %v166 = vunpack.c.l.bf16 %v105
    %v167 = vunpack.c.h.bf16 %v105
    %v168 = vunpack.c.l.bf16 %v106
    %v169 = vunpack.c.l.bf16 %v107
    %v170 = vunpack.c.h.bf16 %v107
    %v171 = vunpack.c.l.bf16 %v108
    %v172 = vunpack.c.h.bf16 %v108
    %v173 = vunpack.c.l.bf16 %v109
    %v174 = vunpack.c.l.bf16 %v110
    %v175 = vunpack.c.h.bf16 %v110
    %v176 = vunpack.c.l.bf16 %v111
    %v177 = vunpack.c.h.bf16 %v111
    %v178 = vunpack.c.l.bf16 %v112
    %v179 = vunpack.c.l.bf16 %v113
    %v180 = vunpack.c.h.bf16 %v113
    %v181 = vunpack.c.l.bf16 %v114
    %v182 = vunpack.c.h.bf16 %v114
    %v183 = vunpack.c.l.bf16 %v115
    %v184 = vunpack.c.l.bf16 %v116
    %v185 = vunpack.c.h.bf16 %v116
    %v186 = vunpack.c.l.bf16 %v117
    %v187 = vunpack.c.h.bf16 %v117
    %v188 = vunpack.c.l.bf16 %v118
    %v189 = vunpack.c.l.bf16 %v119
    %v190 = vunpack.c.h.bf16 %v119
    %v191 = vunpack.c.l.bf16 %v120
    %v192 = vunpack.c.h.bf16 %v120
    %v193 = vunpack.c.l.bf16 %v121
    %v194 = vunpack.c.l.bf16 %v122
    %v195 = vunpack.c.h.bf16 %v122
    %v196 = vunpack.c.l.bf16 %v123
    %v197 = vunpack.c.h.bf16 %v123
    %v198 = vunpack.c.l.bf16 %v124
    %v199 = vunpack.c.l.bf16 %v125
    %v200 = vunpack.c.h.bf16 %v125
    %v201 = vunpack.c.l.bf16 %v126
    %v202 = vunpack.c.h.bf16 %v126
    %v203 = vunpack.c.l.bf16 %v127
    %v204 = vunpack.c.l.bf16 %v128
    %v205 = vunpack.c.h.bf16 %v128
    %v206 = vunpack.c.l.bf16 %v129
    %v207 = vunpack.c.h.bf16 %v129
    %v208 = vunpack.c.l.bf16 %v130
    %v209 = vunpack.c.l.bf16 %v131
    %v210 = vunpack.c.h.bf16 %v131
    %v211 = vunpack.c.l.bf16 %v132
    %v212 = vunpack.c.h.bf16 %v132
    %v213 = vunpack.c.l.bf16 %v133
    %214 = vmatpush.msra.mxu0 %v209
    %215 = vmatpush.msra.mxu0 %v204
    %216 = vmatpush.msra.mxu0 %v199
    %217 = vmatpush.msra.mxu0 %v194
    %218 = vmatpush.msra.mxu0 %v189
    %219 = vmatpush.msra.mxu0 %v184
    %220 = vmatpush.msra.mxu0 %v179
    %221 = vmatpush.msra.mxu0 %v174
    %222 = vmatpush.msra.mxu0 %v169
    %223 = vmatpush.msra.mxu0 %v164
    %224 = vmatpush.msra.mxu0 %v159
    %225 = vmatpush.msra.mxu0 %v154
    %226 = vmatpush.msra.mxu0 %v149
    %227 = vmatpush.msra.mxu0 %v144
    %228 = vmatpush.msra.mxu0 %v139
    %229 = vmatpush.msra.mxu0 %v134
    %230 = vmatmul.f32.gmra.mxu0 %v81
    %v231 = vpop.f32.mrf.mxu0
    %v232 = vadd.f32 0.0, %v231
    %233 = vdwg.mxu0
    %234 = vmatpush.msra.mxu0 %v210
    %235 = vmatpush.msra.mxu0 %v205
    %236 = vmatpush.msra.mxu0 %v200
    %237 = vmatpush.msra.mxu0 %v195
    %238 = vmatpush.msra.mxu0 %v190
    %239 = vmatpush.msra.mxu0 %v185
    %240 = vmatpush.msra.mxu0 %v180
    %241 = vmatpush.msra.mxu0 %v175
    %242 = vmatpush.msra.mxu0 %v170
    %243 = vmatpush.msra.mxu0 %v165
    %244 = vmatpush.msra.mxu0 %v160
    %245 = vmatpush.msra.mxu0 %v155
    %246 = vmatpush.msra.mxu0 %v150
    %247 = vmatpush.msra.mxu0 %v145
    %248 = vmatpush.msra.mxu0 %v140
    %249 = vmatpush.msra.mxu0 %v135
    %250 = vmatmul.f32.gmra.mxu0 %v81
    %v251 = vpop.f32.mrf.mxu0
    %v252 = vadd.f32 0.0, %v251
    %253 = vdwg.mxu0
    %254 = vmatpush.msra.mxu0 %v211
    %255 = vmatpush.msra.mxu0 %v206
    %256 = vmatpush.msra.mxu0 %v201
    %257 = vmatpush.msra.mxu0 %v196
    %258 = vmatpush.msra.mxu0 %v191
    %259 = vmatpush.msra.mxu0 %v186
    %260 = vmatpush.msra.mxu0 %v181
    %261 = vmatpush.msra.mxu0 %v176
    %262 = vmatpush.msra.mxu0 %v171
    %263 = vmatpush.msra.mxu0 %v166
    %264 = vmatpush.msra.mxu0 %v161
    %265 = vmatpush.msra.mxu0 %v156
    %266 = vmatpush.msra.mxu0 %v151
    %267 = vmatpush.msra.mxu0 %v146
    %268 = vmatpush.msra.mxu0 %v141
    %269 = vmatpush.msra.mxu0 %v136
    %270 = vmatmul.f32.gmra.mxu0 %v81
    %v271 = vpop.f32.mrf.mxu0
    %v272 = vadd.f32 0.0, %v271
    %273 = vdwg.mxu0
    %274 = vmatpush.msra.mxu0 %v212
    %275 = vmatpush.msra.mxu0 %v207
    %276 = vmatpush.msra.mxu0 %v202
    %277 = vmatpush.msra.mxu0 %v197
    %278 = vmatpush.msra.mxu0 %v192
    %279 = vmatpush.msra.mxu0 %v187
    %280 = vmatpush.msra.mxu0 %v182
    %281 = vmatpush.msra.mxu0 %v177
    %282 = vmatpush.msra.mxu0 %v172
    %283 = vmatpush.msra.mxu0 %v167
    %284 = vmatpush.msra.mxu0 %v162
    %285 = vmatpush.msra.mxu0 %v157
    %286 = vmatpush.msra.mxu0 %v152
    %287 = vmatpush.msra.mxu0 %v147
    %288 = vmatpush.msra.mxu0 %v142
    %289 = vmatpush.msra.mxu0 %v137
    %290 = vmatmul.f32.gmra.mxu0 %v81
    %v291 = vpop.f32.mrf.mxu0
    %v292 = vadd.f32 0.0, %v291
    %293 = vdwg.mxu0
    %294 = vmatpush.msra.mxu0 %v213
    %295 = vmatpush.msra.mxu0 %v208
    %296 = vmatpush.msra.mxu0 %v203
    %297 = vmatpush.msra.mxu0 %v198
    %298 = vmatpush.msra.mxu0 %v193
    %299 = vmatpush.msra.mxu0 %v188
    %300 = vmatpush.msra.mxu0 %v183
    %301 = vmatpush.msra.mxu0 %v178
    %302 = vmatpush.msra.mxu0 %v173
    %303 = vmatpush.msra.mxu0 %v168
    %304 = vmatpush.msra.mxu0 %v163
    %305 = vmatpush.msra.mxu0 %v158
    %306 = vmatpush.msra.mxu0 %v153
    %307 = vmatpush.msra.mxu0 %v148
    %308 = vmatpush.msra.mxu0 %v143
    %309 = vmatpush.msra.mxu0 %v138
    %310 = vmatmul.f32.gmra.mxu0 %v81
    %v311 = vpop.f32.mrf.mxu0
    %v312 = vadd.f32 0.0, %v311
    %313 = vdwg.mxu0
    %v314 = vmax.f32 %v232, 0.0
    %v315 = vmax.f32 %v252, 0.0
    %v316 = vld [vmem:[#allocation2 + $0x14] sm:$0xff]
    %v317 = vld [vmem:[#allocation2 + $0x1c] sm:$0xf]
    %v318 = vld [vmem:[#allocation2 + $0x7c] sm:$0xff]
    %v319 = vld [vmem:[#allocation2 + $0x84] sm:$0xf]
    %v320 = vld [vmem:[#allocation2 + $0xe4] sm:$0xff]
    %v321 = vld [vmem:[#allocation2 + $0xec] sm:$0xf]
    %v322 = vld [vmem:[#allocation2 + $0x14c] sm:$0xff]
    %v323 = vld [vmem:[#allocation2 + $0x154] sm:$0xf]
    %v324 = vld [vmem:[#allocation2 + $0x1b4] sm:$0xff]
    %v325 = vld [vmem:[#allocation2 + $0x1bc] sm:$0xf]
    %v326 = vld [vmem:[#allocation2 + $0x21c] sm:$0xff]
    %v327 = vld [vmem:[#allocation2 + $0x224] sm:$0xf]
    %v328 = vld [vmem:[#allocation2 + $0x284] sm:$0xff]
    %v329 = vld [vmem:[#allocation2 + $0x28c] sm:$0xf]
    %v330 = vld [vmem:[#allocation2 + $0x2ec] sm:$0xff]
    %v331 = vld [vmem:[#allocation2 + $0x2f4] sm:$0xf]
    %v332 = vld [vmem:[#allocation2 + $0x354] sm:$0xff]
    %v333 = vld [vmem:[#allocation2 + $0x35c] sm:$0xf]
    %v334 = vld [vmem:[#allocation2 + $0x3bc] sm:$0xff]
    %v335 = vld [vmem:[#allocation2 + $0x3c4] sm:$0xf]
    %v336 = vld [vmem:[#allocation2 + $0x424] sm:$0xff]
    %v337 = vld [vmem:[#allocation2 + $0x42c] sm:$0xf]
    %v338 = vld [vmem:[#allocation2 + $0x48c] sm:$0xff]
    %v339 = vld [vmem:[#allocation2 + $0x494] sm:$0xf]
    %v340 = vld [vmem:[#allocation2 + $0x4f4] sm:$0xff]
    %v341 = vld [vmem:[#allocation2 + $0x4fc] sm:$0xf]
    %v342 = vld [vmem:[#allocation2 + $0x55c] sm:$0xff]
    %v343 = vld [vmem:[#allocation2 + $0x564] sm:$0xf]
    %v344 = vld [vmem:[#allocation2 + $0x5c4] sm:$0xff]
    %v345 = vld [vmem:[#allocation2 + $0x5cc] sm:$0xf]
    %v346 = vld [vmem:[#allocation2 + $0x62c] sm:$0xff]
    %v347 = vld [vmem:[#allocation2 + $0x634] sm:$0xf]
    %v348 = vunpack.c.l.bf16 %v316
    %v349 = vunpack.c.h.bf16 %v316
    %v350 = vunpack.c.l.bf16 %v317
    %v351 = vunpack.c.l.bf16 %v318
    %v352 = vunpack.c.h.bf16 %v318
    %v353 = vunpack.c.l.bf16 %v319
    %v354 = vunpack.c.l.bf16 %v320
    %v355 = vunpack.c.h.bf16 %v320
    %v356 = vunpack.c.l.bf16 %v321
    %v357 = vunpack.c.l.bf16 %v322
    %v358 = vunpack.c.h.bf16 %v322
    %v359 = vunpack.c.l.bf16 %v323
    %v360 = vunpack.c.l.bf16 %v324
    %v361 = vunpack.c.h.bf16 %v324
    %v362 = vunpack.c.l.bf16 %v325
    %v363 = vunpack.c.l.bf16 %v326
    %v364 = vunpack.c.h.bf16 %v326
    %v365 = vunpack.c.l.bf16 %v327
    %v366 = vunpack.c.l.bf16 %v328
    %v367 = vunpack.c.h.bf16 %v328
    %v368 = vunpack.c.l.bf16 %v329
    %v369 = vunpack.c.l.bf16 %v330
    %v370 = vunpack.c.h.bf16 %v330
    %v371 = vunpack.c.l.bf16 %v331
    %v372 = vunpack.c.l.bf16 %v332
    %v373 = vunpack.c.h.bf16 %v332
    %v374 = vunpack.c.l.bf16 %v333
    %v375 = vunpack.c.l.bf16 %v334
    %v376 = vunpack.c.h.bf16 %v334
    %v377 = vunpack.c.l.bf16 %v335
    %v378 = vunpack.c.l.bf16 %v336
    %v379 = vunpack.c.h.bf16 %v336
    %v380 = vunpack.c.l.bf16 %v337
    %v381 = vunpack.c.l.bf16 %v338
    %v382 = vunpack.c.h.bf16 %v338
    %v383 = vunpack.c.l.bf16 %v339
    %v384 = vunpack.c.l.bf16 %v340
    %v385 = vunpack.c.h.bf16 %v340
    %v386 = vunpack.c.l.bf16 %v341
    %v387 = vunpack.c.l.bf16 %v342
    %v388 = vunpack.c.h.bf16 %v342
    %v389 = vunpack.c.l.bf16 %v343
    %v390 = vunpack.c.l.bf16 %v344
    %v391 = vunpack.c.h.bf16 %v344
    %v392 = vunpack.c.l.bf16 %v345
    %v393 = vunpack.c.l.bf16 %v346
    %v394 = vunpack.c.h.bf16 %v346
    %v395 = vunpack.c.l.bf16 %v347
    %v396 = vld [vmem:[#allocation7] sm:$0xff]
    %v397 = vld [vmem:[#allocation7 + $0x8] sm:$0xff]
    %v398 = vld [vmem:[#allocation7 + $0x10] sm:$0xff]
    %399 = vmatpush.msra.mxu0 %v393
    %400 = vmatpush.msra.mxu0 %v390
    %401 = vmatpush.msra.mxu0 %v387
    %402 = vmatpush.msra.mxu0 %v384
    %403 = vmatpush.msra.mxu0 %v381
    %404 = vmatpush.msra.mxu0 %v378
    %405 = vmatpush.msra.mxu0 %v375
    %406 = vmatpush.msra.mxu0 %v372
    %407 = vmatpush.msra.mxu0 %v369
    %408 = vmatpush.msra.mxu0 %v366
    %409 = vmatpush.msra.mxu0 %v363
    %410 = vmatpush.msra.mxu0 %v360
    %411 = vmatpush.msra.mxu0 %v357
    %412 = vmatpush.msra.mxu0 %v354
    %413 = vmatpush.msra.mxu0 %v351
    %414 = vmatpush.msra.mxu0 %v348
    %415 = vmatmul.f32.gmra.mxu0 %v314
    %v416 = vpop.f32.mrf.mxu0
    %v417 = vadd.f32 %v396, %v416
    %418 = vdwg.mxu0
    %419 = vmatpush.msra.mxu0 %v394
    %420 = vmatpush.msra.mxu0 %v391
    %421 = vmatpush.msra.mxu0 %v388
    %422 = vmatpush.msra.mxu0 %v385
    %423 = vmatpush.msra.mxu0 %v382
    %424 = vmatpush.msra.mxu0 %v379
    %425 = vmatpush.msra.mxu0 %v376
    %426 = vmatpush.msra.mxu0 %v373
    %427 = vmatpush.msra.mxu0 %v370
    %428 = vmatpush.msra.mxu0 %v367
    %429 = vmatpush.msra.mxu0 %v364
    %430 = vmatpush.msra.mxu0 %v361
    %431 = vmatpush.msra.mxu0 %v358
    %432 = vmatpush.msra.mxu0 %v355
    %433 = vmatpush.msra.mxu0 %v352
    %434 = vmatpush.msra.mxu0 %v349
    %435 = vmatmul.f32.gmra.mxu0 %v314
    %v436 = vpop.f32.mrf.mxu0
    %v437 = vadd.f32 %v397, %v436
    %438 = vdwg.mxu0
    %439 = vmatpush.msra.mxu0 %v395
    %440 = vmatpush.msra.mxu0 %v392
    %441 = vmatpush.msra.mxu0 %v389
    %442 = vmatpush.msra.mxu0 %v386
    %443 = vmatpush.msra.mxu0 %v383
    %444 = vmatpush.msra.mxu0 %v380
    %445 = vmatpush.msra.mxu0 %v377
    %446 = vmatpush.msra.mxu0 %v374
    %447 = vmatpush.msra.mxu0 %v371
    %448 = vmatpush.msra.mxu0 %v368
    %449 = vmatpush.msra.mxu0 %v365
    %450 = vmatpush.msra.mxu0 %v362
    %451 = vmatpush.msra.mxu0 %v359
    %452 = vmatpush.msra.mxu0 %v356
    %453 = vmatpush.msra.mxu0 %v353
    %454 = vmatpush.msra.mxu0 %v350
    %455 = vmatmul.f32.gmra.mxu0 %v314
    %v456 = vpop.f32.mrf.mxu0
    %v457 = vadd.f32 %v398, %v456
    %458 = vdwg.mxu0
    %v459 = vld [vmem:[#allocation2 + $0x20] sm:$0xff]
    %v460 = vld [vmem:[#allocation2 + $0x28] sm:$0xf]
    %v461 = vld [vmem:[#allocation2 + $0x88] sm:$0xff]
    %v462 = vld [vmem:[#allocation2 + $0x90] sm:$0xf]
    %v463 = vld [vmem:[#allocation2 + $0xf0] sm:$0xff]
    %v464 = vld [vmem:[#allocation2 + $0xf8] sm:$0xf]
    %v465 = vld [vmem:[#allocation2 + $0x158] sm:$0xff]
    %v466 = vld [vmem:[#allocation2 + $0x160] sm:$0xf]
    %v467 = vld [vmem:[#allocation2 + $0x1c0] sm:$0xff]
    %v468 = vld [vmem:[#allocation2 + $0x1c8] sm:$0xf]
    %v469 = vld [vmem:[#allocation2 + $0x228] sm:$0xff]
    %v470 = vld [vmem:[#allocation2 + $0x230] sm:$0xf]
    %v471 = vld [vmem:[#allocation2 + $0x290] sm:$0xff]
    %v472 = vld [vmem:[#allocation2 + $0x298] sm:$0xf]
    %v473 = vld [vmem:[#allocation2 + $0x2f8] sm:$0xff]
    %v474 = vld [vmem:[#allocation2 + $0x300] sm:$0xf]
    %v475 = vld [vmem:[#allocation2 + $0x360] sm:$0xff]
    %v476 = vld [vmem:[#allocation2 + $0x368] sm:$0xf]
    %v477 = vld [vmem:[#allocation2 + $0x3c8] sm:$0xff]
    %v478 = vld [vmem:[#allocation2 + $0x3d0] sm:$0xf]
    %v479 = vld [vmem:[#allocation2 + $0x430] sm:$0xff]
    %v480 = vld [vmem:[#allocation2 + $0x438] sm:$0xf]
    %v481 = vld [vmem:[#allocation2 + $0x498] sm:$0xff]
    %v482 = vld [vmem:[#allocation2 + $0x4a0] sm:$0xf]
    %v483 = vld [vmem:[#allocation2 + $0x500] sm:$0xff]
    %v484 = vld [vmem:[#allocation2 + $0x508] sm:$0xf]
    %v485 = vld [vmem:[#allocation2 + $0x568] sm:$0xff]
    %v486 = vld [vmem:[#allocation2 + $0x570] sm:$0xf]
    %v487 = vld [vmem:[#allocation2 + $0x5d0] sm:$0xff]
    %v488 = vld [vmem:[#allocation2 + $0x5d8] sm:$0xf]
    %v489 = vld [vmem:[#allocation2 + $0x638] sm:$0xff]
    %v490 = vld [vmem:[#allocation2 + $0x640] sm:$0xf]
    %v491 = vunpack.c.l.bf16 %v459
    %v492 = vunpack.c.h.bf16 %v459
    %v493 = vunpack.c.l.bf16 %v460
    %v494 = vunpack.c.l.bf16 %v461
    %v495 = vunpack.c.h.bf16 %v461
    %v496 = vunpack.c.l.bf16 %v462
    %v497 = vunpack.c.l.bf16 %v463
    %v498 = vunpack.c.h.bf16 %v463
    %v499 = vunpack.c.l.bf16 %v464
    %v500 = vunpack.c.l.bf16 %v465
    %v501 = vunpack.c.h.bf16 %v465
    %v502 = vunpack.c.l.bf16 %v466
    %v503 = vunpack.c.l.bf16 %v467
    %v504 = vunpack.c.h.bf16 %v467
    %v505 = vunpack.c.l.bf16 %v468
    %v506 = vunpack.c.l.bf16 %v469
    %v507 = vunpack.c.h.bf16 %v469
    %v508 = vunpack.c.l.bf16 %v470
    %v509 = vunpack.c.l.bf16 %v471
    %v510 = vunpack.c.h.bf16 %v471
    %v511 = vunpack.c.l.bf16 %v472
    %v512 = vunpack.c.l.bf16 %v473
    %v513 = vunpack.c.h.bf16 %v473
    %v514 = vunpack.c.l.bf16 %v474
    %v515 = vunpack.c.l.bf16 %v475
    %v516 = vunpack.c.h.bf16 %v475
    %v517 = vunpack.c.l.bf16 %v476
    %v518 = vunpack.c.l.bf16 %v477
    %v519 = vunpack.c.h.bf16 %v477
    %v520 = vunpack.c.l.bf16 %v478
    %v521 = vunpack.c.l.bf16 %v479
    %v522 = vunpack.c.h.bf16 %v479
    %v523 = vunpack.c.l.bf16 %v480
    %v524 = vunpack.c.l.bf16 %v481
    %v525 = vunpack.c.h.bf16 %v481
    %v526 = vunpack.c.l.bf16 %v482
    %v527 = vunpack.c.l.bf16 %v483
    %v528 = vunpack.c.h.bf16 %v483
    %v529 = vunpack.c.l.bf16 %v484
    %v530 = vunpack.c.l.bf16 %v485
    %v531 = vunpack.c.h.bf16 %v485
    %v532 = vunpack.c.l.bf16 %v486
    %v533 = vunpack.c.l.bf16 %v487
    %v534 = vunpack.c.h.bf16 %v487
    %v535 = vunpack.c.l.bf16 %v488
    %v536 = vunpack.c.l.bf16 %v489
    %v537 = vunpack.c.h.bf16 %v489
    %v538 = vunpack.c.l.bf16 %v490
    %v539 = vld [vmem:[#allocation7 + $0x18] sm:$0xff]
    %v540 = vld [vmem:[#allocation7 + $0x20] sm:$0xff]
    %v541 = vld [vmem:[#allocation7 + $0x28] sm:$0xff]
    %542 = vmatpush.msra.mxu0 %v536
    %543 = vmatpush.msra.mxu0 %v533
    %544 = vmatpush.msra.mxu0 %v530
    %545 = vmatpush.msra.mxu0 %v527
    %546 = vmatpush.msra.mxu0 %v524
    %547 = vmatpush.msra.mxu0 %v521
    %548 = vmatpush.msra.mxu0 %v518
    %549 = vmatpush.msra.mxu0 %v515
    %550 = vmatpush.msra.mxu0 %v512
    %551 = vmatpush.msra.mxu0 %v509
    %552 = vmatpush.msra.mxu0 %v506
    %553 = vmatpush.msra.mxu0 %v503
    %554 = vmatpush.msra.mxu0 %v500
    %555 = vmatpush.msra.mxu0 %v497
    %556 = vmatpush.msra.mxu0 %v494
    %557 = vmatpush.msra.mxu0 %v491
    %558 = vmatmul.f32.gmra.mxu0 %v82
    %v559 = vpop.f32.mrf.mxu0
    %v560 = vadd.f32 %v539, %v559
    %561 = vdwg.mxu0
    %562 = vmatpush.msra.mxu0 %v537
    %563 = vmatpush.msra.mxu0 %v534
    %564 = vmatpush.msra.mxu0 %v531
    %565 = vmatpush.msra.mxu0 %v528
    %566 = vmatpush.msra.mxu0 %v525
    %567 = vmatpush.msra.mxu0 %v522
    %568 = vmatpush.msra.mxu0 %v519
    %569 = vmatpush.msra.mxu0 %v516
    %570 = vmatpush.msra.mxu0 %v513
    %571 = vmatpush.msra.mxu0 %v510
    %572 = vmatpush.msra.mxu0 %v507
    %573 = vmatpush.msra.mxu0 %v504
    %574 = vmatpush.msra.mxu0 %v501
    %575 = vmatpush.msra.mxu0 %v498
    %576 = vmatpush.msra.mxu0 %v495
    %577 = vmatpush.msra.mxu0 %v492
    %578 = vmatmul.f32.gmra.mxu0 %v82
    %v579 = vpop.f32.mrf.mxu0
    %v580 = vadd.f32 %v540, %v579
    %581 = vdwg.mxu0
    %582 = vmatpush.msra.mxu0 %v538
    %583 = vmatpush.msra.mxu0 %v535
    %584 = vmatpush.msra.mxu0 %v532
    %585 = vmatpush.msra.mxu0 %v529
    %586 = vmatpush.msra.mxu0 %v526
    %587 = vmatpush.msra.mxu0 %v523
    %588 = vmatpush.msra.mxu0 %v520
    %589 = vmatpush.msra.mxu0 %v517
    %590 = vmatpush.msra.mxu0 %v514
    %591 = vmatpush.msra.mxu0 %v511
    %592 = vmatpush.msra.mxu0 %v508
    %593 = vmatpush.msra.mxu0 %v505
    %594 = vmatpush.msra.mxu0 %v502
    %595 = vmatpush.msra.mxu0 %v499
    %596 = vmatpush.msra.mxu0 %v496
    %597 = vmatpush.msra.mxu0 %v493
    %598 = vmatmul.f32.gmra.mxu0 %v82
    %v599 = vpop.f32.mrf.mxu0
    %v600 = vadd.f32 %v541, %v599
    %601 = vdwg.mxu0
    %v602 = vadd.f32 %v417, %v560
    %v603 = vxor.u32 %v602, 2147483648
    %v604 = vmul.f32 %v603, 1.442695
    %v605 = vpow.pop %v604
    %v606 = vadd.f32 %v605, 1.0
    %v607 = vrcp.pop %v606
    %v608 = vmul.f32 %v606, %v607
    %v609 = vsub.f32 1.0, %v608
    %v610 = vmul.f32 %v607, %v609
    %v611 = vadd.f32 %v607, %v610
    %vm612 = vweird.f32 %v606
    %vm613 = vweird.f32 %v607
    %vm614 = vmor %vm612, %vm613
    %v615 = vsel %vm614, %v607, %v611
    %v616 = vand.u32 2147483647, %v606
    %vm617 = vcmp.eq.f32.partialorder %v616, 8.507059e+37
    %v618 = vand.u32 %v606, 2147483648
    %v619 = vor.u32 1.1754944e-38, %v618
    %v620 = vsel %vm617, %v619, %v615
    %v621 = vmul.f32 1.0, %v620
    %v622 = vadd.f32 %v437, %v580
    %v623 = vxor.u32 %v622, 2147483648
    %v624 = vmul.f32 %v623, 1.442695
    %v625 = vpow.pop %v624
    %v626 = vadd.f32 %v625, 1.0
    %v627 = vrcp.pop %v626
    %v628 = vmul.f32 %v626, %v627
    %v629 = vsub.f32 1.0, %v628
    %v630 = vmul.f32 %v627, %v629
    %v631 = vadd.f32 %v627, %v630
    %vm632 = vweird.f32 %v626
    %vm633 = vweird.f32 %v627
    %vm634 = vmor %vm632, %vm633
    %v635 = vsel %vm634, %v627, %v631
    %v636 = vand.u32 2147483647, %v626
    %vm637 = vcmp.eq.f32.partialorder %v636, 8.507059e+37
    %v638 = vand.u32 %v626, 2147483648
    %v639 = vor.u32 1.1754944e-38, %v638
    %v640 = vsel %vm637, %v639, %v635
    %v641 = vmul.f32 1.0, %v640
    %v642 = vmul.f32 %v621, %v600
    %v643 = vadd.f32 %v457, %v642
    %v644 = vtanh.pop %v643
    %v645 = vsub.f32 1.0, %v641
    %v646 = vmul.f32 %v645, %v644
    %v647 = vmul.f32 %v641, %v82
    %v648 = vadd.f32 %v646, %v647
    %v649 = vld [vmem:[#allocation2 + $0x2c] sm:$0xff]
    %v650 = vld [vmem:[#allocation2 + $0x34] sm:$0xf]
    %v651 = vld [vmem:[#allocation2 + $0x94] sm:$0xff]
    %v652 = vld [vmem:[#allocation2 + $0x9c] sm:$0xf]
    %v653 = vld [vmem:[#allocation2 + $0xfc] sm:$0xff]
    %v654 = vld [vmem:[#allocation2 + $0x104] sm:$0xf]
    %v655 = vld [vmem:[#allocation2 + $0x164] sm:$0xff]
    %v656 = vld [vmem:[#allocation2 + $0x16c] sm:$0xf]
    %v657 = vld [vmem:[#allocation2 + $0x1cc] sm:$0xff]
    %v658 = vld [vmem:[#allocation2 + $0x1d4] sm:$0xf]
    %v659 = vld [vmem:[#allocation2 + $0x234] sm:$0xff]
    %v660 = vld [vmem:[#allocation2 + $0x23c] sm:$0xf]
    %v661 = vld [vmem:[#allocation2 + $0x29c] sm:$0xff]
    %v662 = vld [vmem:[#allocation2 + $0x2a4] sm:$0xf]
    %v663 = vld [vmem:[#allocation2 + $0x304] sm:$0xff]
    %v664 = vld [vmem:[#allocation2 + $0x30c] sm:$0xf]
    %v665 = vld [vmem:[#allocation2 + $0x36c] sm:$0xff]
    %v666 = vld [vmem:[#allocation2 + $0x374] sm:$0xf]
    %v667 = vld [vmem:[#allocation2 + $0x3d4] sm:$0xff]
    %v668 = vld [vmem:[#allocation2 + $0x3dc] sm:$0xf]
    %v669 = vld [vmem:[#allocation2 + $0x43c] sm:$0xff]
    %v670 = vld [vmem:[#allocation2 + $0x444] sm:$0xf]
    %v671 = vld [vmem:[#allocation2 + $0x4a4] sm:$0xff]
    %v672 = vld [vmem:[#allocation2 + $0x4ac] sm:$0xf]
    %v673 = vld [vmem:[#allocation2 + $0x50c] sm:$0xff]
    %v674 = vld [vmem:[#allocation2 + $0x514] sm:$0xf]
    %v675 = vld [vmem:[#allocation2 + $0x574] sm:$0xff]
    %v676 = vld [vmem:[#allocation2 + $0x57c] sm:$0xf]
    %v677 = vld [vmem:[#allocation2 + $0x5dc] sm:$0xff]
    %v678 = vld [vmem:[#allocation2 + $0x5e4] sm:$0xf]
    %v679 = vld [vmem:[#allocation2 + $0x644] sm:$0xff]
    %v680 = vld [vmem:[#allocation2 + $0x64c] sm:$0xf]
    %v681 = vunpack.c.l.bf16 %v649
    %v682 = vunpack.c.h.bf16 %v649
    %v683 = vunpack.c.l.bf16 %v650
    %v684 = vunpack.c.l.bf16 %v651
    %v685 = vunpack.c.h.bf16 %v651
    %v686 = vunpack.c.l.bf16 %v652
    %v687 = vunpack.c.l.bf16 %v653
    %v688 = vunpack.c.h.bf16 %v653
    %v689 = vunpack.c.l.bf16 %v654
    %v690 = vunpack.c.l.bf16 %v655
    %v691 = vunpack.c.h.bf16 %v655
    %v692 = vunpack.c.l.bf16 %v656
    %v693 = vunpack.c.l.bf16 %v657
    %v694 = vunpack.c.h.bf16 %v657
    %v695 = vunpack.c.l.bf16 %v658
    %v696 = vunpack.c.l.bf16 %v659
    %v697 = vunpack.c.h.bf16 %v659
    %v698 = vunpack.c.l.bf16 %v660
    %v699 = vunpack.c.l.bf16 %v661
    %v700 = vunpack.c.h.bf16 %v661
    %v701 = vunpack.c.l.bf16 %v662
    %v702 = vunpack.c.l.bf16 %v663
    %v703 = vunpack.c.h.bf16 %v663
    %v704 = vunpack.c.l.bf16 %v664
    %v705 = vunpack.c.l.bf16 %v665
    %v706 = vunpack.c.h.bf16 %v665
    %v707 = vunpack.c.l.bf16 %v666
    %v708 = vunpack.c.l.bf16 %v667
    %v709 = vunpack.c.h.bf16 %v667
    %v710 = vunpack.c.l.bf16 %v668
    %v711 = vunpack.c.l.bf16 %v669
    %v712 = vunpack.c.h.bf16 %v669
    %v713 = vunpack.c.l.bf16 %v670
    %v714 = vunpack.c.l.bf16 %v671
    %v715 = vunpack.c.h.bf16 %v671
    %v716 = vunpack.c.l.bf16 %v672
    %v717 = vunpack.c.l.bf16 %v673
    %v718 = vunpack.c.h.bf16 %v673
    %v719 = vunpack.c.l.bf16 %v674
    %v720 = vunpack.c.l.bf16 %v675
    %v721 = vunpack.c.h.bf16 %v675
    %v722 = vunpack.c.l.bf16 %v676
    %v723 = vunpack.c.l.bf16 %v677
    %v724 = vunpack.c.h.bf16 %v677
    %v725 = vunpack.c.l.bf16 %v678
    %v726 = vunpack.c.l.bf16 %v679
    %v727 = vunpack.c.h.bf16 %v679
    %v728 = vunpack.c.l.bf16 %v680
    %v729 = vld [vmem:[#allocation2 + $0x38] sm:$0xff]
    %v730 = vld [vmem:[#allocation2 + $0x40] sm:$0xf]
    %v731 = vld [vmem:[#allocation2 + $0xa0] sm:$0xff]
    %v732 = vld [vmem:[#allocation2 + $0xa8] sm:$0xf]
    %v733 = vld [vmem:[#allocation2 + $0x108] sm:$0xff]
    %v734 = vld [vmem:[#allocation2 + $0x110] sm:$0xf]
    %v735 = vld [vmem:[#allocation2 + $0x170] sm:$0xff]
    %v736 = vld [vmem:[#allocation2 + $0x178] sm:$0xf]
    %v737 = vld [vmem:[#allocation2 + $0x1d8] sm:$0xff]
    %v738 = vld [vmem:[#allocation2 + $0x1e0] sm:$0xf]
    %v739 = vld [vmem:[#allocation2 + $0x240] sm:$0xff]
    %v740 = vld [vmem:[#allocation2 + $0x248] sm:$0xf]
    %v741 = vld [vmem:[#allocation2 + $0x2a8] sm:$0xff]
    %v742 = vld [vmem:[#allocation2 + $0x2b0] sm:$0xf]
    %v743 = vld [vmem:[#allocation2 + $0x310] sm:$0xff]
    %v744 = vld [vmem:[#allocation2 + $0x318] sm:$0xf]
    %v745 = vld [vmem:[#allocation2 + $0x378] sm:$0xff]
    %v746 = vld [vmem:[#allocation2 + $0x380] sm:$0xf]
    %v747 = vld [vmem:[#allocation2 + $0x3e0] sm:$0xff]
    %v748 = vld [vmem:[#allocation2 + $0x3e8] sm:$0xf]
    %v749 = vld [vmem:[#allocation2 + $0x448] sm:$0xff]
    %v750 = vld [vmem:[#allocation2 + $0x450] sm:$0xf]
    %v751 = vld [vmem:[#allocation2 + $0x4b0] sm:$0xff]
    %v752 = vld [vmem:[#allocation2 + $0x4b8] sm:$0xf]
    %v753 = vld [vmem:[#allocation2 + $0x518] sm:$0xff]
    %v754 = vld [vmem:[#allocation2 + $0x520] sm:$0xf]
    %v755 = vld [vmem:[#allocation2 + $0x580] sm:$0xff]
    %v756 = vld [vmem:[#allocation2 + $0x588] sm:$0xf]
    %v757 = vld [vmem:[#allocation2 + $0x5e8] sm:$0xff]
    %v758 = vld [vmem:[#allocation2 + $0x5f0] sm:$0xf]
    %v759 = vld [vmem:[#allocation2 + $0x650] sm:$0xff]
    %v760 = vld [vmem:[#allocation2 + $0x658] sm:$0xf]
    %v761 = vunpack.c.l.bf16 %v729
    %v762 = vunpack.c.h.bf16 %v729
    %v763 = vunpack.c.l.bf16 %v730
    %v764 = vunpack.c.l.bf16 %v731
    %v765 = vunpack.c.h.bf16 %v731
    %v766 = vunpack.c.l.bf16 %v732
    %v767 = vunpack.c.l.bf16 %v733
    %v768 = vunpack.c.h.bf16 %v733
    %v769 = vunpack.c.l.bf16 %v734
    %v770 = vunpack.c.l.bf16 %v735
    %v771 = vunpack.c.h.bf16 %v735
    %v772 = vunpack.c.l.bf16 %v736
    %v773 = vunpack.c.l.bf16 %v737
    %v774 = vunpack.c.h.bf16 %v737
    %v775 = vunpack.c.l.bf16 %v738
    %v776 = vunpack.c.l.bf16 %v739
    %v777 = vunpack.c.h.bf16 %v739
    %v778 = vunpack.c.l.bf16 %v740
    %v779 = vunpack.c.l.bf16 %v741
    %v780 = vunpack.c.h.bf16 %v741
    %v781 = vunpack.c.l.bf16 %v742
    %v782 = vunpack.c.l.bf16 %v743
    %v783 = vunpack.c.h.bf16 %v743
    %v784 = vunpack.c.l.bf16 %v744
    %v785 = vunpack.c.l.bf16 %v745
    %v786 = vunpack.c.h.bf16 %v745
    %v787 = vunpack.c.l.bf16 %v746
    %v788 = vunpack.c.l.bf16 %v747
    %v789 = vunpack.c.h.bf16 %v747
    %v790 = vunpack.c.l.bf16 %v748
    %v791 = vunpack.c.l.bf16 %v749
    %v792 = vunpack.c.h.bf16 %v749
    %v793 = vunpack.c.l.bf16 %v750
    %v794 = vunpack.c.l.bf16 %v751
    %v795 = vunpack.c.h.bf16 %v751
    %v796 = vunpack.c.l.bf16 %v752
    %v797 = vunpack.c.l.bf16 %v753
    %v798 = vunpack.c.h.bf16 %v753
    %v799 = vunpack.c.l.bf16 %v754
    %v800 = vunpack.c.l.bf16 %v755
    %v801 = vunpack.c.h.bf16 %v755
    %v802 = vunpack.c.l.bf16 %v756
    %v803 = vunpack.c.l.bf16 %v757
    %v804 = vunpack.c.h.bf16 %v757
    %v805 = vunpack.c.l.bf16 %v758
    %v806 = vunpack.c.l.bf16 %v759
    %v807 = vunpack.c.h.bf16 %v759
    %v808 = vunpack.c.l.bf16 %v760
    %809 = vmatpush.msra.mxu0 %v806
    %810 = vmatpush.msra.mxu0 %v803
    %811 = vmatpush.msra.mxu0 %v800
    %812 = vmatpush.msra.mxu0 %v797
    %813 = vmatpush.msra.mxu0 %v794
    %814 = vmatpush.msra.mxu0 %v791
    %815 = vmatpush.msra.mxu0 %v788
    %816 = vmatpush.msra.mxu0 %v785
    %817 = vmatpush.msra.mxu0 %v782
    %818 = vmatpush.msra.mxu0 %v779
    %819 = vmatpush.msra.mxu0 %v776
    %820 = vmatpush.msra.mxu0 %v773
    %821 = vmatpush.msra.mxu0 %v770
    %822 = vmatpush.msra.mxu0 %v767
    %823 = vmatpush.msra.mxu0 %v764
    %824 = vmatpush.msra.mxu0 %v761
    %825 = vmatmul.f32.gmra.mxu0 %v648
    %v826 = vpop.f32.mrf.mxu0
    %v827 = vadd.f32 0.0, %v826
    %828 = vdwg.mxu0
    %829 = vmatpush.msra.mxu0 %v807
    %830 = vmatpush.msra.mxu0 %v804
    %831 = vmatpush.msra.mxu0 %v801
    %832 = vmatpush.msra.mxu0 %v798
    %833 = vmatpush.msra.mxu0 %v795
    %834 = vmatpush.msra.mxu0 %v792
    %835 = vmatpush.msra.mxu0 %v789
    %836 = vmatpush.msra.mxu0 %v786
    %837 = vmatpush.msra.mxu0 %v783
    %838 = vmatpush.msra.mxu0 %v780
    %839 = vmatpush.msra.mxu0 %v777
    %840 = vmatpush.msra.mxu0 %v774
    %841 = vmatpush.msra.mxu0 %v771
    %842 = vmatpush.msra.mxu0 %v768
    %843 = vmatpush.msra.mxu0 %v765
    %844 = vmatpush.msra.mxu0 %v762
    %845 = vmatmul.f32.gmra.mxu0 %v648
    %v846 = vpop.f32.mrf.mxu0
    %v847 = vadd.f32 0.0, %v846
    %848 = vdwg.mxu0
    %849 = vmatpush.msra.mxu0 %v808
    %850 = vmatpush.msra.mxu0 %v805
    %851 = vmatpush.msra.mxu0 %v802
    %852 = vmatpush.msra.mxu0 %v799
    %853 = vmatpush.msra.mxu0 %v796
    %854 = vmatpush.msra.mxu0 %v793
    %855 = vmatpush.msra.mxu0 %v790
    %856 = vmatpush.msra.mxu0 %v787
    %857 = vmatpush.msra.mxu0 %v784
    %858 = vmatpush.msra.mxu0 %v781
    %859 = vmatpush.msra.mxu0 %v778
    %860 = vmatpush.msra.mxu0 %v775
    %861 = vmatpush.msra.mxu0 %v772
    %862 = vmatpush.msra.mxu0 %v769
    %863 = vmatpush.msra.mxu0 %v766
    %864 = vmatpush.msra.mxu0 %v763
    %865 = vmatmul.f32.gmra.mxu0 %v648
    %v866 = vpop.f32.mrf.mxu0
    %v867 = vadd.f32 0.0, %v866
    %868 = vdwg.mxu0
    %869 = vmatpush.msra.mxu0 %v726
    %870 = vmatpush.msra.mxu0 %v723
    %871 = vmatpush.msra.mxu0 %v720
    %872 = vmatpush.msra.mxu0 %v717
    %873 = vmatpush.msra.mxu0 %v714
    %874 = vmatpush.msra.mxu0 %v711
    %875 = vmatpush.msra.mxu0 %v708
    %876 = vmatpush.msra.mxu0 %v705
    %877 = vmatpush.msra.mxu0 %v702
    %878 = vmatpush.msra.mxu0 %v699
    %879 = vmatpush.msra.mxu0 %v696
    %880 = vmatpush.msra.mxu0 %v693
    %881 = vmatpush.msra.mxu0 %v690
    %882 = vmatpush.msra.mxu0 %v687
    %883 = vmatpush.msra.mxu0 %v684
    %884 = vmatpush.msra.mxu0 %v681
    %885 = vmatmul.f32.gmra.mxu0 %v315
    %v886 = vpop.f32.mrf.mxu0
    %v887 = vadd.f32 %v827, %v886
    %888 = vdwg.mxu0
    %889 = vmatpush.msra.mxu0 %v727
    %890 = vmatpush.msra.mxu0 %v724
    %891 = vmatpush.msra.mxu0 %v721
    %892 = vmatpush.msra.mxu0 %v718
    %893 = vmatpush.msra.mxu0 %v715
    %894 = vmatpush.msra.mxu0 %v712
    %895 = vmatpush.msra.mxu0 %v709
    %896 = vmatpush.msra.mxu0 %v706
    %897 = vmatpush.msra.mxu0 %v703
    %898 = vmatpush.msra.mxu0 %v700
    %899 = vmatpush.msra.mxu0 %v697
    %900 = vmatpush.msra.mxu0 %v694
    %901 = vmatpush.msra.mxu0 %v691
    %902 = vmatpush.msra.mxu0 %v688
    %903 = vmatpush.msra.mxu0 %v685
    %904 = vmatpush.msra.mxu0 %v682
    %905 = vmatmul.f32.gmra.mxu0 %v315
    %v906 = vpop.f32.mrf.mxu0
    %v907 = vadd.f32 %v847, %v906
    %908 = vdwg.mxu0
    %909 = vmatpush.msra.mxu0 %v728
    %910 = vmatpush.msra.mxu0 %v725
    %911 = vmatpush.msra.mxu0 %v722
    %912 = vmatpush.msra.mxu0 %v719
    %913 = vmatpush.msra.mxu0 %v716
    %914 = vmatpush.msra.mxu0 %v713
    %915 = vmatpush.msra.mxu0 %v710
    %916 = vmatpush.msra.mxu0 %v707
    %917 = vmatpush.msra.mxu0 %v704
    %918 = vmatpush.msra.mxu0 %v701
    %919 = vmatpush.msra.mxu0 %v698
    %920 = vmatpush.msra.mxu0 %v695
    %921 = vmatpush.msra.mxu0 %v692
    %922 = vmatpush.msra.mxu0 %v689
    %923 = vmatpush.msra.mxu0 %v686
    %924 = vmatpush.msra.mxu0 %v683
    %925 = vmatmul.f32.gmra.mxu0 %v315
    %v926 = vpop.f32.mrf.mxu0
    %v927 = vadd.f32 %v867, %v926
    %928 = vdwg.mxu0
    %v929 = vld [vmem:[#allocation7 + $0x30] sm:$0xff]
    %v930 = vld [vmem:[#allocation7 + $0x38] sm:$0xff]
    %v931 = vld [vmem:[#allocation7 + $0x40] sm:$0xff]
    %v932 = vadd.f32 %v887, %v929
    %v933 = vadd.f32 %v907, %v930
    %v934 = vadd.f32 %v927, %v931
    %v935 = vld [vmem:[#allocation2 + $0x44] sm:$0xff]
    %v936 = vld [vmem:[#allocation2 + $0x4c] sm:$0xf]
    %v937 = vld [vmem:[#allocation2 + $0xac] sm:$0xff]
    %v938 = vld [vmem:[#allocation2 + $0xb4] sm:$0xf]
    %v939 = vld [vmem:[#allocation2 + $0x114] sm:$0xff]
    %v940 = vld [vmem:[#allocation2 + $0x11c] sm:$0xf]
    %v941 = vld [vmem:[#allocation2 + $0x17c] sm:$0xff]
    %v942 = vld [vmem:[#allocation2 + $0x184] sm:$0xf]
    %v943 = vld [vmem:[#allocation2 + $0x1e4] sm:$0xff]
    %v944 = vld [vmem:[#allocation2 + $0x1ec] sm:$0xf]
    %v945 = vld [vmem:[#allocation2 + $0x24c] sm:$0xff]
    %v946 = vld [vmem:[#allocation2 + $0x254] sm:$0xf]
    %v947 = vld [vmem:[#allocation2 + $0x2b4] sm:$0xff]
    %v948 = vld [vmem:[#allocation2 + $0x2bc] sm:$0xf]
    %v949 = vld [vmem:[#allocation2 + $0x31c] sm:$0xff]
    %v950 = vld [vmem:[#allocation2 + $0x324] sm:$0xf]
    %v951 = vld [vmem:[#allocation2 + $0x384] sm:$0xff]
    %v952 = vld [vmem:[#allocation2 + $0x38c] sm:$0xf]
    %v953 = vld [vmem:[#allocation2 + $0x3ec] sm:$0xff]
    %v954 = vld [vmem:[#allocation2 + $0x3f4] sm:$0xf]
    %v955 = vld [vmem:[#allocation2 + $0x454] sm:$0xff]
    %v956 = vld [vmem:[#allocation2 + $0x45c] sm:$0xf]
    %v957 = vld [vmem:[#allocation2 + $0x4bc] sm:$0xff]
    %v958 = vld [vmem:[#allocation2 + $0x4c4] sm:$0xf]
    %v959 = vld [vmem:[#allocation2 + $0x524] sm:$0xff]
    %v960 = vld [vmem:[#allocation2 + $0x52c] sm:$0xf]
    %v961 = vld [vmem:[#allocation2 + $0x58c] sm:$0xff]
    %v962 = vld [vmem:[#allocation2 + $0x594] sm:$0xf]
    %v963 = vld [vmem:[#allocation2 + $0x5f4] sm:$0xff]
    %v964 = vld [vmem:[#allocation2 + $0x5fc] sm:$0xf]
    %v965 = vld [vmem:[#allocation2 + $0x65c] sm:$0xff]
    %v966 = vld [vmem:[#allocation2 + $0x664] sm:$0xf]
    %v967 = vunpack.c.l.bf16 %v935
    %v968 = vunpack.c.h.bf16 %v935
    %v969 = vunpack.c.l.bf16 %v936
    %v970 = vunpack.c.l.bf16 %v937
    %v971 = vunpack.c.h.bf16 %v937
    %v972 = vunpack.c.l.bf16 %v938
    %v973 = vunpack.c.l.bf16 %v939
    %v974 = vunpack.c.h.bf16 %v939
    %v975 = vunpack.c.l.bf16 %v940
    %v976 = vunpack.c.l.bf16 %v941
    %v977 = vunpack.c.h.bf16 %v941
    %v978 = vunpack.c.l.bf16 %v942
    %v979 = vunpack.c.l.bf16 %v943
    %v980 = vunpack.c.h.bf16 %v943
    %v981 = vunpack.c.l.bf16 %v944
    %v982 = vunpack.c.l.bf16 %v945
    %v983 = vunpack.c.h.bf16 %v945
    %v984 = vunpack.c.l.bf16 %v946
    %v985 = vunpack.c.l.bf16 %v947
    %v986 = vunpack.c.h.bf16 %v947
    %v987 = vunpack.c.l.bf16 %v948
    %v988 = vunpack.c.l.bf16 %v949
    %v989 = vunpack.c.h.bf16 %v949
    %v990 = vunpack.c.l.bf16 %v950
    %v991 = vunpack.c.l.bf16 %v951
    %v992 = vunpack.c.h.bf16 %v951
    %v993 = vunpack.c.l.bf16 %v952
    %v994 = vunpack.c.l.bf16 %v953
    %v995 = vunpack.c.h.bf16 %v953
    %v996 = vunpack.c.l.bf16 %v954
    %v997 = vunpack.c.l.bf16 %v955
    %v998 = vunpack.c.h.bf16 %v955
    %v999 = vunpack.c.l.bf16 %v956
    %v1000 = vunpack.c.l.bf16 %v957
    %v1001 = vunpack.c.h.bf16 %v957
    %v1002 = vunpack.c.l.bf16 %v958
    %v1003 = vunpack.c.l.bf16 %v959
    %v1004 = vunpack.c.h.bf16 %v959
    %v1005 = vunpack.c.l.bf16 %v960
    %v1006 = vunpack.c.l.bf16 %v961
    %v1007 = vunpack.c.h.bf16 %v961
    %v1008 = vunpack.c.l.bf16 %v962
    %v1009 = vunpack.c.l.bf16 %v963
    %v1010 = vunpack.c.h.bf16 %v963
    %v1011 = vunpack.c.l.bf16 %v964
    %v1012 = vunpack.c.l.bf16 %v965
    %v1013 = vunpack.c.h.bf16 %v965
    %v1014 = vunpack.c.l.bf16 %v966
    %v1015 = vld [vmem:[#allocation7 + $0x48] sm:$0xff]
    %v1016 = vld [vmem:[#allocation7 + $0x50] sm:$0xff]
    %v1017 = vld [vmem:[#allocation7 + $0x58] sm:$0xff]
    %1018 = vmatpush.msra.mxu0 %v1012
    %1019 = vmatpush.msra.mxu0 %v1009
    %1020 = vmatpush.msra.mxu0 %v1006
    %1021 = vmatpush.msra.mxu0 %v1003
    %1022 = vmatpush.msra.mxu0 %v1000
    %1023 = vmatpush.msra.mxu0 %v997
    %1024 = vmatpush.msra.mxu0 %v994
    %1025 = vmatpush.msra.mxu0 %v991
    %1026 = vmatpush.msra.mxu0 %v988
    %1027 = vmatpush.msra.mxu0 %v985
    %1028 = vmatpush.msra.mxu0 %v982
    %1029 = vmatpush.msra.mxu0 %v979
    %1030 = vmatpush.msra.mxu0 %v976
    %1031 = vmatpush.msra.mxu0 %v973
    %1032 = vmatpush.msra.mxu0 %v970
    %1033 = vmatpush.msra.mxu0 %v967
    %1034 = vmatmul.f32.gmra.mxu0 %v83
    %v1035 = vpop.f32.mrf.mxu0
    %v1036 = vadd.f32 %v1015, %v1035
    %1037 = vdwg.mxu0
    %1038 = vmatpush.msra.mxu0 %v1013
    %1039 = vmatpush.msra.mxu0 %v1010
    %1040 = vmatpush.msra.mxu0 %v1007
    %1041 = vmatpush.msra.mxu0 %v1004
    %1042 = vmatpush.msra.mxu0 %v1001
    %1043 = vmatpush.msra.mxu0 %v998
    %1044 = vmatpush.msra.mxu0 %v995
    %1045 = vmatpush.msra.mxu0 %v992
    %1046 = vmatpush.msra.mxu0 %v989
    %1047 = vmatpush.msra.mxu0 %v986
    %1048 = vmatpush.msra.mxu0 %v983
    %1049 = vmatpush.msra.mxu0 %v980
    %1050 = vmatpush.msra.mxu0 %v977
    %1051 = vmatpush.msra.mxu0 %v974
    %1052 = vmatpush.msra.mxu0 %v971
    %1053 = vmatpush.msra.mxu0 %v968
    %1054 = vmatmul.f32.gmra.mxu0 %v83
    %v1055 = vpop.f32.mrf.mxu0
    %v1056 = vadd.f32 %v1016, %v1055
    %1057 = vdwg.mxu0
    %1058 = vmatpush.msra.mxu0 %v1014
    %1059 = vmatpush.msra.mxu0 %v1011
    %1060 = vmatpush.msra.mxu0 %v1008
    %1061 = vmatpush.msra.mxu0 %v1005
    %1062 = vmatpush.msra.mxu0 %v1002
    %1063 = vmatpush.msra.mxu0 %v999
    %1064 = vmatpush.msra.mxu0 %v996
    %1065 = vmatpush.msra.mxu0 %v993
    %1066 = vmatpush.msra.mxu0 %v990
    %1067 = vmatpush.msra.mxu0 %v987
    %1068 = vmatpush.msra.mxu0 %v984
    %1069 = vmatpush.msra.mxu0 %v981
    %1070 = vmatpush.msra.mxu0 %v978
    %1071 = vmatpush.msra.mxu0 %v975
    %1072 = vmatpush.msra.mxu0 %v972
    %1073 = vmatpush.msra.mxu0 %v969
    %1074 = vmatmul.f32.gmra.mxu0 %v83
    %v1075 = vpop.f32.mrf.mxu0
    %v1076 = vadd.f32 %v1017, %v1075
    %1077 = vdwg.mxu0
    %v1078 = vadd.f32 %v932, %v1036
    %v1079 = vxor.u32 %v1078, 2147483648
    %v1080 = vmul.f32 %v1079, 1.442695
    %v1081 = vpow.pop %v1080
    %v1082 = vadd.f32 %v1081, 1.0
    %v1083 = vrcp.pop %v1082
    %v1084 = vmul.f32 %v1082, %v1083
    %v1085 = vsub.f32 1.0, %v1084
    %v1086 = vmul.f32 %v1083, %v1085
    %v1087 = vadd.f32 %v1083, %v1086
    %vm1088 = vweird.f32 %v1082
    %vm1089 = vweird.f32 %v1083
    %vm1090 = vmor %vm1088, %vm1089
    %v1091 = vsel %vm1090, %v1083, %v1087
    %v1092 = vand.u32 2147483647, %v1082
    %vm1093 = vcmp.eq.f32.partialorder %v1092, 8.507059e+37
    %v1094 = vand.u32 %v1082, 2147483648
    %v1095 = vor.u32 1.1754944e-38, %v1094
    %v1096 = vsel %vm1093, %v1095, %v1091
    %v1097 = vmul.f32 1.0, %v1096
    %v1098 = vadd.f32 %v933, %v1056
    %v1099 = vxor.u32 %v1098, 2147483648
    %v1100 = vmul.f32 %v1099, 1.442695
    %v1101 = vpow.pop %v1100
    %v1102 = vadd.f32 %v1101, 1.0
    %v1103 = vrcp.pop %v1102
    %v1104 = vmul.f32 %v1102, %v1103
    %v1105 = vsub.f32 1.0, %v1104
    %v1106 = vmul.f32 %v1103, %v1105
    %v1107 = vadd.f32 %v1103, %v1106
    %vm1108 = vweird.f32 %v1102
    %vm1109 = vweird.f32 %v1103
    %vm1110 = vmor %vm1108, %vm1109
    %v1111 = vsel %vm1110, %v1103, %v1107
    %v1112 = vand.u32 2147483647, %v1102
    %vm1113 = vcmp.eq.f32.partialorder %v1112, 8.507059e+37
    %v1114 = vand.u32 %v1102, 2147483648
    %v1115 = vor.u32 1.1754944e-38, %v1114
    %v1116 = vsel %vm1113, %v1115, %v1111
    %v1117 = vmul.f32 1.0, %v1116
    %v1118 = vmul.f32 %v1097, %v1076
    %v1119 = vadd.f32 %v934, %v1118
    %v1120 = vtanh.pop %v1119
    %v1121 = vsub.f32 1.0, %v1117
    %v1122 = vmul.f32 %v1121, %v1120
    %v1123 = vmul.f32 %v1117, %v83
    %v1124 = vadd.f32 %v1122, %v1123
    %v1125 = vld [vmem:[#allocation2 + $0x50] sm:$0xf]
    %v1126 = vld [vmem:[#allocation2 + $0xb8] sm:$0xf]
    %v1127 = vld [vmem:[#allocation2 + $0x120] sm:$0xf]
    %v1128 = vld [vmem:[#allocation2 + $0x188] sm:$0xf]
    %v1129 = vld [vmem:[#allocation2 + $0x1f0] sm:$0xf]
    %v1130 = vld [vmem:[#allocation2 + $0x258] sm:$0xf]
    %v1131 = vld [vmem:[#allocation2 + $0x2c0] sm:$0xf]
    %v1132 = vld [vmem:[#allocation2 + $0x328] sm:$0xf]
    %v1133 = vld [vmem:[#allocation2 + $0x390] sm:$0xf]
    %v1134 = vld [vmem:[#allocation2 + $0x3f8] sm:$0xf]
    %v1135 = vld [vmem:[#allocation2 + $0x460] sm:$0xf]
    %v1136 = vld [vmem:[#allocation2 + $0x4c8] sm:$0xf]
    %v1137 = vld [vmem:[#allocation2 + $0x530] sm:$0xf]
    %v1138 = vld [vmem:[#allocation2 + $0x598] sm:$0xf]
    %v1139 = vld [vmem:[#allocation2 + $0x600] sm:$0xf]
    %v1140 = vld [vmem:[#allocation2 + $0x668] sm:$0xf]
    %v1141 = vunpack.c.l.bf16 %v1125
    %v1142 = vunpack.c.l.bf16 %v1126
    %v1143 = vunpack.c.l.bf16 %v1127
    %v1144 = vunpack.c.l.bf16 %v1128
    %v1145 = vunpack.c.l.bf16 %v1129
    %v1146 = vunpack.c.l.bf16 %v1130
    %v1147 = vunpack.c.l.bf16 %v1131
    %v1148 = vunpack.c.l.bf16 %v1132
    %v1149 = vunpack.c.l.bf16 %v1133
    %v1150 = vunpack.c.l.bf16 %v1134
    %v1151 = vunpack.c.l.bf16 %v1135
    %v1152 = vunpack.c.l.bf16 %v1136
    %v1153 = vunpack.c.l.bf16 %v1137
    %v1154 = vunpack.c.l.bf16 %v1138
    %v1155 = vunpack.c.l.bf16 %v1139
    %v1156 = vunpack.c.l.bf16 %v1140
    %v1157 = vld [vmem:[#allocation7 + $0xc0] sm:$0xff]
    %1158 = vmatpush.msra.mxu0 %v1156
    %1159 = vmatpush.msra.mxu0 %v1155
    %1160 = vmatpush.msra.mxu0 %v1154
    %1161 = vmatpush.msra.mxu0 %v1153
    %1162 = vmatpush.msra.mxu0 %v1152
    %1163 = vmatpush.msra.mxu0 %v1151
    %1164 = vmatpush.msra.mxu0 %v1150
    %1165 = vmatpush.msra.mxu0 %v1149
    %1166 = vmatpush.msra.mxu0 %v1148
    %1167 = vmatpush.msra.mxu0 %v1147
    %1168 = vmatpush.msra.mxu0 %v1146
    %1169 = vmatpush.msra.mxu0 %v1145
    %1170 = vmatpush.msra.mxu0 %v1144
    %1171 = vmatpush.msra.mxu0 %v1143
    %1172 = vmatpush.msra.mxu0 %v1142
    %1173 = vmatpush.msra.mxu0 %v1141
    %1174 = vmatmul.f32.gmra.mxu0 %v1124
    %v1175 = vpop.f32.mrf.mxu0
    %v1176 = vadd.f32 %v1157, %v1175
    %1177 = vdwg.mxu0
    %v1178 = vmax.f32 %v1176, 0.0
    %v1179 = vld [vmem:[#allocation2 + $0x54] sm:$0xf]
    %v1180 = vld [vmem:[#allocation2 + $0xbc] sm:$0xf]
    %v1181 = vld [vmem:[#allocation2 + $0x124] sm:$0xf]
    %v1182 = vld [vmem:[#allocation2 + $0x18c] sm:$0xf]
    %v1183 = vld [vmem:[#allocation2 + $0x1f4] sm:$0xf]
    %v1184 = vld [vmem:[#allocation2 + $0x25c] sm:$0xf]
    %v1185 = vld [vmem:[#allocation2 + $0x2c4] sm:$0xf]
    %v1186 = vld [vmem:[#allocation2 + $0x32c] sm:$0xf]
    %v1187 = vld [vmem:[#allocation2 + $0x394] sm:$0xf]
    %v1188 = vld [vmem:[#allocation2 + $0x3fc] sm:$0xf]
    %v1189 = vld [vmem:[#allocation2 + $0x464] sm:$0xf]
    %v1190 = vld [vmem:[#allocation2 + $0x4cc] sm:$0xf]
    %v1191 = vld [vmem:[#allocation2 + $0x534] sm:$0xf]
    %v1192 = vld [vmem:[#allocation2 + $0x59c] sm:$0xf]
    %v1193 = vld [vmem:[#allocation2 + $0x604] sm:$0xf]
    %v1194 = vld [vmem:[#allocation2 + $0x66c] sm:$0xf]
    %v1195 = vunpack.c.l.bf16 %v1179
    %v1196 = vunpack.c.l.bf16 %v1180
    %v1197 = vunpack.c.l.bf16 %v1181
    %v1198 = vunpack.c.l.bf16 %v1182
    %v1199 = vunpack.c.l.bf16 %v1183
    %v1200 = vunpack.c.l.bf16 %v1184
    %v1201 = vunpack.c.l.bf16 %v1185
    %v1202 = vunpack.c.l.bf16 %v1186
    %v1203 = vunpack.c.l.bf16 %v1187
    %v1204 = vunpack.c.l.bf16 %v1188
    %v1205 = vunpack.c.l.bf16 %v1189
    %v1206 = vunpack.c.l.bf16 %v1190
    %v1207 = vunpack.c.l.bf16 %v1191
    %v1208 = vunpack.c.l.bf16 %v1192
    %v1209 = vunpack.c.l.bf16 %v1193
    %v1210 = vunpack.c.l.bf16 %v1194
    %v1211 = vld [vmem:[#allocation7 + $0xc8] sm:$0xff]
    %1212 = vmatpush.msra.mxu0 %v1210
    %1213 = vmatpush.msra.mxu0 %v1209
    %1214 = vmatpush.msra.mxu0 %v1208
    %1215 = vmatpush.msra.mxu0 %v1207
    %1216 = vmatpush.msra.mxu0 %v1206
    %1217 = vmatpush.msra.mxu0 %v1205
    %1218 = vmatpush.msra.mxu0 %v1204
    %1219 = vmatpush.msra.mxu0 %v1203
    %1220 = vmatpush.msra.mxu0 %v1202
    %1221 = vmatpush.msra.mxu0 %v1201
    %1222 = vmatpush.msra.mxu0 %v1200
    %1223 = vmatpush.msra.mxu0 %v1199
    %1224 = vmatpush.msra.mxu0 %v1198
    %1225 = vmatpush.msra.mxu0 %v1197
    %1226 = vmatpush.msra.mxu0 %v1196
    %1227 = vmatpush.msra.mxu0 %v1195
    %1228 = vmatmul.f32.gmra.mxu0 %v1178
    %v1229 = vpop.f32.mrf.mxu0
    %v1230 = vadd.f32 %v1211, %v1229
    %1231 = vdwg.mxu0
    %v1232 = vld [vmem:[#allocation2 + $0x58] sm:$0xff]
    %v1233 = vld [vmem:[#allocation2 + $0x60] sm:$0xf]
    %v1234 = vld [vmem:[#allocation2 + $0xc0] sm:$0xff]
    %v1235 = vld [vmem:[#allocation2 + $0xc8] sm:$0xf]
    %v1236 = vld [vmem:[#allocation2 + $0x128] sm:$0xff]
    %v1237 = vld [vmem:[#allocation2 + $0x130] sm:$0xf]
    %v1238 = vld [vmem:[#allocation2 + $0x190] sm:$0xff]
    %v1239 = vld [vmem:[#allocation2 + $0x198] sm:$0xf]
    %v1240 = vld [vmem:[#allocation2 + $0x1f8] sm:$0xff]
    %v1241 = vld [vmem:[#allocation2 + $0x200] sm:$0xf]
    %v1242 = vld [vmem:[#allocation2 + $0x260] sm:$0xff]
    %v1243 = vld [vmem:[#allocation2 + $0x268] sm:$0xf]
    %v1244 = vld [vmem:[#allocation2 + $0x2c8] sm:$0xff]
    %v1245 = vld [vmem:[#allocation2 + $0x2d0] sm:$0xf]
    %v1246 = vld [vmem:[#allocation2 + $0x330] sm:$0xff]
    %v1247 = vld [vmem:[#allocation2 + $0x338] sm:$0xf]
    %v1248 = vld [vmem:[#allocation2 + $0x398] sm:$0xff]
    %v1249 = vld [vmem:[#allocation2 + $0x3a0] sm:$0xf]
    %v1250 = vld [vmem:[#allocation2 + $0x400] sm:$0xff]
    %v1251 = vld [vmem:[#allocation2 + $0x408] sm:$0xf]
    %v1252 = vld [vmem:[#allocation2 + $0x468] sm:$0xff]
    %v1253 = vld [vmem:[#allocation2 + $0x470] sm:$0xf]
    %v1254 = vld [vmem:[#allocation2 + $0x4d0] sm:$0xff]
    %v1255 = vld [vmem:[#allocation2 + $0x4d8] sm:$0xf]
    %v1256 = vld [vmem:[#allocation2 + $0x538] sm:$0xff]
    %v1257 = vld [vmem:[#allocation2 + $0x540] sm:$0xf]
    %v1258 = vld [vmem:[#allocation2 + $0x5a0] sm:$0xff]
    %v1259 = vld [vmem:[#allocation2 + $0x5a8] sm:$0xf]
    %v1260 = vld [vmem:[#allocation2 + $0x608] sm:$0xff]
    %v1261 = vld [vmem:[#allocation2 + $0x610] sm:$0xf]
    %v1262 = vld [vmem:[#allocation2 + $0x670] sm:$0xff]
    %v1263 = vld [vmem:[#allocation2 + $0x678] sm:$0xf]
    %v1264 = vunpack.c.l.bf16 %v1232
    %v1265 = vunpack.c.h.bf16 %v1232
    %v1266 = vunpack.c.l.bf16 %v1233
    %v1267 = vunpack.c.l.bf16 %v1234
    %v1268 = vunpack.c.h.bf16 %v1234
    %v1269 = vunpack.c.l.bf16 %v1235
    %v1270 = vunpack.c.l.bf16 %v1236
    %v1271 = vunpack.c.h.bf16 %v1236
    %v1272 = vunpack.c.l.bf16 %v1237
    %v1273 = vunpack.c.l.bf16 %v1238
    %v1274 = vunpack.c.h.bf16 %v1238
    %v1275 = vunpack.c.l.bf16 %v1239
    %v1276 = vunpack.c.l.bf16 %v1240
    %v1277 = vunpack.c.h.bf16 %v1240
    %v1278 = vunpack.c.l.bf16 %v1241
    %v1279 = vunpack.c.l.bf16 %v1242
    %v1280 = vunpack.c.h.bf16 %v1242
    %v1281 = vunpack.c.l.bf16 %v1243
    %v1282 = vunpack.c.l.bf16 %v1244
    %v1283 = vunpack.c.h.bf16 %v1244
    %v1284 = vunpack.c.l.bf16 %v1245
    %v1285 = vunpack.c.l.bf16 %v1246
    %v1286 = vunpack.c.h.bf16 %v1246
    %v1287 = vunpack.c.l.bf16 %v1247
    %v1288 = vunpack.c.l.bf16 %v1248
    %v1289 = vunpack.c.h.bf16 %v1248
    %v1290 = vunpack.c.l.bf16 %v1249
    %v1291 = vunpack.c.l.bf16 %v1250
    %v1292 = vunpack.c.h.bf16 %v1250
    %v1293 = vunpack.c.l.bf16 %v1251
    %v1294 = vunpack.c.l.bf16 %v1252
    %v1295 = vunpack.c.h.bf16 %v1252
    %v1296 = vunpack.c.l.bf16 %v1253
    %v1297 = vunpack.c.l.bf16 %v1254
    %v1298 = vunpack.c.h.bf16 %v1254
    %v1299 = vunpack.c.l.bf16 %v1255
    %v1300 = vunpack.c.l.bf16 %v1256
    %v1301 = vunpack.c.h.bf16 %v1256
    %v1302 = vunpack.c.l.bf16 %v1257
    %v1303 = vunpack.c.l.bf16 %v1258
    %v1304 = vunpack.c.h.bf16 %v1258
    %v1305 = vunpack.c.l.bf16 %v1259
    %v1306 = vunpack.c.l.bf16 %v1260
    %v1307 = vunpack.c.h.bf16 %v1260
    %v1308 = vunpack.c.l.bf16 %v1261
    %v1309 = vunpack.c.l.bf16 %v1262
    %v1310 = vunpack.c.h.bf16 %v1262
    %v1311 = vunpack.c.l.bf16 %v1263
    %1312 = vmatpush.msra.mxu0 %v1309
    %1313 = vmatpush.msra.mxu0 %v1306
    %1314 = vmatpush.msra.mxu0 %v1303
    %1315 = vmatpush.msra.mxu0 %v1300
    %1316 = vmatpush.msra.mxu0 %v1297
    %1317 = vmatpush.msra.mxu0 %v1294
    %1318 = vmatpush.msra.mxu0 %v1291
    %1319 = vmatpush.msra.mxu0 %v1288
    %1320 = vmatpush.msra.mxu0 %v1285
    %1321 = vmatpush.msra.mxu0 %v1282
    %1322 = vmatpush.msra.mxu0 %v1279
    %1323 = vmatpush.msra.mxu0 %v1276
    %1324 = vmatpush.msra.mxu0 %v1273
    %1325 = vmatpush.msra.mxu0 %v1270
    %1326 = vmatpush.msra.mxu0 %v1267
    %1327 = vmatpush.msra.mxu0 %v1264
    %1328 = vmatmul.f32.gmra.mxu0 %v1230
    %v1329 = vpop.f32.mrf.mxu0
    %v1330 = vadd.f32 0.0, %v1329
    %1331 = vdwg.mxu0
    %1332 = vmatpush.msra.mxu0 %v1310
    %1333 = vmatpush.msra.mxu0 %v1307
    %1334 = vmatpush.msra.mxu0 %v1304
    %1335 = vmatpush.msra.mxu0 %v1301
    %1336 = vmatpush.msra.mxu0 %v1298
    %1337 = vmatpush.msra.mxu0 %v1295
    %1338 = vmatpush.msra.mxu0 %v1292
    %1339 = vmatpush.msra.mxu0 %v1289
    %1340 = vmatpush.msra.mxu0 %v1286
    %1341 = vmatpush.msra.mxu0 %v1283
    %1342 = vmatpush.msra.mxu0 %v1280
    %1343 = vmatpush.msra.mxu0 %v1277
    %1344 = vmatpush.msra.mxu0 %v1274
    %1345 = vmatpush.msra.mxu0 %v1271
    %1346 = vmatpush.msra.mxu0 %v1268
    %1347 = vmatpush.msra.mxu0 %v1265
    %1348 = vmatmul.f32.gmra.mxu0 %v1230
    %v1349 = vpop.f32.mrf.mxu0
    %v1350 = vadd.f32 0.0, %v1349
    %1351 = vdwg.mxu0
    %1352 = vmatpush.msra.mxu0 %v1311
    %1353 = vmatpush.msra.mxu0 %v1308
    %1354 = vmatpush.msra.mxu0 %v1305
    %1355 = vmatpush.msra.mxu0 %v1302
    %1356 = vmatpush.msra.mxu0 %v1299
    %1357 = vmatpush.msra.mxu0 %v1296
    %1358 = vmatpush.msra.mxu0 %v1293
    %1359 = vmatpush.msra.mxu0 %v1290
    %1360 = vmatpush.msra.mxu0 %v1287
    %1361 = vmatpush.msra.mxu0 %v1284
    %1362 = vmatpush.msra.mxu0 %v1281
    %1363 = vmatpush.msra.mxu0 %v1278
    %1364 = vmatpush.msra.mxu0 %v1275
    %1365 = vmatpush.msra.mxu0 %v1272
    %1366 = vmatpush.msra.mxu0 %v1269
    %1367 = vmatpush.msra.mxu0 %v1266
    %1368 = vmatmul.f32.gmra.mxu0 %v1230
    %v1369 = vpop.f32.mrf.mxu0
    %v1370 = vadd.f32 0.0, %v1369
    %1371 = vdwg.mxu0
    %v1372 = vadd.f32 %v272, %v1330
    %v1373 = vadd.f32 %v292, %v1350
    %v1374 = vadd.f32 %v312, %v1370
    %v1375 = vmax.f32 %v1372, 0.0
    %v1376 = vmax.f32 %v1373, 0.0
    %v1377 = vmax.f32 %v1374, 0.0
    %v1378 = vld [vmem:[#allocation6] sm:$0xff]
    %v1379 = vld [vmem:[#allocation6 + $0x8] sm:$0xff]
    %v1380 = vld [vmem:[#allocation6 + $0x10] sm:$0xff]
    %v1381 = vld [vmem:[#allocation6 + $0x18] sm:$0xff]
    %v1382 = vld [vmem:[#allocation6 + $0x20] sm:$0xff]
    %v1383 = vld [vmem:[#allocation6 + $0x28] sm:$0xff]
    %v1384 = vld [vmem:[#allocation6 + $0x30] sm:$0xff]
    %v1385 = vld [vmem:[#allocation6 + $0x38] sm:$0xff]
    %v1386 = vld [vmem:[#allocation6 + $0x40] sm:$0xff]
    %v1387 = vld [vmem:[#allocation6 + $0x48] sm:$0xff]
    %v1388 = vld [vmem:[#allocation6 + $0x50] sm:$0xff]
    %v1389 = vld [vmem:[#allocation6 + $0x58] sm:$0xff]
    %v1390 = vld [vmem:[#allocation6 + $0x60] sm:$0xff]
    %v1391 = vld [vmem:[#allocation6 + $0x68] sm:$0xff]
    %v1392 = vld [vmem:[#allocation6 + $0x70] sm:$0xff]
    %v1393 = vld [vmem:[#allocation6 + $0x78] sm:$0xff]
    %v1394 = vld [vmem:[#allocation6 + $0x80] sm:$0xff]
    %v1395 = vld [vmem:[#allocation6 + $0x88] sm:$0xff]
    %v1396 = vld [vmem:[#allocation6 + $0x90] sm:$0xff]
    %v1397 = vld [vmem:[#allocation6 + $0x98] sm:$0xff]
    %v1398 = vld [vmem:[#allocation6 + $0xa0] sm:$0xff]
    %v1399 = vld [vmem:[#allocation6 + $0xa8] sm:$0xff]
    %v1400 = vld [vmem:[#allocation6 + $0xb0] sm:$0xff]
    %v1401 = vld [vmem:[#allocation6 + $0xb8] sm:$0xff]
    %v1402 = vld [vmem:[#allocation6 + $0xc0] sm:$0xff]
    %v1403 = vld [vmem:[#allocation6 + $0xc8] sm:$0xff]
    %v1404 = vld [vmem:[#allocation6 + $0xd0] sm:$0xff]
    %v1405 = vld [vmem:[#allocation6 + $0xd8] sm:$0xff]
    %v1406 = vld [vmem:[#allocation6 + $0xe0] sm:$0xff]
    %v1407 = vld [vmem:[#allocation6 + $0xe8] sm:$0xff]
    %v1408 = vld [vmem:[#allocation6 + $0xf0] sm:$0xff]
    %v1409 = vld [vmem:[#allocation6 + $0xf8] sm:$0xff]
    %v1410 = vld [vmem:[#allocation6 + $0x100] sm:$0xff]
    %v1411 = vld [vmem:[#allocation6 + $0x108] sm:$0xff]
    %v1412 = vld [vmem:[#allocation6 + $0x110] sm:$0xff]
    %v1413 = vld [vmem:[#allocation6 + $0x118] sm:$0xff]
    %v1414 = vld [vmem:[#allocation6 + $0x120] sm:$0xff]
    %v1415 = vld [vmem:[#allocation6 + $0x128] sm:$0xff]
    %v1416 = vld [vmem:[#allocation6 + $0x130] sm:$0xff]
    %v1417 = vld [vmem:[#allocation6 + $0x138] sm:$0xff]
    %v1418 = vld [vmem:[#allocation6 + $0x140] sm:$0xff]
    %v1419 = vld [vmem:[#allocation6 + $0x148] sm:$0xff]
    %v1420 = vld [vmem:[#allocation6 + $0x150] sm:$0xff]
    %v1421 = vld [vmem:[#allocation6 + $0x158] sm:$0xff]
    %v1422 = vld [vmem:[#allocation6 + $0x160] sm:$0xff]
    %v1423 = vld [vmem:[#allocation6 + $0x168] sm:$0xff]
    %v1424 = vld [vmem:[#allocation6 + $0x170] sm:$0xff]
    %v1425 = vld [vmem:[#allocation6 + $0x178] sm:$0xff]
    %v1426 = vld [vmem:[#allocation6 + $0x180] sm:$0xff]
    %v1427 = vld [vmem:[#allocation6 + $0x188] sm:$0xff]
    %v1428 = vld [vmem:[#allocation6 + $0x190] sm:$0xff]
    %v1429 = vld [vmem:[#allocation6 + $0x198] sm:$0xff]
    %v1430 = vld [vmem:[#allocation6 + $0x1a0] sm:$0xff]
    %v1431 = vld [vmem:[#allocation6 + $0x1a8] sm:$0xff]
    %v1432 = vld [vmem:[#allocation6 + $0x1b0] sm:$0xff]
    %v1433 = vld [vmem:[#allocation6 + $0x1b8] sm:$0xff]
    %v1434 = vld [vmem:[#allocation6 + $0x1c0] sm:$0xff]
    %v1435 = vld [vmem:[#allocation6 + $0x1c8] sm:$0xff]
    %v1436 = vld [vmem:[#allocation6 + $0x1d0] sm:$0xff]
    %v1437 = vld [vmem:[#allocation6 + $0x1d8] sm:$0xff]
    %v1438 = vld [vmem:[#allocation6 + $0x1e0] sm:$0xff]
    %v1439 = vld [vmem:[#allocation6 + $0x1e8] sm:$0xff]
    %v1440 = vld [vmem:[#allocation6 + $0x1f0] sm:$0xff]
    %v1441 = vld [vmem:[#allocation6 + $0x1f8] sm:$0xff]
    %v1442 = vld [vmem:[#allocation6 + $0x200] sm:$0xff]
    %v1443 = vld [vmem:[#allocation6 + $0x208] sm:$0xff]
    %v1444 = vld [vmem:[#allocation6 + $0x210] sm:$0xff]
    %v1445 = vld [vmem:[#allocation6 + $0x218] sm:$0xff]
    %v1446 = vld [vmem:[#allocation6 + $0x220] sm:$0xff]
    %v1447 = vld [vmem:[#allocation6 + $0x228] sm:$0xff]
    %v1448 = vld [vmem:[#allocation6 + $0x230] sm:$0xff]
    %v1449 = vld [vmem:[#allocation6 + $0x238] sm:$0xff]
    %v1450 = vld [vmem:[#allocation6 + $0x240] sm:$0xff]
    %v1451 = vld [vmem:[#allocation6 + $0x248] sm:$0xff]
    %v1452 = vld [vmem:[#allocation6 + $0x250] sm:$0xff]
    %v1453 = vld [vmem:[#allocation6 + $0x258] sm:$0xff]
    %v1454 = vld [vmem:[#allocation6 + $0x260] sm:$0xff]
    %v1455 = vld [vmem:[#allocation6 + $0x268] sm:$0xff]
    %v1456 = vld [vmem:[#allocation6 + $0x270] sm:$0xff]
    %v1457 = vld [vmem:[#allocation6 + $0x278] sm:$0xff]
    %v1458 = vld [vmem:[#allocation6 + $0x280] sm:$0xff]
    %v1459 = vld [vmem:[#allocation6 + $0x288] sm:$0xff]
    %v1460 = vld [vmem:[#allocation6 + $0x290] sm:$0xff]
    %v1461 = vld [vmem:[#allocation6 + $0x298] sm:$0xff]
    %v1462 = vld [vmem:[#allocation6 + $0x2a0] sm:$0xff]
    %v1463 = vld [vmem:[#allocation6 + $0x2a8] sm:$0xff]
    %v1464 = vld [vmem:[#allocation6 + $0x2b0] sm:$0xff]
    %v1465 = vld [vmem:[#allocation6 + $0x2b8] sm:$0xff]
    %v1466 = vld [vmem:[#allocation6 + $0x2c0] sm:$0xff]
    %v1467 = vld [vmem:[#allocation6 + $0x2c8] sm:$0xff]
    %v1468 = vld [vmem:[#allocation6 + $0x2d0] sm:$0xff]
    %v1469 = vld [vmem:[#allocation6 + $0x2d8] sm:$0xff]
    %v1470 = vld [vmem:[#allocation6 + $0x2e0] sm:$0xff]
    %v1471 = vld [vmem:[#allocation6 + $0x2e8] sm:$0xff]
    %v1472 = vld [vmem:[#allocation6 + $0x2f0] sm:$0xff]
    %v1473 = vld [vmem:[#allocation6 + $0x2f8] sm:$0xff]
    %v1474 = vld [vmem:[#allocation6 + $0x300] sm:$0xff]
    %v1475 = vld [vmem:[#allocation6 + $0x308] sm:$0xff]
    %v1476 = vld [vmem:[#allocation6 + $0x310] sm:$0xff]
    %v1477 = vld [vmem:[#allocation6 + $0x318] sm:$0xff]
    %v1478 = vld [vmem:[#allocation6 + $0x320] sm:$0xff]
    %v1479 = vld [vmem:[#allocation6 + $0x328] sm:$0xff]
    %v1480 = vld [vmem:[#allocation6 + $0x330] sm:$0xff]
    %v1481 = vld [vmem:[#allocation6 + $0x338] sm:$0xff]
    %v1482 = vld [vmem:[#allocation6 + $0x340] sm:$0xff]
    %v1483 = vld [vmem:[#allocation6 + $0x348] sm:$0xff]
    %v1484 = vld [vmem:[#allocation6 + $0x350] sm:$0xff]
    %v1485 = vld [vmem:[#allocation6 + $0x358] sm:$0xff]
    %v1486 = vld [vmem:[#allocation6 + $0x360] sm:$0xff]
    %v1487 = vld [vmem:[#allocation6 + $0x368] sm:$0xff]
    %v1488 = vld [vmem:[#allocation6 + $0x370] sm:$0xff]
    %v1489 = vld [vmem:[#allocation6 + $0x378] sm:$0xff]
    %v1490 = vld [vmem:[#allocation6 + $0x380] sm:$0xff]
    %v1491 = vld [vmem:[#allocation6 + $0x388] sm:$0xff]
    %v1492 = vld [vmem:[#allocation6 + $0x390] sm:$0xff]
    %v1493 = vld [vmem:[#allocation6 + $0x398] sm:$0xff]
    %v1494 = vld [vmem:[#allocation6 + $0x3a0] sm:$0xff]
    %v1495 = vld [vmem:[#allocation6 + $0x3a8] sm:$0xff]
    %v1496 = vld [vmem:[#allocation6 + $0x3b0] sm:$0xff]
    %v1497 = vld [vmem:[#allocation6 + $0x3b8] sm:$0xff]
    %v1498 = vld [vmem:[#allocation6 + $0x3c0] sm:$0xff]
    %v1499 = vld [vmem:[#allocation6 + $0x3c8] sm:$0xff]
    %v1500 = vld [vmem:[#allocation6 + $0x3d0] sm:$0xff]
    %v1501 = vld [vmem:[#allocation6 + $0x3d8] sm:$0xff]
    %v1502 = vld [vmem:[#allocation6 + $0x3e0] sm:$0xff]
    %v1503 = vld [vmem:[#allocation6 + $0x3e8] sm:$0xff]
    %v1504 = vld [vmem:[#allocation6 + $0x3f0] sm:$0xff]
    %v1505 = vld [vmem:[#allocation6 + $0x3f8] sm:$0xff]
    %v1506 = vld [vmem:[#allocation6 + $0x400] sm:$0xff]
    %v1507 = vld [vmem:[#allocation6 + $0x408] sm:$0xff]
    %v1508 = vld [vmem:[#allocation6 + $0x410] sm:$0xff]
    %v1509 = vld [vmem:[#allocation6 + $0x418] sm:$0xff]
    %v1510 = vld [vmem:[#allocation6 + $0x420] sm:$0xff]
    %v1511 = vld [vmem:[#allocation6 + $0x428] sm:$0xff]
    %v1512 = vld [vmem:[#allocation6 + $0x430] sm:$0xff]
    %v1513 = vld [vmem:[#allocation6 + $0x438] sm:$0xff]
    %v1514 = vld [vmem:[#allocation6 + $0x440] sm:$0xff]
    %v1515 = vld [vmem:[#allocation6 + $0x448] sm:$0xff]
    %v1516 = vld [vmem:[#allocation6 + $0x450] sm:$0xff]
    %v1517 = vld [vmem:[#allocation6 + $0x458] sm:$0xff]
    %v1518 = vld [vmem:[#allocation6 + $0x460] sm:$0xff]
    %v1519 = vld [vmem:[#allocation6 + $0x468] sm:$0xff]
    %v1520 = vld [vmem:[#allocation6 + $0x470] sm:$0xff]
    %v1521 = vld [vmem:[#allocation6 + $0x478] sm:$0xff]
    %v1522 = vunpack.c.l.bf16 %v1378
    %v1523 = vunpack.c.h.bf16 %v1378
    %v1524 = vunpack.c.l.bf16 %v1379
    %v1525 = vunpack.c.h.bf16 %v1379
    %v1526 = vunpack.c.l.bf16 %v1380
    %v1527 = vunpack.c.h.bf16 %v1380
    %v1528 = vunpack.c.l.bf16 %v1381
    %v1529 = vunpack.c.h.bf16 %v1381
    %v1530 = vunpack.c.l.bf16 %v1382
    %v1531 = vunpack.c.h.bf16 %v1382
    %v1532 = vunpack.c.l.bf16 %v1383
    %v1533 = vunpack.c.h.bf16 %v1383
    %v1534 = vunpack.c.l.bf16 %v1384
    %v1535 = vunpack.c.h.bf16 %v1384
    %v1536 = vunpack.c.l.bf16 %v1385
    %v1537 = vunpack.c.h.bf16 %v1385
    %v1538 = vunpack.c.l.bf16 %v1386
    %v1539 = vunpack.c.h.bf16 %v1386
    %v1540 = vunpack.c.l.bf16 %v1387
    %v1541 = vunpack.c.h.bf16 %v1387
    %v1542 = vunpack.c.l.bf16 %v1388
    %v1543 = vunpack.c.h.bf16 %v1388
    %v1544 = vunpack.c.l.bf16 %v1389
    %v1545 = vunpack.c.h.bf16 %v1389
    %v1546 = vunpack.c.l.bf16 %v1390
    %v1547 = vunpack.c.h.bf16 %v1390
    %v1548 = vunpack.c.l.bf16 %v1391
    %v1549 = vunpack.c.h.bf16 %v1391
    %v1550 = vunpack.c.l.bf16 %v1392
    %v1551 = vunpack.c.h.bf16 %v1392
    %v1552 = vunpack.c.l.bf16 %v1393
    %v1553 = vunpack.c.h.bf16 %v1393
    %v1554 = vunpack.c.l.bf16 %v1394
    %v1555 = vunpack.c.h.bf16 %v1394
    %v1556 = vunpack.c.l.bf16 %v1395
    %v1557 = vunpack.c.h.bf16 %v1395
    %v1558 = vunpack.c.l.bf16 %v1396
    %v1559 = vunpack.c.h.bf16 %v1396
    %v1560 = vunpack.c.l.bf16 %v1397
    %v1561 = vunpack.c.h.bf16 %v1397
    %v1562 = vunpack.c.l.bf16 %v1398
    %v1563 = vunpack.c.h.bf16 %v1398
    %v1564 = vunpack.c.l.bf16 %v1399
    %v1565 = vunpack.c.h.bf16 %v1399
    %v1566 = vunpack.c.l.bf16 %v1400
    %v1567 = vunpack.c.h.bf16 %v1400
    %v1568 = vunpack.c.l.bf16 %v1401
    %v1569 = vunpack.c.h.bf16 %v1401
    %v1570 = vunpack.c.l.bf16 %v1402
    %v1571 = vunpack.c.h.bf16 %v1402
    %v1572 = vunpack.c.l.bf16 %v1403
    %v1573 = vunpack.c.h.bf16 %v1403
    %v1574 = vunpack.c.l.bf16 %v1404
    %v1575 = vunpack.c.h.bf16 %v1404
    %v1576 = vunpack.c.l.bf16 %v1405
    %v1577 = vunpack.c.h.bf16 %v1405
    %v1578 = vunpack.c.l.bf16 %v1406
    %v1579 = vunpack.c.h.bf16 %v1406
    %v1580 = vunpack.c.l.bf16 %v1407
    %v1581 = vunpack.c.h.bf16 %v1407
    %v1582 = vunpack.c.l.bf16 %v1408
    %v1583 = vunpack.c.h.bf16 %v1408
    %v1584 = vunpack.c.l.bf16 %v1409
    %v1585 = vunpack.c.h.bf16 %v1409
    %v1586 = vunpack.c.l.bf16 %v1410
    %v1587 = vunpack.c.h.bf16 %v1410
    %v1588 = vunpack.c.l.bf16 %v1411
    %v1589 = vunpack.c.h.bf16 %v1411
    %v1590 = vunpack.c.l.bf16 %v1412
    %v1591 = vunpack.c.h.bf16 %v1412
    %v1592 = vunpack.c.l.bf16 %v1413
    %v1593 = vunpack.c.h.bf16 %v1413
    %v1594 = vunpack.c.l.bf16 %v1414
    %v1595 = vunpack.c.h.bf16 %v1414
    %v1596 = vunpack.c.l.bf16 %v1415
    %v1597 = vunpack.c.h.bf16 %v1415
    %v1598 = vunpack.c.l.bf16 %v1416
    %v1599 = vunpack.c.h.bf16 %v1416
    %v1600 = vunpack.c.l.bf16 %v1417
    %v1601 = vunpack.c.h.bf16 %v1417
    %v1602 = vunpack.c.l.bf16 %v1418
    %v1603 = vunpack.c.h.bf16 %v1418
    %v1604 = vunpack.c.l.bf16 %v1419
    %v1605 = vunpack.c.h.bf16 %v1419
    %v1606 = vunpack.c.l.bf16 %v1420
    %v1607 = vunpack.c.h.bf16 %v1420
    %v1608 = vunpack.c.l.bf16 %v1421
    %v1609 = vunpack.c.h.bf16 %v1421
    %v1610 = vunpack.c.l.bf16 %v1422
    %v1611 = vunpack.c.h.bf16 %v1422
    %v1612 = vunpack.c.l.bf16 %v1423
    %v1613 = vunpack.c.h.bf16 %v1423
    %v1614 = vunpack.c.l.bf16 %v1424
    %v1615 = vunpack.c.h.bf16 %v1424
    %v1616 = vunpack.c.l.bf16 %v1425
    %v1617 = vunpack.c.h.bf16 %v1425
    %v1618 = vunpack.c.l.bf16 %v1426
    %v1619 = vunpack.c.h.bf16 %v1426
    %v1620 = vunpack.c.l.bf16 %v1427
    %v1621 = vunpack.c.h.bf16 %v1427
    %v1622 = vunpack.c.l.bf16 %v1428
    %v1623 = vunpack.c.h.bf16 %v1428
    %v1624 = vunpack.c.l.bf16 %v1429
    %v1625 = vunpack.c.h.bf16 %v1429
    %v1626 = vunpack.c.l.bf16 %v1430
    %v1627 = vunpack.c.h.bf16 %v1430
    %v1628 = vunpack.c.l.bf16 %v1431
    %v1629 = vunpack.c.h.bf16 %v1431
    %v1630 = vunpack.c.l.bf16 %v1432
    %v1631 = vunpack.c.h.bf16 %v1432
    %v1632 = vunpack.c.l.bf16 %v1433
    %v1633 = vunpack.c.h.bf16 %v1433
    %v1634 = vunpack.c.l.bf16 %v1434
    %v1635 = vunpack.c.h.bf16 %v1434
    %v1636 = vunpack.c.l.bf16 %v1435
    %v1637 = vunpack.c.h.bf16 %v1435
    %v1638 = vunpack.c.l.bf16 %v1436
    %v1639 = vunpack.c.h.bf16 %v1436
    %v1640 = vunpack.c.l.bf16 %v1437
    %v1641 = vunpack.c.h.bf16 %v1437
    %v1642 = vunpack.c.l.bf16 %v1438
    %v1643 = vunpack.c.h.bf16 %v1438
    %v1644 = vunpack.c.l.bf16 %v1439
    %v1645 = vunpack.c.h.bf16 %v1439
    %v1646 = vunpack.c.l.bf16 %v1440
    %v1647 = vunpack.c.h.bf16 %v1440
    %v1648 = vunpack.c.l.bf16 %v1441
    %v1649 = vunpack.c.h.bf16 %v1441
    %v1650 = vunpack.c.l.bf16 %v1442
    %v1651 = vunpack.c.h.bf16 %v1442
    %v1652 = vunpack.c.l.bf16 %v1443
    %v1653 = vunpack.c.h.bf16 %v1443
    %v1654 = vunpack.c.l.bf16 %v1444
    %v1655 = vunpack.c.h.bf16 %v1444
    %v1656 = vunpack.c.l.bf16 %v1445
    %v1657 = vunpack.c.h.bf16 %v1445
    %v1658 = vunpack.c.l.bf16 %v1446
    %v1659 = vunpack.c.h.bf16 %v1446
    %v1660 = vunpack.c.l.bf16 %v1447
    %v1661 = vunpack.c.h.bf16 %v1447
    %v1662 = vunpack.c.l.bf16 %v1448
    %v1663 = vunpack.c.h.bf16 %v1448
    %v1664 = vunpack.c.l.bf16 %v1449
    %v1665 = vunpack.c.h.bf16 %v1449
    %v1666 = vunpack.c.l.bf16 %v1450
    %v1667 = vunpack.c.h.bf16 %v1450
    %v1668 = vunpack.c.l.bf16 %v1451
    %v1669 = vunpack.c.h.bf16 %v1451
    %v1670 = vunpack.c.l.bf16 %v1452
    %v1671 = vunpack.c.h.bf16 %v1452
    %v1672 = vunpack.c.l.bf16 %v1453
    %v1673 = vunpack.c.h.bf16 %v1453
    %v1674 = vunpack.c.l.bf16 %v1454
    %v1675 = vunpack.c.h.bf16 %v1454
    %v1676 = vunpack.c.l.bf16 %v1455
    %v1677 = vunpack.c.h.bf16 %v1455
    %v1678 = vunpack.c.l.bf16 %v1456
    %v1679 = vunpack.c.h.bf16 %v1456
    %v1680 = vunpack.c.l.bf16 %v1457
    %v1681 = vunpack.c.h.bf16 %v1457
    %v1682 = vunpack.c.l.bf16 %v1458
    %v1683 = vunpack.c.h.bf16 %v1458
    %v1684 = vunpack.c.l.bf16 %v1459
    %v1685 = vunpack.c.h.bf16 %v1459
    %v1686 = vunpack.c.l.bf16 %v1460
    %v1687 = vunpack.c.h.bf16 %v1460
    %v1688 = vunpack.c.l.bf16 %v1461
    %v1689 = vunpack.c.h.bf16 %v1461
    %v1690 = vunpack.c.l.bf16 %v1462
    %v1691 = vunpack.c.h.bf16 %v1462
    %v1692 = vunpack.c.l.bf16 %v1463
    %v1693 = vunpack.c.h.bf16 %v1463
    %v1694 = vunpack.c.l.bf16 %v1464
    %v1695 = vunpack.c.h.bf16 %v1464
    %v1696 = vunpack.c.l.bf16 %v1465
    %v1697 = vunpack.c.h.bf16 %v1465
    %v1698 = vunpack.c.l.bf16 %v1466
    %v1699 = vunpack.c.h.bf16 %v1466
    %v1700 = vunpack.c.l.bf16 %v1467
    %v1701 = vunpack.c.h.bf16 %v1467
    %v1702 = vunpack.c.l.bf16 %v1468
    %v1703 = vunpack.c.h.bf16 %v1468
    %v1704 = vunpack.c.l.bf16 %v1469
    %v1705 = vunpack.c.h.bf16 %v1469
    %v1706 = vunpack.c.l.bf16 %v1470
    %v1707 = vunpack.c.h.bf16 %v1470
    %v1708 = vunpack.c.l.bf16 %v1471
    %v1709 = vunpack.c.h.bf16 %v1471
    %v1710 = vunpack.c.l.bf16 %v1472
    %v1711 = vunpack.c.h.bf16 %v1472
    %v1712 = vunpack.c.l.bf16 %v1473
    %v1713 = vunpack.c.h.bf16 %v1473
    %v1714 = vunpack.c.l.bf16 %v1474
    %v1715 = vunpack.c.h.bf16 %v1474
    %v1716 = vunpack.c.l.bf16 %v1475
    %v1717 = vunpack.c.h.bf16 %v1475
    %v1718 = vunpack.c.l.bf16 %v1476
    %v1719 = vunpack.c.h.bf16 %v1476
    %v1720 = vunpack.c.l.bf16 %v1477
    %v1721 = vunpack.c.h.bf16 %v1477
    %v1722 = vunpack.c.l.bf16 %v1478
    %v1723 = vunpack.c.h.bf16 %v1478
    %v1724 = vunpack.c.l.bf16 %v1479
    %v1725 = vunpack.c.h.bf16 %v1479
    %v1726 = vunpack.c.l.bf16 %v1480
    %v1727 = vunpack.c.h.bf16 %v1480
    %v1728 = vunpack.c.l.bf16 %v1481
    %v1729 = vunpack.c.h.bf16 %v1481
    %v1730 = vunpack.c.l.bf16 %v1482
    %v1731 = vunpack.c.h.bf16 %v1482
    %v1732 = vunpack.c.l.bf16 %v1483
    %v1733 = vunpack.c.h.bf16 %v1483
    %v1734 = vunpack.c.l.bf16 %v1484
    %v1735 = vunpack.c.h.bf16 %v1484
    %v1736 = vunpack.c.l.bf16 %v1485
    %v1737 = vunpack.c.h.bf16 %v1485
    %v1738 = vunpack.c.l.bf16 %v1486
    %v1739 = vunpack.c.h.bf16 %v1486
    %v1740 = vunpack.c.l.bf16 %v1487
    %v1741 = vunpack.c.h.bf16 %v1487
    %v1742 = vunpack.c.l.bf16 %v1488
    %v1743 = vunpack.c.h.bf16 %v1488
    %v1744 = vunpack.c.l.bf16 %v1489
    %v1745 = vunpack.c.h.bf16 %v1489
    %v1746 = vunpack.c.l.bf16 %v1490
    %v1747 = vunpack.c.h.bf16 %v1490
    %v1748 = vunpack.c.l.bf16 %v1491
    %v1749 = vunpack.c.h.bf16 %v1491
    %v1750 = vunpack.c.l.bf16 %v1492
    %v1751 = vunpack.c.h.bf16 %v1492
    %v1752 = vunpack.c.l.bf16 %v1493
    %v1753 = vunpack.c.h.bf16 %v1493
    %v1754 = vunpack.c.l.bf16 %v1494
    %v1755 = vunpack.c.h.bf16 %v1494
    %v1756 = vunpack.c.l.bf16 %v1495
    %v1757 = vunpack.c.h.bf16 %v1495
    %v1758 = vunpack.c.l.bf16 %v1496
    %v1759 = vunpack.c.h.bf16 %v1496
    %v1760 = vunpack.c.l.bf16 %v1497
    %v1761 = vunpack.c.h.bf16 %v1497
    %v1762 = vunpack.c.l.bf16 %v1498
    %v1763 = vunpack.c.h.bf16 %v1498
    %v1764 = vunpack.c.l.bf16 %v1499
    %v1765 = vunpack.c.h.bf16 %v1499
    %v1766 = vunpack.c.l.bf16 %v1500
    %v1767 = vunpack.c.h.bf16 %v1500
    %v1768 = vunpack.c.l.bf16 %v1501
    %v1769 = vunpack.c.h.bf16 %v1501
    %v1770 = vunpack.c.l.bf16 %v1502
    %v1771 = vunpack.c.h.bf16 %v1502
    %v1772 = vunpack.c.l.bf16 %v1503
    %v1773 = vunpack.c.h.bf16 %v1503
    %v1774 = vunpack.c.l.bf16 %v1504
    %v1775 = vunpack.c.h.bf16 %v1504
    %v1776 = vunpack.c.l.bf16 %v1505
    %v1777 = vunpack.c.h.bf16 %v1505
    %v1778 = vunpack.c.l.bf16 %v1506
    %v1779 = vunpack.c.h.bf16 %v1506
    %v1780 = vunpack.c.l.bf16 %v1507
    %v1781 = vunpack.c.h.bf16 %v1507
    %v1782 = vunpack.c.l.bf16 %v1508
    %v1783 = vunpack.c.h.bf16 %v1508
    %v1784 = vunpack.c.l.bf16 %v1509
    %v1785 = vunpack.c.h.bf16 %v1509
    %v1786 = vunpack.c.l.bf16 %v1510
    %v1787 = vunpack.c.h.bf16 %v1510
    %v1788 = vunpack.c.l.bf16 %v1511
    %v1789 = vunpack.c.h.bf16 %v1511
    %v1790 = vunpack.c.l.bf16 %v1512
    %v1791 = vunpack.c.h.bf16 %v1512
    %v1792 = vunpack.c.l.bf16 %v1513
    %v1793 = vunpack.c.h.bf16 %v1513
    %v1794 = vunpack.c.l.bf16 %v1514
    %v1795 = vunpack.c.h.bf16 %v1514
    %v1796 = vunpack.c.l.bf16 %v1515
    %v1797 = vunpack.c.h.bf16 %v1515
    %v1798 = vunpack.c.l.bf16 %v1516
    %v1799 = vunpack.c.h.bf16 %v1516
    %v1800 = vunpack.c.l.bf16 %v1517
    %v1801 = vunpack.c.h.bf16 %v1517
    %v1802 = vunpack.c.l.bf16 %v1518
    %v1803 = vunpack.c.h.bf16 %v1518
    %v1804 = vunpack.c.l.bf16 %v1519
    %v1805 = vunpack.c.h.bf16 %v1519
    %v1806 = vunpack.c.l.bf16 %v1520
    %v1807 = vunpack.c.h.bf16 %v1520
    %v1808 = vunpack.c.l.bf16 %v1521
    %v1809 = vunpack.c.h.bf16 %v1521
    %v1810 = vld [vmem:[#allocation7 + $0x60] sm:$0xff]
    %v1811 = vld [vmem:[#allocation7 + $0x68] sm:$0xff]
    %v1812 = vld [vmem:[#allocation7 + $0x70] sm:$0xff]
    %v1813 = vld [vmem:[#allocation7 + $0x78] sm:$0xff]
    %v1814 = vld [vmem:[#allocation7 + $0x80] sm:$0xff]
    %v1815 = vld [vmem:[#allocation7 + $0x88] sm:$0xff]
    %1816 = vmatpush.msra.mxu0 %v1612
    %1817 = vmatpush.msra.mxu0 %v1606
    %1818 = vmatpush.msra.mxu0 %v1600
    %1819 = vmatpush.msra.mxu0 %v1594
    %1820 = vmatpush.msra.mxu0 %v1588
    %1821 = vmatpush.msra.mxu0 %v1582
    %1822 = vmatpush.msra.mxu0 %v1576
    %1823 = vmatpush.msra.mxu0 %v1570
    %1824 = vmatpush.msra.mxu0 %v1564
    %1825 = vmatpush.msra.mxu0 %v1558
    %1826 = vmatpush.msra.mxu0 %v1552
    %1827 = vmatpush.msra.mxu0 %v1546
    %1828 = vmatpush.msra.mxu0 %v1540
    %1829 = vmatpush.msra.mxu0 %v1534
    %1830 = vmatpush.msra.mxu0 %v1528
    %1831 = vmatpush.msra.mxu0 %v1522
    %1832 = vmatmul.f32.gmra.mxu0 %v1375
    %v1833 = vpop.f32.mrf.mxu0
    %v1834 = vadd.f32 %v1810, %v1833
    %1835 = vdwg.mxu0
    %1836 = vmatpush.msra.mxu0 %v1708
    %1837 = vmatpush.msra.mxu0 %v1702
    %1838 = vmatpush.msra.mxu0 %v1696
    %1839 = vmatpush.msra.mxu0 %v1690
    %1840 = vmatpush.msra.mxu0 %v1684
    %1841 = vmatpush.msra.mxu0 %v1678
    %1842 = vmatpush.msra.mxu0 %v1672
    %1843 = vmatpush.msra.mxu0 %v1666
    %1844 = vmatpush.msra.mxu0 %v1660
    %1845 = vmatpush.msra.mxu0 %v1654
    %1846 = vmatpush.msra.mxu0 %v1648
    %1847 = vmatpush.msra.mxu0 %v1642
    %1848 = vmatpush.msra.mxu0 %v1636
    %1849 = vmatpush.msra.mxu0 %v1630
    %1850 = vmatpush.msra.mxu0 %v1624
    %1851 = vmatpush.msra.mxu0 %v1618
    %1852 = vmatmul.f32.gmra.mxu0 %v1376
    %v1853 = vpop.f32.mrf.mxu0
    %v1854 = vadd.f32 %v1834, %v1853
    %1855 = vdwg.mxu0
    %1856 = vmatpush.msra.mxu0 %v1804
    %1857 = vmatpush.msra.mxu0 %v1798
    %1858 = vmatpush.msra.mxu0 %v1792
    %1859 = vmatpush.msra.mxu0 %v1786
    %1860 = vmatpush.msra.mxu0 %v1780
    %1861 = vmatpush.msra.mxu0 %v1774
    %1862 = vmatpush.msra.mxu0 %v1768
    %1863 = vmatpush.msra.mxu0 %v1762
    %1864 = vmatpush.msra.mxu0 %v1756
    %1865 = vmatpush.msra.mxu0 %v1750
    %1866 = vmatpush.msra.mxu0 %v1744
    %1867 = vmatpush.msra.mxu0 %v1738
    %1868 = vmatpush.msra.mxu0 %v1732
    %1869 = vmatpush.msra.mxu0 %v1726
    %1870 = vmatpush.msra.mxu0 %v1720
    %1871 = vmatpush.msra.mxu0 %v1714
    %1872 = vmatmul.f32.gmra.mxu0 %v1377
    %v1873 = vpop.f32.mrf.mxu0
    %v1874 = vadd.f32 %v1854, %v1873
    %1875 = vdwg.mxu0
    %1876 = vmatpush.msra.mxu0 %v1613
    %1877 = vmatpush.msra.mxu0 %v1607
    %1878 = vmatpush.msra.mxu0 %v1601
    %1879 = vmatpush.msra.mxu0 %v1595
    %1880 = vmatpush.msra.mxu0 %v1589
    %1881 = vmatpush.msra.mxu0 %v1583
    %1882 = vmatpush.msra.mxu0 %v1577
    %1883 = vmatpush.msra.mxu0 %v1571
    %1884 = vmatpush.msra.mxu0 %v1565
    %1885 = vmatpush.msra.mxu0 %v1559
    %1886 = vmatpush.msra.mxu0 %v1553
    %1887 = vmatpush.msra.mxu0 %v1547
    %1888 = vmatpush.msra.mxu0 %v1541
    %1889 = vmatpush.msra.mxu0 %v1535
    %1890 = vmatpush.msra.mxu0 %v1529
    %1891 = vmatpush.msra.mxu0 %v1523
    %1892 = vmatmul.f32.gmra.mxu0 %v1375
    %v1893 = vpop.f32.mrf.mxu0
    %v1894 = vadd.f32 %v1811, %v1893
    %1895 = vdwg.mxu0
    %1896 = vmatpush.msra.mxu0 %v1709
    %1897 = vmatpush.msra.mxu0 %v1703
    %1898 = vmatpush.msra.mxu0 %v1697
    %1899 = vmatpush.msra.mxu0 %v1691
    %1900 = vmatpush.msra.mxu0 %v1685
    %1901 = vmatpush.msra.mxu0 %v1679
    %1902 = vmatpush.msra.mxu0 %v1673
    %1903 = vmatpush.msra.mxu0 %v1667
    %1904 = vmatpush.msra.mxu0 %v1661
    %1905 = vmatpush.msra.mxu0 %v1655
    %1906 = vmatpush.msra.mxu0 %v1649
    %1907 = vmatpush.msra.mxu0 %v1643
    %1908 = vmatpush.msra.mxu0 %v1637
    %1909 = vmatpush.msra.mxu0 %v1631
    %1910 = vmatpush.msra.mxu0 %v1625
    %1911 = vmatpush.msra.mxu0 %v1619
    %1912 = vmatmul.f32.gmra.mxu0 %v1376
    %v1913 = vpop.f32.mrf.mxu0
    %v1914 = vadd.f32 %v1894, %v1913
    %1915 = vdwg.mxu0
    %1916 = vmatpush.msra.mxu0 %v1805
    %1917 = vmatpush.msra.mxu0 %v1799
    %1918 = vmatpush.msra.mxu0 %v1793
    %1919 = vmatpush.msra.mxu0 %v1787
    %1920 = vmatpush.msra.mxu0 %v1781
    %1921 = vmatpush.msra.mxu0 %v1775
    %1922 = vmatpush.msra.mxu0 %v1769
    %1923 = vmatpush.msra.mxu0 %v1763
    %1924 = vmatpush.msra.mxu0 %v1757
    %1925 = vmatpush.msra.mxu0 %v1751
    %1926 = vmatpush.msra.mxu0 %v1745
    %1927 = vmatpush.msra.mxu0 %v1739
    %1928 = vmatpush.msra.mxu0 %v1733
    %1929 = vmatpush.msra.mxu0 %v1727
    %1930 = vmatpush.msra.mxu0 %v1721
    %1931 = vmatpush.msra.mxu0 %v1715
    %1932 = vmatmul.f32.gmra.mxu0 %v1377
    %v1933 = vpop.f32.mrf.mxu0
    %v1934 = vadd.f32 %v1914, %v1933
    %1935 = vdwg.mxu0
    %1936 = vmatpush.msra.mxu0 %v1614
    %1937 = vmatpush.msra.mxu0 %v1608
    %1938 = vmatpush.msra.mxu0 %v1602
    %1939 = vmatpush.msra.mxu0 %v1596
    %1940 = vmatpush.msra.mxu0 %v1590
    %1941 = vmatpush.msra.mxu0 %v1584
    %1942 = vmatpush.msra.mxu0 %v1578
    %1943 = vmatpush.msra.mxu0 %v1572
    %1944 = vmatpush.msra.mxu0 %v1566
    %1945 = vmatpush.msra.mxu0 %v1560
    %1946 = vmatpush.msra.mxu0 %v1554
    %1947 = vmatpush.msra.mxu0 %v1548
    %1948 = vmatpush.msra.mxu0 %v1542
    %1949 = vmatpush.msra.mxu0 %v1536
    %1950 = vmatpush.msra.mxu0 %v1530
    %1951 = vmatpush.msra.mxu0 %v1524
    %1952 = vmatmul.f32.gmra.mxu0 %v1375
    %v1953 = vpop.f32.mrf.mxu0
    %v1954 = vadd.f32 %v1812, %v1953
    %1955 = vdwg.mxu0
    %1956 = vmatpush.msra.mxu0 %v1710
    %1957 = vmatpush.msra.mxu0 %v1704
    %1958 = vmatpush.msra.mxu0 %v1698
    %1959 = vmatpush.msra.mxu0 %v1692
    %1960 = vmatpush.msra.mxu0 %v1686
    %1961 = vmatpush.msra.mxu0 %v1680
    %1962 = vmatpush.msra.mxu0 %v1674
    %1963 = vmatpush.msra.mxu0 %v1668
    %1964 = vmatpush.msra.mxu0 %v1662
    %1965 = vmatpush.msra.mxu0 %v1656
    %1966 = vmatpush.msra.mxu0 %v1650
    %1967 = vmatpush.msra.mxu0 %v1644
    %1968 = vmatpush.msra.mxu0 %v1638
    %1969 = vmatpush.msra.mxu0 %v1632
    %1970 = vmatpush.msra.mxu0 %v1626
    %1971 = vmatpush.msra.mxu0 %v1620
    %1972 = vmatmul.f32.gmra.mxu0 %v1376
    %v1973 = vpop.f32.mrf.mxu0
    %v1974 = vadd.f32 %v1954, %v1973
    %1975 = vdwg.mxu0
    %1976 = vmatpush.msra.mxu0 %v1806
    %1977 = vmatpush.msra.mxu0 %v1800
    %1978 = vmatpush.msra.mxu0 %v1794
    %1979 = vmatpush.msra.mxu0 %v1788
    %1980 = vmatpush.msra.mxu0 %v1782
    %1981 = vmatpush.msra.mxu0 %v1776
    %1982 = vmatpush.msra.mxu0 %v1770
    %1983 = vmatpush.msra.mxu0 %v1764
    %1984 = vmatpush.msra.mxu0 %v1758
    %1985 = vmatpush.msra.mxu0 %v1752
    %1986 = vmatpush.msra.mxu0 %v1746
    %1987 = vmatpush.msra.mxu0 %v1740
    %1988 = vmatpush.msra.mxu0 %v1734
    %1989 = vmatpush.msra.mxu0 %v1728
    %1990 = vmatpush.msra.mxu0 %v1722
    %1991 = vmatpush.msra.mxu0 %v1716
    %1992 = vmatmul.f32.gmra.mxu0 %v1377
    %v1993 = vpop.f32.mrf.mxu0
    %v1994 = vadd.f32 %v1974, %v1993
    %1995 = vdwg.mxu0
    %1996 = vmatpush.msra.mxu0 %v1615
    %1997 = vmatpush.msra.mxu0 %v1609
    %1998 = vmatpush.msra.mxu0 %v1603
    %1999 = vmatpush.msra.mxu0 %v1597
    %2000 = vmatpush.msra.mxu0 %v1591
    %2001 = vmatpush.msra.mxu0 %v1585
    %2002 = vmatpush.msra.mxu0 %v1579
    %2003 = vmatpush.msra.mxu0 %v1573
    %2004 = vmatpush.msra.mxu0 %v1567
    %2005 = vmatpush.msra.mxu0 %v1561
    %2006 = vmatpush.msra.mxu0 %v1555
    %2007 = vmatpush.msra.mxu0 %v1549
    %2008 = vmatpush.msra.mxu0 %v1543
    %2009 = vmatpush.msra.mxu0 %v1537
    %2010 = vmatpush.msra.mxu0 %v1531
    %2011 = vmatpush.msra.mxu0 %v1525
    %2012 = vmatmul.f32.gmra.mxu0 %v1375
    %v2013 = vpop.f32.mrf.mxu0
    %v2014 = vadd.f32 %v1813, %v2013
    %2015 = vdwg.mxu0
    %2016 = vmatpush.msra.mxu0 %v1711
    %2017 = vmatpush.msra.mxu0 %v1705
    %2018 = vmatpush.msra.mxu0 %v1699
    %2019 = vmatpush.msra.mxu0 %v1693
    %2020 = vmatpush.msra.mxu0 %v1687
    %2021 = vmatpush.msra.mxu0 %v1681
    %2022 = vmatpush.msra.mxu0 %v1675
    %2023 = vmatpush.msra.mxu0 %v1669
    %2024 = vmatpush.msra.mxu0 %v1663
    %2025 = vmatpush.msra.mxu0 %v1657
    %2026 = vmatpush.msra.mxu0 %v1651
    %2027 = vmatpush.msra.mxu0 %v1645
    %2028 = vmatpush.msra.mxu0 %v1639
    %2029 = vmatpush.msra.mxu0 %v1633
    %2030 = vmatpush.msra.mxu0 %v1627
    %2031 = vmatpush.msra.mxu0 %v1621
    %2032 = vmatmul.f32.gmra.mxu0 %v1376
    %v2033 = vpop.f32.mrf.mxu0
    %v2034 = vadd.f32 %v2014, %v2033
    %2035 = vdwg.mxu0
    %2036 = vmatpush.msra.mxu0 %v1807
    %2037 = vmatpush.msra.mxu0 %v1801
    %2038 = vmatpush.msra.mxu0 %v1795
    %2039 = vmatpush.msra.mxu0 %v1789
    %2040 = vmatpush.msra.mxu0 %v1783
    %2041 = vmatpush.msra.mxu0 %v1777
    %2042 = vmatpush.msra.mxu0 %v1771
    %2043 = vmatpush.msra.mxu0 %v1765
    %2044 = vmatpush.msra.mxu0 %v1759
    %2045 = vmatpush.msra.mxu0 %v1753
    %2046 = vmatpush.msra.mxu0 %v1747
    %2047 = vmatpush.msra.mxu0 %v1741
    %2048 = vmatpush.msra.mxu0 %v1735
    %2049 = vmatpush.msra.mxu0 %v1729
    %2050 = vmatpush.msra.mxu0 %v1723
    %2051 = vmatpush.msra.mxu0 %v1717
    %2052 = vmatmul.f32.gmra.mxu0 %v1377
    %v2053 = vpop.f32.mrf.mxu0
    %v2054 = vadd.f32 %v2034, %v2053
    %2055 = vdwg.mxu0
    %2056 = vmatpush.msra.mxu0 %v1616
    %2057 = vmatpush.msra.mxu0 %v1610
    %2058 = vmatpush.msra.mxu0 %v1604
    %2059 = vmatpush.msra.mxu0 %v1598
    %2060 = vmatpush.msra.mxu0 %v1592
    %2061 = vmatpush.msra.mxu0 %v1586
    %2062 = vmatpush.msra.mxu0 %v1580
    %2063 = vmatpush.msra.mxu0 %v1574
    %2064 = vmatpush.msra.mxu0 %v1568
    %2065 = vmatpush.msra.mxu0 %v1562
    %2066 = vmatpush.msra.mxu0 %v1556
    %2067 = vmatpush.msra.mxu0 %v1550
    %2068 = vmatpush.msra.mxu0 %v1544
    %2069 = vmatpush.msra.mxu0 %v1538
    %2070 = vmatpush.msra.mxu0 %v1532
    %2071 = vmatpush.msra.mxu0 %v1526
    %2072 = vmatmul.f32.gmra.mxu0 %v1375
    %v2073 = vpop.f32.mrf.mxu0
    %v2074 = vadd.f32 %v1814, %v2073
    %2075 = vdwg.mxu0
    %2076 = vmatpush.msra.mxu0 %v1712
    %2077 = vmatpush.msra.mxu0 %v1706
    %2078 = vmatpush.msra.mxu0 %v1700
    %2079 = vmatpush.msra.mxu0 %v1694
    %2080 = vmatpush.msra.mxu0 %v1688
    %2081 = vmatpush.msra.mxu0 %v1682
    %2082 = vmatpush.msra.mxu0 %v1676
    %2083 = vmatpush.msra.mxu0 %v1670
    %2084 = vmatpush.msra.mxu0 %v1664
    %2085 = vmatpush.msra.mxu0 %v1658
    %2086 = vmatpush.msra.mxu0 %v1652
    %2087 = vmatpush.msra.mxu0 %v1646
    %2088 = vmatpush.msra.mxu0 %v1640
    %2089 = vmatpush.msra.mxu0 %v1634
    %2090 = vmatpush.msra.mxu0 %v1628
    %2091 = vmatpush.msra.mxu0 %v1622
    %2092 = vmatmul.f32.gmra.mxu0 %v1376
    %v2093 = vpop.f32.mrf.mxu0
    %v2094 = vadd.f32 %v2074, %v2093
    %2095 = vdwg.mxu0
    %2096 = vmatpush.msra.mxu0 %v1808
    %2097 = vmatpush.msra.mxu0 %v1802
    %2098 = vmatpush.msra.mxu0 %v1796
    %2099 = vmatpush.msra.mxu0 %v1790
    %2100 = vmatpush.msra.mxu0 %v1784
    %2101 = vmatpush.msra.mxu0 %v1778
    %2102 = vmatpush.msra.mxu0 %v1772
    %2103 = vmatpush.msra.mxu0 %v1766
    %2104 = vmatpush.msra.mxu0 %v1760
    %2105 = vmatpush.msra.mxu0 %v1754
    %2106 = vmatpush.msra.mxu0 %v1748
    %2107 = vmatpush.msra.mxu0 %v1742
    %2108 = vmatpush.msra.mxu0 %v1736
    %2109 = vmatpush.msra.mxu0 %v1730
    %2110 = vmatpush.msra.mxu0 %v1724
    %2111 = vmatpush.msra.mxu0 %v1718
    %2112 = vmatmul.f32.gmra.mxu0 %v1377
    %v2113 = vpop.f32.mrf.mxu0
    %v2114 = vadd.f32 %v2094, %v2113
    %2115 = vdwg.mxu0
    %2116 = vmatpush.msra.mxu0 %v1617
    %2117 = vmatpush.msra.mxu0 %v1611
    %2118 = vmatpush.msra.mxu0 %v1605
    %2119 = vmatpush.msra.mxu0 %v1599
    %2120 = vmatpush.msra.mxu0 %v1593
    %2121 = vmatpush.msra.mxu0 %v1587
    %2122 = vmatpush.msra.mxu0 %v1581
    %2123 = vmatpush.msra.mxu0 %v1575
    %2124 = vmatpush.msra.mxu0 %v1569
    %2125 = vmatpush.msra.mxu0 %v1563
    %2126 = vmatpush.msra.mxu0 %v1557
    %2127 = vmatpush.msra.mxu0 %v1551
    %2128 = vmatpush.msra.mxu0 %v1545
    %2129 = vmatpush.msra.mxu0 %v1539
    %2130 = vmatpush.msra.mxu0 %v1533
    %2131 = vmatpush.msra.mxu0 %v1527
    %2132 = vmatmul.f32.gmra.mxu0 %v1375
    %v2133 = vpop.f32.mrf.mxu0
    %v2134 = vadd.f32 %v1815, %v2133
    %2135 = vdwg.mxu0
    %2136 = vmatpush.msra.mxu0 %v1713
    %2137 = vmatpush.msra.mxu0 %v1707
    %2138 = vmatpush.msra.mxu0 %v1701
    %2139 = vmatpush.msra.mxu0 %v1695
    %2140 = vmatpush.msra.mxu0 %v1689
    %2141 = vmatpush.msra.mxu0 %v1683
    %2142 = vmatpush.msra.mxu0 %v1677
    %2143 = vmatpush.msra.mxu0 %v1671
    %2144 = vmatpush.msra.mxu0 %v1665
    %2145 = vmatpush.msra.mxu0 %v1659
    %2146 = vmatpush.msra.mxu0 %v1653
    %2147 = vmatpush.msra.mxu0 %v1647
    %2148 = vmatpush.msra.mxu0 %v1641
    %2149 = vmatpush.msra.mxu0 %v1635
    %2150 = vmatpush.msra.mxu0 %v1629
    %2151 = vmatpush.msra.mxu0 %v1623
    %2152 = vmatmul.f32.gmra.mxu0 %v1376
    %v2153 = vpop.f32.mrf.mxu0
    %v2154 = vadd.f32 %v2134, %v2153
    %2155 = vdwg.mxu0
    %2156 = vmatpush.msra.mxu0 %v1809
    %2157 = vmatpush.msra.mxu0 %v1803
    %2158 = vmatpush.msra.mxu0 %v1797
    %2159 = vmatpush.msra.mxu0 %v1791
    %2160 = vmatpush.msra.mxu0 %v1785
    %2161 = vmatpush.msra.mxu0 %v1779
    %2162 = vmatpush.msra.mxu0 %v1773
    %2163 = vmatpush.msra.mxu0 %v1767
    %2164 = vmatpush.msra.mxu0 %v1761
    %2165 = vmatpush.msra.mxu0 %v1755
    %2166 = vmatpush.msra.mxu0 %v1749
    %2167 = vmatpush.msra.mxu0 %v1743
    %2168 = vmatpush.msra.mxu0 %v1737
    %2169 = vmatpush.msra.mxu0 %v1731
    %2170 = vmatpush.msra.mxu0 %v1725
    %2171 = vmatpush.msra.mxu0 %v1719
    %2172 = vmatmul.f32.gmra.mxu0 %v1377
    %v2173 = vpop.f32.mrf.mxu0
    %v2174 = vadd.f32 %v2154, %v2173
    %2175 = vdwg.mxu0
    %v2176 = vld [vmem:[#allocation4] sm:$0xff]
    %v2177 = vld [vmem:[#allocation4 + $0x8] sm:$0xff]
    %v2178 = vld [vmem:[#allocation4 + $0x10] sm:$0xff]
    %v2179 = vld [vmem:[#allocation4 + $0x1c] sm:$0xff]
    %v2180 = vld [vmem:[#allocation4 + $0x24] sm:$0xff]
    %v2181 = vld [vmem:[#allocation4 + $0x2c] sm:$0xff]
    %v2182 = vld [vmem:[#allocation4 + $0x38] sm:$0xff]
    %v2183 = vld [vmem:[#allocation4 + $0x40] sm:$0xff]
    %v2184 = vld [vmem:[#allocation4 + $0x48] sm:$0xff]
    %v2185 = vld [vmem:[#allocation4 + $0x54] sm:$0xff]
    %v2186 = vld [vmem:[#allocation4 + $0x5c] sm:$0xff]
    %v2187 = vld [vmem:[#allocation4 + $0x64] sm:$0xff]
    %v2188 = vld [vmem:[#allocation4 + $0x70] sm:$0xff]
    %v2189 = vld [vmem:[#allocation4 + $0x78] sm:$0xff]
    %v2190 = vld [vmem:[#allocation4 + $0x80] sm:$0xff]
    %v2191 = vld [vmem:[#allocation4 + $0x8c] sm:$0xff]
    %v2192 = vld [vmem:[#allocation4 + $0x94] sm:$0xff]
    %v2193 = vld [vmem:[#allocation4 + $0x9c] sm:$0xff]
    %v2194 = vld [vmem:[#allocation4 + $0xa8] sm:$0xff]
    %v2195 = vld [vmem:[#allocation4 + $0xb0] sm:$0xff]
    %v2196 = vld [vmem:[#allocation4 + $0xb8] sm:$0xff]
    %v2197 = vld [vmem:[#allocation4 + $0xc4] sm:$0xff]
    %v2198 = vld [vmem:[#allocation4 + $0xcc] sm:$0xff]
    %v2199 = vld [vmem:[#allocation4 + $0xd4] sm:$0xff]
    %v2200 = vld [vmem:[#allocation4 + $0xe0] sm:$0xff]
    %v2201 = vld [vmem:[#allocation4 + $0xe8] sm:$0xff]
    %v2202 = vld [vmem:[#allocation4 + $0xf0] sm:$0xff]
    %v2203 = vld [vmem:[#allocation4 + $0xfc] sm:$0xff]
    %v2204 = vld [vmem:[#allocation4 + $0x104] sm:$0xff]
    %v2205 = vld [vmem:[#allocation4 + $0x10c] sm:$0xff]
    %v2206 = vld [vmem:[#allocation4 + $0x118] sm:$0xff]
    %v2207 = vld [vmem:[#allocation4 + $0x120] sm:$0xff]
    %v2208 = vld [vmem:[#allocation4 + $0x128] sm:$0xff]
    %v2209 = vld [vmem:[#allocation4 + $0x134] sm:$0xff]
    %v2210 = vld [vmem:[#allocation4 + $0x13c] sm:$0xff]
    %v2211 = vld [vmem:[#allocation4 + $0x144] sm:$0xff]
    %v2212 = vld [vmem:[#allocation4 + $0x150] sm:$0xff]
    %v2213 = vld [vmem:[#allocation4 + $0x158] sm:$0xff]
    %v2214 = vld [vmem:[#allocation4 + $0x160] sm:$0xff]
    %v2215 = vld [vmem:[#allocation4 + $0x16c] sm:$0xff]
    %v2216 = vld [vmem:[#allocation4 + $0x174] sm:$0xff]
    %v2217 = vld [vmem:[#allocation4 + $0x17c] sm:$0xff]
    %v2218 = vld [vmem:[#allocation4 + $0x188] sm:$0xff]
    %v2219 = vld [vmem:[#allocation4 + $0x190] sm:$0xff]
    %v2220 = vld [vmem:[#allocation4 + $0x198] sm:$0xff]
    %v2221 = vld [vmem:[#allocation4 + $0x1a4] sm:$0xff]
    %v2222 = vld [vmem:[#allocation4 + $0x1ac] sm:$0xff]
    %v2223 = vld [vmem:[#allocation4 + $0x1b4] sm:$0xff]
    %v2224 = vld [vmem:[#allocation4 + $0x1c0] sm:$0xff]
    %v2225 = vld [vmem:[#allocation4 + $0x1c8] sm:$0xff]
    %v2226 = vld [vmem:[#allocation4 + $0x1d0] sm:$0xff]
    %v2227 = vld [vmem:[#allocation4 + $0x1dc] sm:$0xff]
    %v2228 = vld [vmem:[#allocation4 + $0x1e4] sm:$0xff]
    %v2229 = vld [vmem:[#allocation4 + $0x1ec] sm:$0xff]
    %v2230 = vld [vmem:[#allocation4 + $0x1f8] sm:$0xff]
    %v2231 = vld [vmem:[#allocation4 + $0x200] sm:$0xff]
    %v2232 = vld [vmem:[#allocation4 + $0x208] sm:$0xff]
    %v2233 = vld [vmem:[#allocation4 + $0x214] sm:$0xff]
    %v2234 = vld [vmem:[#allocation4 + $0x21c] sm:$0xff]
    %v2235 = vld [vmem:[#allocation4 + $0x224] sm:$0xff]
    %v2236 = vld [vmem:[#allocation4 + $0x230] sm:$0xff]
    %v2237 = vld [vmem:[#allocation4 + $0x238] sm:$0xff]
    %v2238 = vld [vmem:[#allocation4 + $0x240] sm:$0xff]
    %v2239 = vld [vmem:[#allocation4 + $0x24c] sm:$0xff]
    %v2240 = vld [vmem:[#allocation4 + $0x254] sm:$0xff]
    %v2241 = vld [vmem:[#allocation4 + $0x25c] sm:$0xff]
    %v2242 = vld [vmem:[#allocation4 + $0x268] sm:$0xff]
    %v2243 = vld [vmem:[#allocation4 + $0x270] sm:$0xff]
    %v2244 = vld [vmem:[#allocation4 + $0x278] sm:$0xff]
    %v2245 = vld [vmem:[#allocation4 + $0x284] sm:$0xff]
    %v2246 = vld [vmem:[#allocation4 + $0x28c] sm:$0xff]
    %v2247 = vld [vmem:[#allocation4 + $0x294] sm:$0xff]
    %v2248 = vld [vmem:[#allocation4 + $0x2a0] sm:$0xff]
    %v2249 = vld [vmem:[#allocation4 + $0x2a8] sm:$0xff]
    %v2250 = vld [vmem:[#allocation4 + $0x2b0] sm:$0xff]
    %v2251 = vld [vmem:[#allocation4 + $0x2bc] sm:$0xff]
    %v2252 = vld [vmem:[#allocation4 + $0x2c4] sm:$0xff]
    %v2253 = vld [vmem:[#allocation4 + $0x2cc] sm:$0xff]
    %v2254 = vld [vmem:[#allocation4 + $0x2d8] sm:$0xff]
    %v2255 = vld [vmem:[#allocation4 + $0x2e0] sm:$0xff]
    %v2256 = vld [vmem:[#allocation4 + $0x2e8] sm:$0xff]
    %v2257 = vld [vmem:[#allocation4 + $0x2f4] sm:$0xff]
    %v2258 = vld [vmem:[#allocation4 + $0x2fc] sm:$0xff]
    %v2259 = vld [vmem:[#allocation4 + $0x304] sm:$0xff]
    %v2260 = vld [vmem:[#allocation4 + $0x310] sm:$0xff]
    %v2261 = vld [vmem:[#allocation4 + $0x318] sm:$0xff]
    %v2262 = vld [vmem:[#allocation4 + $0x320] sm:$0xff]
    %v2263 = vld [vmem:[#allocation4 + $0x32c] sm:$0xff]
    %v2264 = vld [vmem:[#allocation4 + $0x334] sm:$0xff]
    %v2265 = vld [vmem:[#allocation4 + $0x33c] sm:$0xff]
    %v2266 = vld [vmem:[#allocation4 + $0x348] sm:$0xff]
    %v2267 = vld [vmem:[#allocation4 + $0x350] sm:$0xff]
    %v2268 = vld [vmem:[#allocation4 + $0x358] sm:$0xff]
    %v2269 = vld [vmem:[#allocation4 + $0x364] sm:$0xff]
    %v2270 = vld [vmem:[#allocation4 + $0x36c] sm:$0xff]
    %v2271 = vld [vmem:[#allocation4 + $0x374] sm:$0xff]
    %v2272 = vunpack.c.l.bf16 %v2176
    %v2273 = vunpack.c.h.bf16 %v2176
    %v2274 = vunpack.c.l.bf16 %v2177
    %v2275 = vunpack.c.h.bf16 %v2177
    %v2276 = vunpack.c.l.bf16 %v2178
    %v2277 = vunpack.c.h.bf16 %v2178
    %v2278 = vunpack.c.l.bf16 %v2179
    %v2279 = vunpack.c.h.bf16 %v2179
    %v2280 = vunpack.c.l.bf16 %v2180
    %v2281 = vunpack.c.h.bf16 %v2180
    %v2282 = vunpack.c.l.bf16 %v2181
    %v2283 = vunpack.c.h.bf16 %v2181
    %v2284 = vunpack.c.l.bf16 %v2182
    %v2285 = vunpack.c.h.bf16 %v2182
    %v2286 = vunpack.c.l.bf16 %v2183
    %v2287 = vunpack.c.h.bf16 %v2183
    %v2288 = vunpack.c.l.bf16 %v2184
    %v2289 = vunpack.c.h.bf16 %v2184
    %v2290 = vunpack.c.l.bf16 %v2185
    %v2291 = vunpack.c.h.bf16 %v2185
    %v2292 = vunpack.c.l.bf16 %v2186
    %v2293 = vunpack.c.h.bf16 %v2186
    %v2294 = vunpack.c.l.bf16 %v2187
    %v2295 = vunpack.c.h.bf16 %v2187
    %v2296 = vunpack.c.l.bf16 %v2188
    %v2297 = vunpack.c.h.bf16 %v2188
    %v2298 = vunpack.c.l.bf16 %v2189
    %v2299 = vunpack.c.h.bf16 %v2189
    %v2300 = vunpack.c.l.bf16 %v2190
    %v2301 = vunpack.c.h.bf16 %v2190
    %v2302 = vunpack.c.l.bf16 %v2191
    %v2303 = vunpack.c.h.bf16 %v2191
    %v2304 = vunpack.c.l.bf16 %v2192
    %v2305 = vunpack.c.h.bf16 %v2192
    %v2306 = vunpack.c.l.bf16 %v2193
    %v2307 = vunpack.c.h.bf16 %v2193
    %v2308 = vunpack.c.l.bf16 %v2194
    %v2309 = vunpack.c.h.bf16 %v2194
    %v2310 = vunpack.c.l.bf16 %v2195
    %v2311 = vunpack.c.h.bf16 %v2195
    %v2312 = vunpack.c.l.bf16 %v2196
    %v2313 = vunpack.c.h.bf16 %v2196
    %v2314 = vunpack.c.l.bf16 %v2197
    %v2315 = vunpack.c.h.bf16 %v2197
    %v2316 = vunpack.c.l.bf16 %v2198
    %v2317 = vunpack.c.h.bf16 %v2198
    %v2318 = vunpack.c.l.bf16 %v2199
    %v2319 = vunpack.c.h.bf16 %v2199
    %v2320 = vunpack.c.l.bf16 %v2200
    %v2321 = vunpack.c.h.bf16 %v2200
    %v2322 = vunpack.c.l.bf16 %v2201
    %v2323 = vunpack.c.h.bf16 %v2201
    %v2324 = vunpack.c.l.bf16 %v2202
    %v2325 = vunpack.c.h.bf16 %v2202
    %v2326 = vunpack.c.l.bf16 %v2203
    %v2327 = vunpack.c.h.bf16 %v2203
    %v2328 = vunpack.c.l.bf16 %v2204
    %v2329 = vunpack.c.h.bf16 %v2204
    %v2330 = vunpack.c.l.bf16 %v2205
    %v2331 = vunpack.c.h.bf16 %v2205
    %v2332 = vunpack.c.l.bf16 %v2206
    %v2333 = vunpack.c.h.bf16 %v2206
    %v2334 = vunpack.c.l.bf16 %v2207
    %v2335 = vunpack.c.h.bf16 %v2207
    %v2336 = vunpack.c.l.bf16 %v2208
    %v2337 = vunpack.c.h.bf16 %v2208
    %v2338 = vunpack.c.l.bf16 %v2209
    %v2339 = vunpack.c.h.bf16 %v2209
    %v2340 = vunpack.c.l.bf16 %v2210
    %v2341 = vunpack.c.h.bf16 %v2210
    %v2342 = vunpack.c.l.bf16 %v2211
    %v2343 = vunpack.c.h.bf16 %v2211
    %v2344 = vunpack.c.l.bf16 %v2212
    %v2345 = vunpack.c.h.bf16 %v2212
    %v2346 = vunpack.c.l.bf16 %v2213
    %v2347 = vunpack.c.h.bf16 %v2213
    %v2348 = vunpack.c.l.bf16 %v2214
    %v2349 = vunpack.c.h.bf16 %v2214
    %v2350 = vunpack.c.l.bf16 %v2215
    %v2351 = vunpack.c.h.bf16 %v2215
    %v2352 = vunpack.c.l.bf16 %v2216
    %v2353 = vunpack.c.h.bf16 %v2216
    %v2354 = vunpack.c.l.bf16 %v2217
    %v2355 = vunpack.c.h.bf16 %v2217
    %v2356 = vunpack.c.l.bf16 %v2218
    %v2357 = vunpack.c.h.bf16 %v2218
    %v2358 = vunpack.c.l.bf16 %v2219
    %v2359 = vunpack.c.h.bf16 %v2219
    %v2360 = vunpack.c.l.bf16 %v2220
    %v2361 = vunpack.c.h.bf16 %v2220
    %v2362 = vunpack.c.l.bf16 %v2221
    %v2363 = vunpack.c.h.bf16 %v2221
    %v2364 = vunpack.c.l.bf16 %v2222
    %v2365 = vunpack.c.h.bf16 %v2222
    %v2366 = vunpack.c.l.bf16 %v2223
    %v2367 = vunpack.c.h.bf16 %v2223
    %v2368 = vunpack.c.l.bf16 %v2224
    %v2369 = vunpack.c.h.bf16 %v2224
    %v2370 = vunpack.c.l.bf16 %v2225
    %v2371 = vunpack.c.h.bf16 %v2225
    %v2372 = vunpack.c.l.bf16 %v2226
    %v2373 = vunpack.c.h.bf16 %v2226
    %v2374 = vunpack.c.l.bf16 %v2227
    %v2375 = vunpack.c.h.bf16 %v2227
    %v2376 = vunpack.c.l.bf16 %v2228
    %v2377 = vunpack.c.h.bf16 %v2228
    %v2378 = vunpack.c.l.bf16 %v2229
    %v2379 = vunpack.c.h.bf16 %v2229
    %v2380 = vunpack.c.l.bf16 %v2230
    %v2381 = vunpack.c.h.bf16 %v2230
    %v2382 = vunpack.c.l.bf16 %v2231
    %v2383 = vunpack.c.h.bf16 %v2231
    %v2384 = vunpack.c.l.bf16 %v2232
    %v2385 = vunpack.c.h.bf16 %v2232
    %v2386 = vunpack.c.l.bf16 %v2233
    %v2387 = vunpack.c.h.bf16 %v2233
    %v2388 = vunpack.c.l.bf16 %v2234
    %v2389 = vunpack.c.h.bf16 %v2234
    %v2390 = vunpack.c.l.bf16 %v2235
    %v2391 = vunpack.c.h.bf16 %v2235
    %v2392 = vunpack.c.l.bf16 %v2236
    %v2393 = vunpack.c.h.bf16 %v2236
    %v2394 = vunpack.c.l.bf16 %v2237
    %v2395 = vunpack.c.h.bf16 %v2237
    %v2396 = vunpack.c.l.bf16 %v2238
    %v2397 = vunpack.c.h.bf16 %v2238
    %v2398 = vunpack.c.l.bf16 %v2239
    %v2399 = vunpack.c.h.bf16 %v2239
    %v2400 = vunpack.c.l.bf16 %v2240
    %v2401 = vunpack.c.h.bf16 %v2240
    %v2402 = vunpack.c.l.bf16 %v2241
    %v2403 = vunpack.c.h.bf16 %v2241
    %v2404 = vunpack.c.l.bf16 %v2242
    %v2405 = vunpack.c.h.bf16 %v2242
    %v2406 = vunpack.c.l.bf16 %v2243
    %v2407 = vunpack.c.h.bf16 %v2243
    %v2408 = vunpack.c.l.bf16 %v2244
    %v2409 = vunpack.c.h.bf16 %v2244
    %v2410 = vunpack.c.l.bf16 %v2245
    %v2411 = vunpack.c.h.bf16 %v2245
    %v2412 = vunpack.c.l.bf16 %v2246
    %v2413 = vunpack.c.h.bf16 %v2246
    %v2414 = vunpack.c.l.bf16 %v2247
    %v2415 = vunpack.c.h.bf16 %v2247
    %v2416 = vunpack.c.l.bf16 %v2248
    %v2417 = vunpack.c.h.bf16 %v2248
    %v2418 = vunpack.c.l.bf16 %v2249
    %v2419 = vunpack.c.h.bf16 %v2249
    %v2420 = vunpack.c.l.bf16 %v2250
    %v2421 = vunpack.c.h.bf16 %v2250
    %v2422 = vunpack.c.l.bf16 %v2251
    %v2423 = vunpack.c.h.bf16 %v2251
    %v2424 = vunpack.c.l.bf16 %v2252
    %v2425 = vunpack.c.h.bf16 %v2252
    %v2426 = vunpack.c.l.bf16 %v2253
    %v2427 = vunpack.c.h.bf16 %v2253
    %v2428 = vunpack.c.l.bf16 %v2254
    %v2429 = vunpack.c.h.bf16 %v2254
    %v2430 = vunpack.c.l.bf16 %v2255
    %v2431 = vunpack.c.h.bf16 %v2255
    %v2432 = vunpack.c.l.bf16 %v2256
    %v2433 = vunpack.c.h.bf16 %v2256
    %v2434 = vunpack.c.l.bf16 %v2257
    %v2435 = vunpack.c.h.bf16 %v2257
    %v2436 = vunpack.c.l.bf16 %v2258
    %v2437 = vunpack.c.h.bf16 %v2258
    %v2438 = vunpack.c.l.bf16 %v2259
    %v2439 = vunpack.c.h.bf16 %v2259
    %v2440 = vunpack.c.l.bf16 %v2260
    %v2441 = vunpack.c.h.bf16 %v2260
    %v2442 = vunpack.c.l.bf16 %v2261
    %v2443 = vunpack.c.h.bf16 %v2261
    %v2444 = vunpack.c.l.bf16 %v2262
    %v2445 = vunpack.c.h.bf16 %v2262
    %v2446 = vunpack.c.l.bf16 %v2263
    %v2447 = vunpack.c.h.bf16 %v2263
    %v2448 = vunpack.c.l.bf16 %v2264
    %v2449 = vunpack.c.h.bf16 %v2264
    %v2450 = vunpack.c.l.bf16 %v2265
    %v2451 = vunpack.c.h.bf16 %v2265
    %v2452 = vunpack.c.l.bf16 %v2266
    %v2453 = vunpack.c.h.bf16 %v2266
    %v2454 = vunpack.c.l.bf16 %v2267
    %v2455 = vunpack.c.h.bf16 %v2267
    %v2456 = vunpack.c.l.bf16 %v2268
    %v2457 = vunpack.c.h.bf16 %v2268
    %v2458 = vunpack.c.l.bf16 %v2269
    %v2459 = vunpack.c.h.bf16 %v2269
    %v2460 = vunpack.c.l.bf16 %v2270
    %v2461 = vunpack.c.h.bf16 %v2270
    %v2462 = vunpack.c.l.bf16 %v2271
    %v2463 = vunpack.c.h.bf16 %v2271
    %v2464 = vld [vmem:[#allocation7 + $0x90] sm:$0xff]
    %v2465 = vld [vmem:[#allocation7 + $0x98] sm:$0xff]
    %v2466 = vld [vmem:[#allocation7 + $0xa0] sm:$0xff]
    %v2467 = vld [vmem:[#allocation7 + $0xa8] sm:$0xff]
    %v2468 = vld [vmem:[#allocation7 + $0xb0] sm:$0xff]
    %v2469 = vld [vmem:[#allocation7 + $0xb8] sm:$0xff]
    %2470 = vmatpush.msra.mxu0 %v2362
    %2471 = vmatpush.msra.mxu0 %v2356
    %2472 = vmatpush.msra.mxu0 %v2350
    %2473 = vmatpush.msra.mxu0 %v2344
    %2474 = vmatpush.msra.mxu0 %v2338
    %2475 = vmatpush.msra.mxu0 %v2332
    %2476 = vmatpush.msra.mxu0 %v2326
    %2477 = vmatpush.msra.mxu0 %v2320
    %2478 = vmatpush.msra.mxu0 %v2314
    %2479 = vmatpush.msra.mxu0 %v2308
    %2480 = vmatpush.msra.mxu0 %v2302
    %2481 = vmatpush.msra.mxu0 %v2296
    %2482 = vmatpush.msra.mxu0 %v2290
    %2483 = vmatpush.msra.mxu0 %v2284
    %2484 = vmatpush.msra.mxu0 %v2278
    %2485 = vmatpush.msra.mxu0 %v2272
    %2486 = vmatmul.f32.gmra.mxu0 %v84
    %v2487 = vpop.f32.mrf.mxu0
    %v2488 = vadd.f32 %v2464, %v2487
    %2489 = vdwg.mxu0
    %2490 = vmatpush.msra.mxu0 %v2458
    %2491 = vmatpush.msra.mxu0 %v2452
    %2492 = vmatpush.msra.mxu0 %v2446
    %2493 = vmatpush.msra.mxu0 %v2440
    %2494 = vmatpush.msra.mxu0 %v2434
    %2495 = vmatpush.msra.mxu0 %v2428
    %2496 = vmatpush.msra.mxu0 %v2422
    %2497 = vmatpush.msra.mxu0 %v2416
    %2498 = vmatpush.msra.mxu0 %v2410
    %2499 = vmatpush.msra.mxu0 %v2404
    %2500 = vmatpush.msra.mxu0 %v2398
    %2501 = vmatpush.msra.mxu0 %v2392
    %2502 = vmatpush.msra.mxu0 %v2386
    %2503 = vmatpush.msra.mxu0 %v2380
    %2504 = vmatpush.msra.mxu0 %v2374
    %2505 = vmatpush.msra.mxu0 %v2368
    %2506 = vmatmul.f32.gmra.mxu0 %v85
    %v2507 = vpop.f32.mrf.mxu0
    %v2508 = vadd.f32 %v2488, %v2507
    %2509 = vdwg.mxu0
    %2510 = vmatpush.msra.mxu0 %v2363
    %2511 = vmatpush.msra.mxu0 %v2357
    %2512 = vmatpush.msra.mxu0 %v2351
    %2513 = vmatpush.msra.mxu0 %v2345
    %2514 = vmatpush.msra.mxu0 %v2339
    %2515 = vmatpush.msra.mxu0 %v2333
    %2516 = vmatpush.msra.mxu0 %v2327
    %2517 = vmatpush.msra.mxu0 %v2321
    %2518 = vmatpush.msra.mxu0 %v2315
    %2519 = vmatpush.msra.mxu0 %v2309
    %2520 = vmatpush.msra.mxu0 %v2303
    %2521 = vmatpush.msra.mxu0 %v2297
    %2522 = vmatpush.msra.mxu0 %v2291
    %2523 = vmatpush.msra.mxu0 %v2285
    %2524 = vmatpush.msra.mxu0 %v2279
    %2525 = vmatpush.msra.mxu0 %v2273
    %2526 = vmatmul.f32.gmra.mxu0 %v84
    %v2527 = vpop.f32.mrf.mxu0
    %v2528 = vadd.f32 %v2465, %v2527
    %2529 = vdwg.mxu0
    %2530 = vmatpush.msra.mxu0 %v2459
    %2531 = vmatpush.msra.mxu0 %v2453
    %2532 = vmatpush.msra.mxu0 %v2447
    %2533 = vmatpush.msra.mxu0 %v2441
    %2534 = vmatpush.msra.mxu0 %v2435
    %2535 = vmatpush.msra.mxu0 %v2429
    %2536 = vmatpush.msra.mxu0 %v2423
    %2537 = vmatpush.msra.mxu0 %v2417
    %2538 = vmatpush.msra.mxu0 %v2411
    %2539 = vmatpush.msra.mxu0 %v2405
    %2540 = vmatpush.msra.mxu0 %v2399
    %2541 = vmatpush.msra.mxu0 %v2393
    %2542 = vmatpush.msra.mxu0 %v2387
    %2543 = vmatpush.msra.mxu0 %v2381
    %2544 = vmatpush.msra.mxu0 %v2375
    %2545 = vmatpush.msra.mxu0 %v2369
    %2546 = vmatmul.f32.gmra.mxu0 %v85
    %v2547 = vpop.f32.mrf.mxu0
    %v2548 = vadd.f32 %v2528, %v2547
    %2549 = vdwg.mxu0
    %2550 = vmatpush.msra.mxu0 %v2364
    %2551 = vmatpush.msra.mxu0 %v2358
    %2552 = vmatpush.msra.mxu0 %v2352
    %2553 = vmatpush.msra.mxu0 %v2346
    %2554 = vmatpush.msra.mxu0 %v2340
    %2555 = vmatpush.msra.mxu0 %v2334
    %2556 = vmatpush.msra.mxu0 %v2328
    %2557 = vmatpush.msra.mxu0 %v2322
    %2558 = vmatpush.msra.mxu0 %v2316
    %2559 = vmatpush.msra.mxu0 %v2310
    %2560 = vmatpush.msra.mxu0 %v2304
    %2561 = vmatpush.msra.mxu0 %v2298
    %2562 = vmatpush.msra.mxu0 %v2292
    %2563 = vmatpush.msra.mxu0 %v2286
    %2564 = vmatpush.msra.mxu0 %v2280
    %2565 = vmatpush.msra.mxu0 %v2274
    %2566 = vmatmul.f32.gmra.mxu0 %v84
    %v2567 = vpop.f32.mrf.mxu0
    %v2568 = vadd.f32 %v2466, %v2567
    %2569 = vdwg.mxu0
    %2570 = vmatpush.msra.mxu0 %v2460
    %2571 = vmatpush.msra.mxu0 %v2454
    %2572 = vmatpush.msra.mxu0 %v2448
    %2573 = vmatpush.msra.mxu0 %v2442
    %2574 = vmatpush.msra.mxu0 %v2436
    %2575 = vmatpush.msra.mxu0 %v2430
    %2576 = vmatpush.msra.mxu0 %v2424
    %2577 = vmatpush.msra.mxu0 %v2418
    %2578 = vmatpush.msra.mxu0 %v2412
    %2579 = vmatpush.msra.mxu0 %v2406
    %2580 = vmatpush.msra.mxu0 %v2400
    %2581 = vmatpush.msra.mxu0 %v2394
    %2582 = vmatpush.msra.mxu0 %v2388
    %2583 = vmatpush.msra.mxu0 %v2382
    %2584 = vmatpush.msra.mxu0 %v2376
    %2585 = vmatpush.msra.mxu0 %v2370
    %2586 = vmatmul.f32.gmra.mxu0 %v85
    %v2587 = vpop.f32.mrf.mxu0
    %v2588 = vadd.f32 %v2568, %v2587
    %2589 = vdwg.mxu0
    %2590 = vmatpush.msra.mxu0 %v2365
    %2591 = vmatpush.msra.mxu0 %v2359
    %2592 = vmatpush.msra.mxu0 %v2353
    %2593 = vmatpush.msra.mxu0 %v2347
    %2594 = vmatpush.msra.mxu0 %v2341
    %2595 = vmatpush.msra.mxu0 %v2335
    %2596 = vmatpush.msra.mxu0 %v2329
    %2597 = vmatpush.msra.mxu0 %v2323
    %2598 = vmatpush.msra.mxu0 %v2317
    %2599 = vmatpush.msra.mxu0 %v2311
    %2600 = vmatpush.msra.mxu0 %v2305
    %2601 = vmatpush.msra.mxu0 %v2299
    %2602 = vmatpush.msra.mxu0 %v2293
    %2603 = vmatpush.msra.mxu0 %v2287
    %2604 = vmatpush.msra.mxu0 %v2281
    %2605 = vmatpush.msra.mxu0 %v2275
    %2606 = vmatmul.f32.gmra.mxu0 %v84
    %v2607 = vpop.f32.mrf.mxu0
    %v2608 = vadd.f32 %v2467, %v2607
    %2609 = vdwg.mxu0
    %2610 = vmatpush.msra.mxu0 %v2461
    %2611 = vmatpush.msra.mxu0 %v2455
    %2612 = vmatpush.msra.mxu0 %v2449
    %2613 = vmatpush.msra.mxu0 %v2443
    %2614 = vmatpush.msra.mxu0 %v2437
    %2615 = vmatpush.msra.mxu0 %v2431
    %2616 = vmatpush.msra.mxu0 %v2425
    %2617 = vmatpush.msra.mxu0 %v2419
    %2618 = vmatpush.msra.mxu0 %v2413
    %2619 = vmatpush.msra.mxu0 %v2407
    %2620 = vmatpush.msra.mxu0 %v2401
    %2621 = vmatpush.msra.mxu0 %v2395
    %2622 = vmatpush.msra.mxu0 %v2389
    %2623 = vmatpush.msra.mxu0 %v2383
    %2624 = vmatpush.msra.mxu0 %v2377
    %2625 = vmatpush.msra.mxu0 %v2371
    %2626 = vmatmul.f32.gmra.mxu0 %v85
    %v2627 = vpop.f32.mrf.mxu0
    %v2628 = vadd.f32 %v2608, %v2627
    %2629 = vdwg.mxu0
    %2630 = vmatpush.msra.mxu0 %v2366
    %2631 = vmatpush.msra.mxu0 %v2360
    %2632 = vmatpush.msra.mxu0 %v2354
    %2633 = vmatpush.msra.mxu0 %v2348
    %2634 = vmatpush.msra.mxu0 %v2342
    %2635 = vmatpush.msra.mxu0 %v2336
    %2636 = vmatpush.msra.mxu0 %v2330
    %2637 = vmatpush.msra.mxu0 %v2324
    %2638 = vmatpush.msra.mxu0 %v2318
    %2639 = vmatpush.msra.mxu0 %v2312
    %2640 = vmatpush.msra.mxu0 %v2306
    %2641 = vmatpush.msra.mxu0 %v2300
    %2642 = vmatpush.msra.mxu0 %v2294
    %2643 = vmatpush.msra.mxu0 %v2288
    %2644 = vmatpush.msra.mxu0 %v2282
    %2645 = vmatpush.msra.mxu0 %v2276
    %2646 = vmatmul.f32.gmra.mxu0 %v84
    %v2647 = vpop.f32.mrf.mxu0
    %v2648 = vadd.f32 %v2468, %v2647
    %2649 = vdwg.mxu0
    %2650 = vmatpush.msra.mxu0 %v2462
    %2651 = vmatpush.msra.mxu0 %v2456
    %2652 = vmatpush.msra.mxu0 %v2450
    %2653 = vmatpush.msra.mxu0 %v2444
    %2654 = vmatpush.msra.mxu0 %v2438
    %2655 = vmatpush.msra.mxu0 %v2432
    %2656 = vmatpush.msra.mxu0 %v2426
    %2657 = vmatpush.msra.mxu0 %v2420
    %2658 = vmatpush.msra.mxu0 %v2414
    %2659 = vmatpush.msra.mxu0 %v2408
    %2660 = vmatpush.msra.mxu0 %v2402
    %2661 = vmatpush.msra.mxu0 %v2396
    %2662 = vmatpush.msra.mxu0 %v2390
    %2663 = vmatpush.msra.mxu0 %v2384
    %2664 = vmatpush.msra.mxu0 %v2378
    %2665 = vmatpush.msra.mxu0 %v2372
    %2666 = vmatmul.f32.gmra.mxu0 %v85
    %v2667 = vpop.f32.mrf.mxu0
    %v2668 = vadd.f32 %v2648, %v2667
    %2669 = vdwg.mxu0
    %2670 = vmatpush.msra.mxu0 %v2367
    %2671 = vmatpush.msra.mxu0 %v2361
    %2672 = vmatpush.msra.mxu0 %v2355
    %2673 = vmatpush.msra.mxu0 %v2349
    %2674 = vmatpush.msra.mxu0 %v2343
    %2675 = vmatpush.msra.mxu0 %v2337
    %2676 = vmatpush.msra.mxu0 %v2331
    %2677 = vmatpush.msra.mxu0 %v2325
    %2678 = vmatpush.msra.mxu0 %v2319
    %2679 = vmatpush.msra.mxu0 %v2313
    %2680 = vmatpush.msra.mxu0 %v2307
    %2681 = vmatpush.msra.mxu0 %v2301
    %2682 = vmatpush.msra.mxu0 %v2295
    %2683 = vmatpush.msra.mxu0 %v2289
    %2684 = vmatpush.msra.mxu0 %v2283
    %2685 = vmatpush.msra.mxu0 %v2277
    %2686 = vmatmul.f32.gmra.mxu0 %v84
    %v2687 = vpop.f32.mrf.mxu0
    %v2688 = vadd.f32 %v2469, %v2687
    %2689 = vdwg.mxu0
    %2690 = vmatpush.msra.mxu0 %v2463
    %2691 = vmatpush.msra.mxu0 %v2457
    %2692 = vmatpush.msra.mxu0 %v2451
    %2693 = vmatpush.msra.mxu0 %v2445
    %2694 = vmatpush.msra.mxu0 %v2439
    %2695 = vmatpush.msra.mxu0 %v2433
    %2696 = vmatpush.msra.mxu0 %v2427
    %2697 = vmatpush.msra.mxu0 %v2421
    %2698 = vmatpush.msra.mxu0 %v2415
    %2699 = vmatpush.msra.mxu0 %v2409
    %2700 = vmatpush.msra.mxu0 %v2403
    %2701 = vmatpush.msra.mxu0 %v2397
    %2702 = vmatpush.msra.mxu0 %v2391
    %2703 = vmatpush.msra.mxu0 %v2385
    %2704 = vmatpush.msra.mxu0 %v2379
    %2705 = vmatpush.msra.mxu0 %v2373
    %2706 = vmatmul.f32.gmra.mxu0 %v85
    %v2707 = vpop.f32.mrf.mxu0
    %v2708 = vadd.f32 %v2688, %v2707
    %2709 = vdwg.mxu0
    %v2710 = vadd.f32 %v1874, %v2508
    %v2711 = vadd.f32 %v1934, %v2548
    %v2712 = vxor.u32 %v2710, 2147483648
    %v2713 = vxor.u32 %v2711, 2147483648
    %v2714 = vmul.f32 %v2712, 1.442695
    %v2715 = vpow.pop %v2714
    %v2716 = vmul.f32 %v2713, 1.442695
    %v2717 = vpow.pop %v2716
    %v2718 = vadd.f32 %v2715, 1.0
    %v2719 = vadd.f32 %v2717, 1.0
    %v2720 = vrcp.pop %v2718
    %v2721 = vmul.f32 %v2718, %v2720
    %v2722 = vsub.f32 1.0, %v2721
    %v2723 = vmul.f32 %v2720, %v2722
    %v2724 = vadd.f32 %v2720, %v2723
    %vm2725 = vweird.f32 %v2718
    %vm2726 = vweird.f32 %v2720
    %vm2727 = vmor %vm2725, %vm2726
    %v2728 = vsel %vm2727, %v2720, %v2724
    %v2729 = vand.u32 2147483647, %v2718
    %vm2730 = vcmp.eq.f32.partialorder %v2729, 8.507059e+37
    %v2731 = vand.u32 %v2718, 2147483648
    %v2732 = vor.u32 1.1754944e-38, %v2731
    %v2733 = vsel %vm2730, %v2732, %v2728
    %v2734 = vmul.f32 1.0, %v2733
    %v2735 = vrcp.pop %v2719
    %v2736 = vmul.f32 %v2719, %v2735
    %v2737 = vsub.f32 1.0, %v2736
    %v2738 = vmul.f32 %v2735, %v2737
    %v2739 = vadd.f32 %v2735, %v2738
    %vm2740 = vweird.f32 %v2719
    %vm2741 = vweird.f32 %v2735
    %vm2742 = vmor %vm2740, %vm2741
    %v2743 = vsel %vm2742, %v2735, %v2739
    %v2744 = vand.u32 2147483647, %v2719
    %vm2745 = vcmp.eq.f32.partialorder %v2744, 8.507059e+37
    %v2746 = vand.u32 %v2719, 2147483648
    %v2747 = vor.u32 1.1754944e-38, %v2746
    %v2748 = vsel %vm2745, %v2747, %v2743
    %v2749 = vmul.f32 1.0, %v2748
    %v2750 = vadd.f32 %v1994, %v2588
    %v2751 = vadd.f32 %v2054, %v2628
    %v2752 = vxor.u32 %v2750, 2147483648
    %v2753 = vxor.u32 %v2751, 2147483648
    %v2754 = vmul.f32 %v2752, 1.442695
    %v2755 = vpow.pop %v2754
    %v2756 = vmul.f32 %v2753, 1.442695
    %v2757 = vpow.pop %v2756
    %v2758 = vadd.f32 %v2755, 1.0
    %v2759 = vadd.f32 %v2757, 1.0
    %v2760 = vrcp.pop %v2758
    %v2761 = vmul.f32 %v2758, %v2760
    %v2762 = vsub.f32 1.0, %v2761
    %v2763 = vmul.f32 %v2760, %v2762
    %v2764 = vadd.f32 %v2760, %v2763
    %vm2765 = vweird.f32 %v2758
    %vm2766 = vweird.f32 %v2760
    %vm2767 = vmor %vm2765, %vm2766
    %v2768 = vsel %vm2767, %v2760, %v2764
    %v2769 = vand.u32 2147483647, %v2758
    %vm2770 = vcmp.eq.f32.partialorder %v2769, 8.507059e+37
    %v2771 = vand.u32 %v2758, 2147483648
    %v2772 = vor.u32 1.1754944e-38, %v2771
    %v2773 = vsel %vm2770, %v2772, %v2768
    %v2774 = vmul.f32 1.0, %v2773
    %v2775 = vrcp.pop %v2759
    %v2776 = vmul.f32 %v2759, %v2775
    %v2777 = vsub.f32 1.0, %v2776
    %v2778 = vmul.f32 %v2775, %v2777
    %v2779 = vadd.f32 %v2775, %v2778
    %vm2780 = vweird.f32 %v2759
    %vm2781 = vweird.f32 %v2775
    %vm2782 = vmor %vm2780, %vm2781
    %v2783 = vsel %vm2782, %v2775, %v2779
    %v2784 = vand.u32 2147483647, %v2759
    %vm2785 = vcmp.eq.f32.partialorder %v2784, 8.507059e+37
    %v2786 = vand.u32 %v2759, 2147483648
    %v2787 = vor.u32 1.1754944e-38, %v2786
    %v2788 = vsel %vm2785, %v2787, %v2783
    %v2789 = vmul.f32 1.0, %v2788
    %v2790 = vmul.f32 %v2734, %v2668
    %v2791 = vmul.f32 %v2749, %v2708
    %v2792 = vadd.f32 %v2114, %v2790
    %v2793 = vadd.f32 %v2174, %v2791
    %v2794 = vtanh.pop %v2792
    %v2795 = vtanh.pop %v2793
    %v2796 = vsub.f32 1.0, %v2774
    %v2797 = vsub.f32 1.0, %v2789
    %v2798 = vmul.f32 %v2796, %v2794
    %v2799 = vmul.f32 %v2797, %v2795
    %v2800 = vmul.f32 %v2774, %v84
    %v2801 = vmul.f32 %v2789, %v85
    %v2802 = vadd.f32 %v2798, %v2800
    %v2803 = vadd.f32 %v2799, %v2801
    %v2804 = vld [vmem:[#allocation4 + $0x18] sm:$0xf]
    %v2805 = vld [vmem:[#allocation4 + $0x34] sm:$0xf]
    %v2806 = vld [vmem:[#allocation4 + $0x50] sm:$0xf]
    %v2807 = vld [vmem:[#allocation4 + $0x6c] sm:$0xf]
    %v2808 = vld [vmem:[#allocation4 + $0x88] sm:$0xf]
    %v2809 = vld [vmem:[#allocation4 + $0xa4] sm:$0xf]
    %v2810 = vld [vmem:[#allocation4 + $0xc0] sm:$0xf]
    %v2811 = vld [vmem:[#allocation4 + $0xdc] sm:$0xf]
    %v2812 = vld [vmem:[#allocation4 + $0xf8] sm:$0xf]
    %v2813 = vld [vmem:[#allocation4 + $0x114] sm:$0xf]
    %v2814 = vld [vmem:[#allocation4 + $0x130] sm:$0xf]
    %v2815 = vld [vmem:[#allocation4 + $0x14c] sm:$0xf]
    %v2816 = vld [vmem:[#allocation4 + $0x168] sm:$0xf]
    %v2817 = vld [vmem:[#allocation4 + $0x184] sm:$0xf]
    %v2818 = vld [vmem:[#allocation4 + $0x1a0] sm:$0xf]
    %v2819 = vld [vmem:[#allocation4 + $0x1bc] sm:$0xf]
    %v2820 = vld [vmem:[#allocation4 + $0x1d8] sm:$0xf]
    %v2821 = vld [vmem:[#allocation4 + $0x1f4] sm:$0xf]
    %v2822 = vld [vmem:[#allocation4 + $0x210] sm:$0xf]
    %v2823 = vld [vmem:[#allocation4 + $0x22c] sm:$0xf]
    %v2824 = vld [vmem:[#allocation4 + $0x248] sm:$0xf]
    %v2825 = vld [vmem:[#allocation4 + $0x264] sm:$0xf]
    %v2826 = vld [vmem:[#allocation4 + $0x280] sm:$0xf]
    %v2827 = vld [vmem:[#allocation4 + $0x29c] sm:$0xf]
    %v2828 = vld [vmem:[#allocation4 + $0x2b8] sm:$0xf]
    %v2829 = vld [vmem:[#allocation4 + $0x2d4] sm:$0xf]
    %v2830 = vld [vmem:[#allocation4 + $0x2f0] sm:$0xf]
    %v2831 = vld [vmem:[#allocation4 + $0x30c] sm:$0xf]
    %v2832 = vld [vmem:[#allocation4 + $0x328] sm:$0xf]
    %v2833 = vld [vmem:[#allocation4 + $0x344] sm:$0xf]
    %v2834 = vld [vmem:[#allocation4 + $0x360] sm:$0xf]
    %v2835 = vld [vmem:[#allocation4 + $0x37c] sm:$0xf]
    %v2836 = vunpack.c.l.bf16 %v2804
    %v2837 = vunpack.c.l.bf16 %v2805
    %v2838 = vunpack.c.l.bf16 %v2806
    %v2839 = vunpack.c.l.bf16 %v2807
    %v2840 = vunpack.c.l.bf16 %v2808
    %v2841 = vunpack.c.l.bf16 %v2809
    %v2842 = vunpack.c.l.bf16 %v2810
    %v2843 = vunpack.c.l.bf16 %v2811
    %v2844 = vunpack.c.l.bf16 %v2812
    %v2845 = vunpack.c.l.bf16 %v2813
    %v2846 = vunpack.c.l.bf16 %v2814
    %v2847 = vunpack.c.l.bf16 %v2815
    %v2848 = vunpack.c.l.bf16 %v2816
    %v2849 = vunpack.c.l.bf16 %v2817
    %v2850 = vunpack.c.l.bf16 %v2818
    %v2851 = vunpack.c.l.bf16 %v2819
    %v2852 = vunpack.c.l.bf16 %v2820
    %v2853 = vunpack.c.l.bf16 %v2821
    %v2854 = vunpack.c.l.bf16 %v2822
    %v2855 = vunpack.c.l.bf16 %v2823
    %v2856 = vunpack.c.l.bf16 %v2824
    %v2857 = vunpack.c.l.bf16 %v2825
    %v2858 = vunpack.c.l.bf16 %v2826
    %v2859 = vunpack.c.l.bf16 %v2827
    %v2860 = vunpack.c.l.bf16 %v2828
    %v2861 = vunpack.c.l.bf16 %v2829
    %v2862 = vunpack.c.l.bf16 %v2830
    %v2863 = vunpack.c.l.bf16 %v2831
    %v2864 = vunpack.c.l.bf16 %v2832
    %v2865 = vunpack.c.l.bf16 %v2833
    %v2866 = vunpack.c.l.bf16 %v2834
    %v2867 = vunpack.c.l.bf16 %v2835
    %v2868 = vld [vmem:[#allocation7 + $0xd0] sm:$0xff]
    %2869 = vmatpush.msra.mxu0 %v2851
    %2870 = vmatpush.msra.mxu0 %v2850
    %2871 = vmatpush.msra.mxu0 %v2849
    %2872 = vmatpush.msra.mxu0 %v2848
    %2873 = vmatpush.msra.mxu0 %v2847
    %2874 = vmatpush.msra.mxu0 %v2846
    %2875 = vmatpush.msra.mxu0 %v2845
    %2876 = vmatpush.msra.mxu0 %v2844
    %2877 = vmatpush.msra.mxu0 %v2843
    %2878 = vmatpush.msra.mxu0 %v2842
    %2879 = vmatpush.msra.mxu0 %v2841
    %2880 = vmatpush.msra.mxu0 %v2840
    %2881 = vmatpush.msra.mxu0 %v2839
    %2882 = vmatpush.msra.mxu0 %v2838
    %2883 = vmatpush.msra.mxu0 %v2837
    %2884 = vmatpush.msra.mxu0 %v2836
    %2885 = vmatmul.f32.gmra.mxu0 %v2802
    %v2886 = vpop.f32.mrf.mxu0
    %v2887 = vadd.f32 %v2868, %v2886
    %2888 = vdwg.mxu0
    %2889 = vmatpush.msra.mxu0 %v2867
    %2890 = vmatpush.msra.mxu0 %v2866
    %2891 = vmatpush.msra.mxu0 %v2865
    %2892 = vmatpush.msra.mxu0 %v2864
    %2893 = vmatpush.msra.mxu0 %v2863
    %2894 = vmatpush.msra.mxu0 %v2862
    %2895 = vmatpush.msra.mxu0 %v2861
    %2896 = vmatpush.msra.mxu0 %v2860
    %2897 = vmatpush.msra.mxu0 %v2859
    %2898 = vmatpush.msra.mxu0 %v2858
    %2899 = vmatpush.msra.mxu0 %v2857
    %2900 = vmatpush.msra.mxu0 %v2856
    %2901 = vmatpush.msra.mxu0 %v2855
    %2902 = vmatpush.msra.mxu0 %v2854
    %2903 = vmatpush.msra.mxu0 %v2853
    %2904 = vmatpush.msra.mxu0 %v2852
    %2905 = vmatmul.f32.gmra.mxu0 %v2803
    %v2906 = vpop.f32.mrf.mxu0
    %v2907 = vadd.f32 %v2887, %v2906
    %2908 = vdwg.mxu0
    %v2909 = vmax.f32 %v2907, 0.0
    %v2910 = vld [vmem:[#allocation2 + $0x64] sm:$0xf]
    %v2911 = vld [vmem:[#allocation2 + $0xcc] sm:$0xf]
    %v2912 = vld [vmem:[#allocation2 + $0x134] sm:$0xf]
    %v2913 = vld [vmem:[#allocation2 + $0x19c] sm:$0xf]
    %v2914 = vld [vmem:[#allocation2 + $0x204] sm:$0xf]
    %v2915 = vld [vmem:[#allocation2 + $0x26c] sm:$0xf]
    %v2916 = vld [vmem:[#allocation2 + $0x2d4] sm:$0xf]
    %v2917 = vld [vmem:[#allocation2 + $0x33c] sm:$0xf]
    %v2918 = vld [vmem:[#allocation2 + $0x3a4] sm:$0xf]
    %v2919 = vld [vmem:[#allocation2 + $0x40c] sm:$0xf]
    %v2920 = vld [vmem:[#allocation2 + $0x474] sm:$0xf]
    %v2921 = vld [vmem:[#allocation2 + $0x4dc] sm:$0xf]
    %v2922 = vld [vmem:[#allocation2 + $0x544] sm:$0xf]
    %v2923 = vld [vmem:[#allocation2 + $0x5ac] sm:$0xf]
    %v2924 = vld [vmem:[#allocation2 + $0x614] sm:$0xf]
    %v2925 = vld [vmem:[#allocation2 + $0x67c] sm:$0xf]
    %v2926 = vunpack.c.l.bf16 %v2910
    %v2927 = vunpack.c.l.bf16 %v2911
    %v2928 = vunpack.c.l.bf16 %v2912
    %v2929 = vunpack.c.l.bf16 %v2913
    %v2930 = vunpack.c.l.bf16 %v2914
    %v2931 = vunpack.c.l.bf16 %v2915
    %v2932 = vunpack.c.l.bf16 %v2916
    %v2933 = vunpack.c.l.bf16 %v2917
    %v2934 = vunpack.c.l.bf16 %v2918
    %v2935 = vunpack.c.l.bf16 %v2919
    %v2936 = vunpack.c.l.bf16 %v2920
    %v2937 = vunpack.c.l.bf16 %v2921
    %v2938 = vunpack.c.l.bf16 %v2922
    %v2939 = vunpack.c.l.bf16 %v2923
    %v2940 = vunpack.c.l.bf16 %v2924
    %v2941 = vunpack.c.l.bf16 %v2925
    %v2942 = vld [vmem:[#allocation7 + $0xd8] sm:$0xff]
    %2943 = vmatpush.msra.mxu0 %v2941
    %2944 = vmatpush.msra.mxu0 %v2940
    %2945 = vmatpush.msra.mxu0 %v2939
    %2946 = vmatpush.msra.mxu0 %v2938
    %2947 = vmatpush.msra.mxu0 %v2937
    %2948 = vmatpush.msra.mxu0 %v2936
    %2949 = vmatpush.msra.mxu0 %v2935
    %2950 = vmatpush.msra.mxu0 %v2934
    %2951 = vmatpush.msra.mxu0 %v2933
    %2952 = vmatpush.msra.mxu0 %v2932
    %2953 = vmatpush.msra.mxu0 %v2931
    %2954 = vmatpush.msra.mxu0 %v2930
    %2955 = vmatpush.msra.mxu0 %v2929
    %2956 = vmatpush.msra.mxu0 %v2928
    %2957 = vmatpush.msra.mxu0 %v2927
    %2958 = vmatpush.msra.mxu0 %v2926
    %2959 = vmatmul.f32.gmra.mxu0 %v2909
    %v2960 = vpop.f32.mrf.mxu0
    %v2961 = vadd.f32 %v2942, %v2960
    %2962 = vdwg.mxu0
    %2963 = vst [vmem:[%s5] sm:$0xff] %v1230
    %2964 = vst [vmem:[%s5 + $0x8] sm:$0xff] %v2961
    %2965 = vst [vmem:[%s5 + $0x10] sm:$0xff] %v648
    %2966 = vst [vmem:[%s5 + $0x18] sm:$0xff] %v1124
    %2967 = vst [vmem:[%s5 + $0x20] sm:$0xff] %v2802
    %2968 = vst [vmem:[%s5 + $0x28] sm:$0xff] %v2803
    // Predicated region
    $region38: #{_lambda_.1} parent=1 // pred_check
      _
    $region39: #{_lambda_.1} parent=1 // pred_check_branch
      %2970 = sbr.rel (0) target = $region41
    $region40: #{_lambda_.1} parent=1 // pred_region
      _
    $region41: #{_lambda_.1} parent=1 // pred_fallthru
      _
    // Predicated region
    $region42: #{_lambda_.1} parent=1 // pred_check
      _
    $region43: #{_lambda_.1} parent=1 // pred_check_branch
      %2972 = sbr.rel (0) target = $region45
    $region44: #{_lambda_.1} parent=1 // pred_region
      _
    $region45: #{_lambda_.1} parent=1 // pred_fallthru
      _
    %2973 = vsyncpa [#allocation3], 1
    %2974 = vsyncpa [#allocation5], 1
    %2975 = vsyncpa [#allocation8], 1

</llo_original>
